<compile_context>
chip_gen: v7x
topology: tpu7x:2x2x1
jax: 0.10.0
libtpu: 0.0.40
codegen_flags: <defaults>
</compile_context>

<pallas_src>
import jax
import jax.numpy as jnp
from jax import lax
from jax.experimental import pallas as pl
from jax.experimental.pallas import tpu as pltpu


# ----------------------------- config (small) --------------------------------
CFG = dict(
    ntoken=50,          # vocab size
    ninp=16,            # word embedding dim
    emb_size=32,        # recurrent hidden size per direction
    attention_unit=16,  # config['attention-unit']
    attention_hops=4,   # config['attention-hops']
    nfc=32,             # config['nfc']
    class_number=3,
    pad_id=0,
)
SEQ = 8
BSZ = 2
_LANES = 128            # lane-dense output slab width


def _full_spec(shape):
    # whole-array block, trivial index map (grid=(1,))
    return pl.BlockSpec(shape, lambda i: (0,) * len(shape))


# ------------------------------ fused kernel ----------------------------------
def high_att_kernel(tok_ref, padbias_ref, emb_ref,
                    wih_f_ref, whh_f_ref, b_f_ref,
                    wih_b_ref, whh_b_ref, b_b_ref,
                    ws1_ref, ws2_ref,
                    wfc_ref, bfc_ref, wpred_ref, bpred_ref,
                    out_ref, hcat_ref):
    f32 = jnp.float32
    V = emb_ref.shape[0]
    B, S = padbias_ref.shape            # padbias: [B, S] additive mask (-1e4 on pads)
    N = tok_ref.shape[0]                # == S*B, time-major rows (s*B + b)
    H = whh_f_ref.shape[0]
    HOPS = ws2_ref.shape[0]
    C = wpred_ref.shape[1]
    ROWS, LANES = out_ref.shape

    # ---- embedding lookup fused in-kernel (exact one-hot matmul) -------------
    onehot = (tok_ref[...] ==
              lax.broadcasted_iota(jnp.int32, (N, V), 1)).astype(f32)      # [N, V]
    emb = jnp.dot(onehot, emb_ref[...], preferred_element_type=f32)        # [N, E]

    # ---- input projections hoisted out of the recurrence ---------------------
    gx_f = jnp.dot(emb, wih_f_ref[...], preferred_element_type=f32) + b_f_ref[...]
    gx_b = jnp.dot(emb, wih_b_ref[...], preferred_element_type=f32) + b_b_ref[...]
    whh_f = whh_f_ref[...]
    whh_b = whh_b_ref[...]

    def cell(xg, h, c, whh):
        g = xg + jnp.dot(h, whh, preferred_element_type=f32)               # [B, 4H]
        i = jax.nn.sigmoid(g[:, 0 * H:1 * H])     # PyTorch gate order i,f,g,o
        f = jax.nn.sigmoid(g[:, 1 * H:2 * H])
        gg = jnp.tanh(g[:, 2 * H:3 * H])
        o = jax.nn.sigmoid(g[:, 3 * H:4 * H])
        c_new = f * c + i * gg
        h_new = o * jnp.tanh(c_new)
        return h_new, c_new

    h_f = jnp.zeros((B, H), f32)        # init_hidden -> zeros
    c_f = jnp.zeros((B, H), f32)
    h_b = jnp.zeros((B, H), f32)
    c_b = jnp.zeros((B, H), f32)

    # fully unrolled time loop; fwd & bwd chains interleaved for ILP.
    for t in range(S):
        tr = S - 1 - t
        h_f, c_f = cell(gx_f[t * B:(t + 1) * B, :], h_f, c_f, whh_f)
        h_b, c_b = cell(gx_b[tr * B:(tr + 1) * B, :], h_b, c_b, whh_b)
        # scratch is batch-major (row b*S + s), features = cat(fwd, bwd)
        for b in range(B):
            hcat_ref[b * S + t: b * S + t + 1, 0:H] = h_f[b:b + 1, :]
            hcat_ref[b * S + tr: b * S + tr + 1, H:2 * H] = h_b[b:b + 1, :]

    # ---- structured self-attention (batched matmuls, per-batch softmax) ------
    hall = hcat_ref[...]                                                   # [N, 2H]
    hbar = jnp.tanh(jnp.dot(hall, ws1_ref[...], preferred_element_type=f32))
    # logits directly as [HOPS, N]: contract U against U (no explicit transpose)
    logits = lax.dot_general(ws2_ref[...], hbar,
                             dimension_numbers=(((1,), (1,)), ((), ())),
                             preferred_element_type=f32)                   # [HOPS, N]

    att_rows = []
    mflat_rows = []
    for b in range(B):
        lg = logits[:, b * S:(b + 1) * S] + padbias_ref[b:b + 1, :]        # [HOPS, S]
        mx = jnp.max(lg, axis=-1, keepdims=True)
        e = jnp.exp(lg - mx)
        att = e / jnp.sum(e, axis=-1, keepdims=True)                       # [HOPS, S]
        mb = jnp.dot(att, hall[b * S:(b + 1) * S, :],
                     preferred_element_type=f32)                           # [HOPS, 2H]
        att_rows.append(att)
        mflat_rows.append(jnp.concatenate(
            [mb[h:h + 1, :] for h in range(HOPS)], axis=1))                # [1, HOPS*2H]

    att_all = jnp.concatenate(att_rows, axis=0)                            # [B*HOPS, S]
    m_flat = jnp.concatenate(mflat_rows, axis=0)                           # [B, HOPS*2H]

    # ---- aggregation: fc -> tanh -> pred --------------------------------------
    fc = jnp.tanh(jnp.dot(m_flat, wfc_ref[...], preferred_element_type=f32)
                  + bfc_ref[...])                                          # [B, NFC]
    score = jnp.dot(fc, wpred_ref[...], preferred_element_type=f32) + bpred_ref[...]

    # ---- single lane-dense output slab (one unmasked store) -------------------
    att_pad = jnp.concatenate(
        [att_all, jnp.zeros((B * HOPS, LANES - S), f32)], axis=1)          # [B*HOPS, 128]
    sc_pad = jnp.concatenate(
        [score, jnp.zeros((B, LANES - C), f32)], axis=1)                   # [B, 128]
    pieces = [att_pad, sc_pad]
    tail_rows = ROWS - B * HOPS - B
    if tail_rows > 0:
        pieces.append(jnp.zeros((tail_rows, LANES), f32))
    out_ref[...] = jnp.concatenate(pieces, axis=0)                         # [ROWS, 128]


# --------------------------------- forward ------------------------------------
@jax.jit
def high_att_forward(tokens, params):
    """tokens: int32 [SEQ, BSZ] (seq-first, like the PyTorch model).
    Returns (score [BSZ, class_number], attention [BSZ, hops, SEQ])."""
    S, B = tokens.shape
    N = S * B
    HOPS = CFG["attention_hops"]
    C = CFG["class_number"]
    assert S <= _LANES and C <= _LANES
    out_rows = max(8, ((B * HOPS + B + 7) // 8) * 8)

    # layout plumbing only: time-major token column + batch-major pad bias.
    tok_col = tokens.reshape(N, 1).astype(jnp.int32)                       # [N, 1]
    padbias = jnp.where(jnp.transpose(tokens) == CFG["pad_id"],
                        -10000.0, 0.0).astype(jnp.float32)                 # [B, S]

    args = (tok_col, padbias, params["embedding"],
            params["wih_f"], params["whh_f"], params["b_f"],
            params["wih_b"], params["whh_b"], params["b_b"],
            params["ws1_t"], params["ws2"],
            params["wfc_t"], params["bfc"], params["wpred_t"], params["bpred"])

    slab = pl.pallas_call(
        high_att_kernel,
        out_shape=jax.ShapeDtypeStruct((out_rows, _LANES), jnp.float32),
        grid=(1,),                          # single step: do NOT shard tiny work
        in_specs=[_full_spec(a.shape) for a in args],
        out_specs=_full_spec((out_rows, _LANES)),
        scratch_shapes=[pltpu.VMEM((N, 2 * CFG["emb_size"]), jnp.float32)],
        compiler_params=pltpu.CompilerParams(
            dimension_semantics=("arbitrary",)),
    )(*args)

    attention = slab[:B * HOPS, :S].reshape(B, HOPS, S)
    score = slab[B * HOPS:B * HOPS + B, :C]
    return score, attention


# --------------------------------- parameters ---------------------------------
def init_params(key):
    ninp, H = CFG["ninp"], CFG["emb_size"]
    U, HOPS = CFG["attention_unit"], CFG["attention_hops"]
    NFC, C, V = CFG["nfc"], CFG["class_number"], CFG["ntoken"]
    ks = jax.random.split(key, 12)
    u = lambda k, shape, s: jax.random.uniform(k, shape, jnp.float32, -s, s)
    lstm_s = float(1.0 / (H ** 0.5))
    return dict(
        embedding=jax.random.normal(ks[0], (V, ninp), jnp.float32) * 0.1,
        # recurrent weights stored pre-transposed: W_ih.T [E,4H], W_hh.T [H,4H]
        wih_f=u(ks[1], (ninp, 4 * H), lstm_s),
        whh_f=u(ks[2], (H, 4 * H), lstm_s),
        b_f=u(ks[3], (1, 4 * H), lstm_s),        # b_ih + b_hh
        wih_b=u(ks[4], (ninp, 4 * H), lstm_s),
        whh_b=u(ks[5], (H, 4 * H), lstm_s),
        b_b=u(ks[6], (1, 4 * H), lstm_s),
        # attention: Ws1 stored transposed [2H,U]; Ws2 in native [HOPS,U] layout
        ws1_t=u(ks[7], (2 * H, U), 0.1),
        ws2=u(ks[8], (HOPS, U), 0.1),
        # aggregation (fc -> tanh -> pred)
        wfc_t=u(ks[9], (2 * H * HOPS, NFC), 0.1),
        bfc=jnp.zeros((1, NFC), jnp.float32),
        wpred_t=u(ks[10], (NFC, C), 0.1),
        bpred=jnp.zeros((1, C), jnp.float32),
    )


def init_hidden(bsz):
    H = CFG["emb_size"]
    return (jnp.zeros((2, bsz, H), jnp.float32), jnp.zeros((2, bsz, H), jnp.float32))


# ----------------------------------- main --------------------------------------
if __name__ == "__main__":
    key = jax.random.PRNGKey(0)
    pkey, tkey = jax.random.split(key)
    params = init_params(pkey)

    tokens = jax.random.randint(tkey, (SEQ, BSZ), 1, CFG["ntoken"], dtype=jnp.int32)
    # put some <pad> (id 0) at the tail of sequence 1 to exercise the attention mask
    tokens = tokens.at[SEQ - 2:, 1].set(CFG["pad_id"])

    _ = init_hidden(BSZ)  # hidden is all zeros; the kernel zero-inits h0/c0

    score, attention = high_att_forward(tokens, params)
    jax.block_until_ready((score, attention))

    assert score.shape == (BSZ, CFG["class_number"])
    assert attention.shape == (BSZ, CFG["attention_hops"], SEQ)
    # attention rows are a softmax over sequence length
    assert bool(jnp.allclose(attention.sum(-1), 1.0, atol=1e-4))

    print("KERNEL_OK")
</pallas_src>

<mosaic_0001>
module attributes {stable_mosaic.version = 11 : i64} {
  func.func @high_att_kernel(%arg0: i32, %arg1: memref<16x1xi32, #tpu.memory_space<vmem>>, %arg2: memref<2x8xf32, #tpu.memory_space<vmem>>, %arg3: memref<50x16xf32, #tpu.memory_space<vmem>>, %arg4: memref<16x128xf32, #tpu.memory_space<vmem>>, %arg5: memref<32x128xf32, #tpu.memory_space<vmem>>, %arg6: memref<1x128xf32, #tpu.memory_space<vmem>>, %arg7: memref<16x128xf32, #tpu.memory_space<vmem>>, %arg8: memref<32x128xf32, #tpu.memory_space<vmem>>, %arg9: memref<1x128xf32, #tpu.memory_space<vmem>>, %arg10: memref<64x16xf32, #tpu.memory_space<vmem>>, %arg11: memref<4x16xf32, #tpu.memory_space<vmem>>, %arg12: memref<256x32xf32, #tpu.memory_space<vmem>>, %arg13: memref<1x32xf32, #tpu.memory_space<vmem>>, %arg14: memref<32x3xf32, #tpu.memory_space<vmem>>, %arg15: memref<1x3xf32, #tpu.memory_space<vmem>>, %arg16: memref<16x128xf32, #tpu.memory_space<vmem>>, %arg17: memref<16x64xf32, #tpu.memory_space<vmem>>) attributes {dimension_semantics = [#tpu.dimension_semantics<arbitrary>], iteration_bounds = array<i64: 1>, scalar_prefetch = 0 : i64, scratch_operands = 1 : i64, tpu.core_type = #tpu.core_type<tc>, window_params = [{pipeline_mode = #tpu.pipeline_mode<synchronous>, transform_indices = @transform_0, window_bounds = array<i64: 16, 1>}, {pipeline_mode = #tpu.pipeline_mode<synchronous>, transform_indices = @transform_1, window_bounds = array<i64: 2, 8>}, {pipeline_mode = #tpu.pipeline_mode<synchronous>, transform_indices = @transform_2, window_bounds = array<i64: 50, 16>}, {pipeline_mode = #tpu.pipeline_mode<synchronous>, transform_indices = @transform_3, window_bounds = array<i64: 16, 128>}, {pipeline_mode = #tpu.pipeline_mode<synchronous>, transform_indices = @transform_4, window_bounds = array<i64: 32, 128>}, {pipeline_mode = #tpu.pipeline_mode<synchronous>, transform_indices = @transform_5, window_bounds = array<i64: 1, 128>}, {pipeline_mode = #tpu.pipeline_mode<synchronous>, transform_indices = @transform_6, window_bounds = array<i64: 16, 128>}, {pipeline_mode = #tpu.pipeline_mode<synchronous>, transform_indices = @transform_7, window_bounds = array<i64: 32, 128>}, {pipeline_mode = #tpu.pipeline_mode<synchronous>, transform_indices = @transform_8, window_bounds = array<i64: 1, 128>}, {pipeline_mode = #tpu.pipeline_mode<synchronous>, transform_indices = @transform_9, window_bounds = array<i64: 64, 16>}, {pipeline_mode = #tpu.pipeline_mode<synchronous>, transform_indices = @transform_10, window_bounds = array<i64: 4, 16>}, {pipeline_mode = #tpu.pipeline_mode<synchronous>, transform_indices = @transform_11, window_bounds = array<i64: 256, 32>}, {pipeline_mode = #tpu.pipeline_mode<synchronous>, transform_indices = @transform_12, window_bounds = array<i64: 1, 32>}, {pipeline_mode = #tpu.pipeline_mode<synchronous>, transform_indices = @transform_13, window_bounds = array<i64: 32, 3>}, {pipeline_mode = #tpu.pipeline_mode<synchronous>, transform_indices = @transform_14, window_bounds = array<i64: 1, 3>}, {pipeline_mode = #tpu.pipeline_mode<synchronous>, transform_indices = @transform_15, window_bounds = array<i64: 16, 128>}]} {
    %c0 = arith.constant 0 : index
    %c0_0 = arith.constant 0 : index
    %0 = vector.load %arg1[%c0, %c0_0] : memref<16x1xi32, #tpu.memory_space<vmem>>, vector<16x1xi32>
    %1 = tpu.iota {dimensions = array<i32: 1>} : vector<16x50xi32>
    %2 = vector.broadcast %0 : vector<16x1xi32> to vector<16x50xi32>
    %3 = arith.cmpi eq, %2, %1 : vector<16x50xi32>
    %4 = arith.extui %3 : vector<16x50xi1> to vector<16x50xi32>
    %5 = arith.sitofp %4 : vector<16x50xi32> to vector<16x50xf32>
    %c0_1 = arith.constant 0 : index
    %c0_2 = arith.constant 0 : index
    %6 = vector.load %arg3[%c0_1, %c0_2] : memref<50x16xf32, #tpu.memory_space<vmem>>, vector<50x16xf32>
    %cst = arith.constant dense<0.000000e+00> : vector<16x16xf32>
    %7 = tpu.matmul %5, %6, %cst {dimension_numbers = #tpu.dot_dimension_numbers<[1], [0], [0], [1], [0, 0, 1, 1], [], []>} : vector<16x50xf32>, vector<50x16xf32>, vector<16x16xf32> -> vector<16x16xf32>
    %c0_3 = arith.constant 0 : index
    %c0_4 = arith.constant 0 : index
    %8 = vector.load %arg4[%c0_3, %c0_4] : memref<16x128xf32, #tpu.memory_space<vmem>>, vector<16x128xf32>
    %cst_5 = arith.constant dense<0.000000e+00> : vector<16x128xf32>
    %9 = tpu.matmul %7, %8, %cst_5 {dimension_numbers = #tpu.dot_dimension_numbers<[1], [0], [0], [1], [0, 0, 1, 1], [], []>} : vector<16x16xf32>, vector<16x128xf32>, vector<16x128xf32> -> vector<16x128xf32>
    %c0_6 = arith.constant 0 : index
    %c0_7 = arith.constant 0 : index
    %10 = vector.load %arg6[%c0_6, %c0_7] : memref<1x128xf32, #tpu.memory_space<vmem>>, vector<1x128xf32>
    %11 = vector.broadcast %10 : vector<1x128xf32> to vector<16x128xf32>
    %12 = arith.addf %9, %11 : vector<16x128xf32>
    %c0_8 = arith.constant 0 : index
    %c0_9 = arith.constant 0 : index
    %13 = vector.load %arg7[%c0_8, %c0_9] : memref<16x128xf32, #tpu.memory_space<vmem>>, vector<16x128xf32>
    %cst_10 = arith.constant dense<0.000000e+00> : vector<16x128xf32>
    %14 = tpu.matmul %7, %13, %cst_10 {dimension_numbers = #tpu.dot_dimension_numbers<[1], [0], [0], [1], [0, 0, 1, 1], [], []>} : vector<16x16xf32>, vector<16x128xf32>, vector<16x128xf32> -> vector<16x128xf32>
    %c0_11 = arith.constant 0 : index
    %c0_12 = arith.constant 0 : index
    %15 = vector.load %arg9[%c0_11, %c0_12] : memref<1x128xf32, #tpu.memory_space<vmem>>, vector<1x128xf32>
    %16 = vector.broadcast %15 : vector<1x128xf32> to vector<16x128xf32>
    %17 = arith.addf %14, %16 : vector<16x128xf32>
    %c0_13 = arith.constant 0 : index
    %c0_14 = arith.constant 0 : index
    %18 = vector.load %arg5[%c0_13, %c0_14] : memref<32x128xf32, #tpu.memory_space<vmem>>, vector<32x128xf32>
    %c0_15 = arith.constant 0 : index
    %c0_16 = arith.constant 0 : index
    %19 = vector.load %arg8[%c0_15, %c0_16] : memref<32x128xf32, #tpu.memory_space<vmem>>, vector<32x128xf32>
    %cst_17 = arith.constant 0.000000e+00 : f32
    %20 = vector.broadcast %cst_17 : f32 to vector<2x32xf32>
    %cst_18 = arith.constant 0.000000e+00 : f32
    %21 = vector.broadcast %cst_18 : f32 to vector<2x32xf32>
    %cst_19 = arith.constant 0.000000e+00 : f32
    %22 = vector.broadcast %cst_19 : f32 to vector<2x32xf32>
    %cst_20 = arith.constant 0.000000e+00 : f32
    %23 = vector.broadcast %cst_20 : f32 to vector<2x32xf32>
    %24 = vector.extract_strided_slice %12 {offsets = [0, 0], sizes = [2, 128], strides = [1, 1]} : vector<16x128xf32> to vector<2x128xf32>
    %cst_21 = arith.constant dense<0.000000e+00> : vector<2x128xf32>
    %25 = tpu.matmul %20, %18, %cst_21 {dimension_numbers = #tpu.dot_dimension_numbers<[1], [0], [0], [1], [0, 0, 1, 1], [], []>} : vector<2x32xf32>, vector<32x128xf32>, vector<2x128xf32> -> vector<2x128xf32>
    %26 = arith.addf %24, %25 : vector<2x128xf32>
    %27 = vector.extract_strided_slice %26 {offsets = [0, 0], sizes = [2, 32], strides = [1, 1]} : vector<2x128xf32> to vector<2x32xf32>
    %28 = arith.negf %27 : vector<2x32xf32>
    %29 = math.exp %28 : vector<2x32xf32>
    %cst_22 = arith.constant 1.000000e+00 : f32
    %30 = vector.broadcast %cst_22 : f32 to vector<2x32xf32>
    %31 = arith.addf %30, %29 : vector<2x32xf32>
    %32 = arith.divf %30, %31 : vector<2x32xf32>
    %33 = vector.extract_strided_slice %26 {offsets = [0, 32], sizes = [2, 32], strides = [1, 1]} : vector<2x128xf32> to vector<2x32xf32>
    %34 = arith.negf %33 : vector<2x32xf32>
    %35 = math.exp %34 : vector<2x32xf32>
    %cst_23 = arith.constant 1.000000e+00 : f32
    %36 = vector.broadcast %cst_23 : f32 to vector<2x32xf32>
    %37 = arith.addf %36, %35 : vector<2x32xf32>
    %38 = arith.divf %36, %37 : vector<2x32xf32>
    %39 = vector.extract_strided_slice %26 {offsets = [0, 64], sizes = [2, 32], strides = [1, 1]} : vector<2x128xf32> to vector<2x32xf32>
    %40 = math.tanh %39 : vector<2x32xf32>
    %41 = vector.extract_strided_slice %26 {offsets = [0, 96], sizes = [2, 32], strides = [1, 1]} : vector<2x128xf32> to vector<2x32xf32>
    %42 = arith.negf %41 : vector<2x32xf32>
    %43 = math.exp %42 : vector<2x32xf32>
    %cst_24 = arith.constant 1.000000e+00 : f32
    %44 = vector.broadcast %cst_24 : f32 to vector<2x32xf32>
    %45 = arith.addf %44, %43 : vector<2x32xf32>
    %46 = arith.divf %44, %45 : vector<2x32xf32>
    %47 = arith.mulf %38, %21 : vector<2x32xf32>
    %48 = arith.mulf %32, %40 : vector<2x32xf32>
    %49 = arith.addf %47, %48 : vector<2x32xf32>
    %50 = math.tanh %49 : vector<2x32xf32>
    %51 = arith.mulf %46, %50 : vector<2x32xf32>
    %52 = vector.extract_strided_slice %17 {offsets = [14, 0], sizes = [2, 128], strides = [1, 1]} : vector<16x128xf32> to vector<2x128xf32>
    %cst_25 = arith.constant dense<0.000000e+00> : vector<2x128xf32>
    %53 = tpu.matmul %22, %19, %cst_25 {dimension_numbers = #tpu.dot_dimension_numbers<[1], [0], [0], [1], [0, 0, 1, 1], [], []>} : vector<2x32xf32>, vector<32x128xf32>, vector<2x128xf32> -> vector<2x128xf32>
    %54 = arith.addf %52, %53 : vector<2x128xf32>
    %55 = vector.extract_strided_slice %54 {offsets = [0, 0], sizes = [2, 32], strides = [1, 1]} : vector<2x128xf32> to vector<2x32xf32>
    %56 = arith.negf %55 : vector<2x32xf32>
    %57 = math.exp %56 : vector<2x32xf32>
    %cst_26 = arith.constant 1.000000e+00 : f32
    %58 = vector.broadcast %cst_26 : f32 to vector<2x32xf32>
    %59 = arith.addf %58, %57 : vector<2x32xf32>
    %60 = arith.divf %58, %59 : vector<2x32xf32>
    %61 = vector.extract_strided_slice %54 {offsets = [0, 32], sizes = [2, 32], strides = [1, 1]} : vector<2x128xf32> to vector<2x32xf32>
    %62 = arith.negf %61 : vector<2x32xf32>
    %63 = math.exp %62 : vector<2x32xf32>
    %cst_27 = arith.constant 1.000000e+00 : f32
    %64 = vector.broadcast %cst_27 : f32 to vector<2x32xf32>
    %65 = arith.addf %64, %63 : vector<2x32xf32>
    %66 = arith.divf %64, %65 : vector<2x32xf32>
    %67 = vector.extract_strided_slice %54 {offsets = [0, 64], sizes = [2, 32], strides = [1, 1]} : vector<2x128xf32> to vector<2x32xf32>
    %68 = math.tanh %67 : vector<2x32xf32>
    %69 = vector.extract_strided_slice %54 {offsets = [0, 96], sizes = [2, 32], strides = [1, 1]} : vector<2x128xf32> to vector<2x32xf32>
    %70 = arith.negf %69 : vector<2x32xf32>
    %71 = math.exp %70 : vector<2x32xf32>
    %cst_28 = arith.constant 1.000000e+00 : f32
    %72 = vector.broadcast %cst_28 : f32 to vector<2x32xf32>
    %73 = arith.addf %72, %71 : vector<2x32xf32>
    %74 = arith.divf %72, %73 : vector<2x32xf32>
    %75 = arith.mulf %66, %23 : vector<2x32xf32>
    %76 = arith.mulf %60, %68 : vector<2x32xf32>
    %77 = arith.addf %75, %76 : vector<2x32xf32>
    %78 = math.tanh %77 : vector<2x32xf32>
    %79 = arith.mulf %74, %78 : vector<2x32xf32>
    %80 = vector.extract_strided_slice %51 {offsets = [0, 0], sizes = [1, 32], strides = [1, 1]} : vector<2x32xf32> to vector<1x32xf32>
    %c0_29 = arith.constant 0 : index
    %c0_30 = arith.constant 0 : index
    %81 = vector.load %arg17[%c0_29, %c0_30] : memref<16x64xf32, #tpu.memory_space<vmem>>, vector<1x32xf32>
    tpu.vector_store %arg17[%c0_29, %c0_30], %80 {strides = array<i32>} : memref<16x64xf32, #tpu.memory_space<vmem>>, vector<1x32xf32>,
    %82 = vector.extract_strided_slice %79 {offsets = [0, 0], sizes = [1, 32], strides = [1, 1]} : vector<2x32xf32> to vector<1x32xf32>
    %c7 = arith.constant 7 : index
    %c32 = arith.constant 32 : index
    %83 = vector.load %arg17[%c7, %c32] : memref<16x64xf32, #tpu.memory_space<vmem>>, vector<1x32xf32>
    tpu.vector_store %arg17[%c7, %c32], %82 {strides = array<i32>} : memref<16x64xf32, #tpu.memory_space<vmem>>, vector<1x32xf32>,
    %84 = vector.extract_strided_slice %51 {offsets = [1, 0], sizes = [1, 32], strides = [1, 1]} : vector<2x32xf32> to vector<1x32xf32>
    %c8 = arith.constant 8 : index
    %c0_31 = arith.constant 0 : index
    %85 = vector.load %arg17[%c8, %c0_31] : memref<16x64xf32, #tpu.memory_space<vmem>>, vector<1x32xf32>
    tpu.vector_store %arg17[%c8, %c0_31], %84 {strides = array<i32>} : memref<16x64xf32, #tpu.memory_space<vmem>>, vector<1x32xf32>,
    %86 = vector.extract_strided_slice %79 {offsets = [1, 0], sizes = [1, 32], strides = [1, 1]} : vector<2x32xf32> to vector<1x32xf32>
    %c15 = arith.constant 15 : index
    %c32_32 = arith.constant 32 : index
    %87 = vector.load %arg17[%c15, %c32_32] : memref<16x64xf32, #tpu.memory_space<vmem>>, vector<1x32xf32>
    tpu.vector_store %arg17[%c15, %c32_32], %86 {strides = array<i32>} : memref<16x64xf32, #tpu.memory_space<vmem>>, vector<1x32xf32>,
    %88 = vector.extract_strided_slice %12 {offsets = [2, 0], sizes = [2, 128], strides = [1, 1]} : vector<16x128xf32> to vector<2x128xf32>
    %cst_33 = arith.constant dense<0.000000e+00> : vector<2x128xf32>
    %89 = tpu.matmul %51, %18, %cst_33 {dimension_numbers = #tpu.dot_dimension_numbers<[1], [0], [0], [1], [0, 0, 1, 1], [], []>} : vector<2x32xf32>, vector<32x128xf32>, vector<2x128xf32> -> vector<2x128xf32>
    %90 = arith.addf %88, %89 : vector<2x128xf32>
    %91 = vector.extract_strided_slice %90 {offsets = [0, 0], sizes = [2, 32], strides = [1, 1]} : vector<2x128xf32> to vector<2x32xf32>
    %92 = arith.negf %91 : vector<2x32xf32>
    %93 = math.exp %92 : vector<2x32xf32>
    %cst_34 = arith.constant 1.000000e+00 : f32
    %94 = vector.broadcast %cst_34 : f32 to vector<2x32xf32>
    %95 = arith.addf %94, %93 : vector<2x32xf32>
    %96 = arith.divf %94, %95 : vector<2x32xf32>
    %97 = vector.extract_strided_slice %90 {offsets = [0, 32], sizes = [2, 32], strides = [1, 1]} : vector<2x128xf32> to vector<2x32xf32>
    %98 = arith.negf %97 : vector<2x32xf32>
    %99 = math.exp %98 : vector<2x32xf32>
    %cst_35 = arith.constant 1.000000e+00 : f32
    %100 = vector.broadcast %cst_35 : f32 to vector<2x32xf32>
    %101 = arith.addf %100, %99 : vector<2x32xf32>
    %102 = arith.divf %100, %101 : vector<2x32xf32>
    %103 = vector.extract_strided_slice %90 {offsets = [0, 64], sizes = [2, 32], strides = [1, 1]} : vector<2x128xf32> to vector<2x32xf32>
    %104 = math.tanh %103 : vector<2x32xf32>
    %105 = vector.extract_strided_slice %90 {offsets = [0, 96], sizes = [2, 32], strides = [1, 1]} : vector<2x128xf32> to vector<2x32xf32>
    %106 = arith.negf %105 : vector<2x32xf32>
    %107 = math.exp %106 : vector<2x32xf32>
    %cst_36 = arith.constant 1.000000e+00 : f32
    %108 = vector.broadcast %cst_36 : f32 to vector<2x32xf32>
    %109 = arith.addf %108, %107 : vector<2x32xf32>
    %110 = arith.divf %108, %109 : vector<2x32xf32>
    %111 = arith.mulf %102, %49 : vector<2x32xf32>
    %112 = arith.mulf %96, %104 : vector<2x32xf32>
    %113 = arith.addf %111, %112 : vector<2x32xf32>
    %114 = math.tanh %113 : vector<2x32xf32>
    %115 = arith.mulf %110, %114 : vector<2x32xf32>
    %116 = vector.extract_strided_slice %17 {offsets = [12, 0], sizes = [2, 128], strides = [1, 1]} : vector<16x128xf32> to vector<2x128xf32>
    %cst_37 = arith.constant dense<0.000000e+00> : vector<2x128xf32>
    %117 = tpu.matmul %79, %19, %cst_37 {dimension_numbers = #tpu.dot_dimension_numbers<[1], [0], [0], [1], [0, 0, 1, 1], [], []>} : vector<2x32xf32>, vector<32x128xf32>, vector<2x128xf32> -> vector<2x128xf32>
    %118 = arith.addf %116, %117 : vector<2x128xf32>
    %119 = vector.extract_strided_slice %118 {offsets = [0, 0], sizes = [2, 32], strides = [1, 1]} : vector<2x128xf32> to vector<2x32xf32>
    %120 = arith.negf %119 : vector<2x32xf32>
    %121 = math.exp %120 : vector<2x32xf32>
    %cst_38 = arith.constant 1.000000e+00 : f32
    %122 = vector.broadcast %cst_38 : f32 to vector<2x32xf32>
    %123 = arith.addf %122, %121 : vector<2x32xf32>
    %124 = arith.divf %122, %123 : vector<2x32xf32>
    %125 = vector.extract_strided_slice %118 {offsets = [0, 32], sizes = [2, 32], strides = [1, 1]} : vector<2x128xf32> to vector<2x32xf32>
    %126 = arith.negf %125 : vector<2x32xf32>
    %127 = math.exp %126 : vector<2x32xf32>
    %cst_39 = arith.constant 1.000000e+00 : f32
    %128 = vector.broadcast %cst_39 : f32 to vector<2x32xf32>
    %129 = arith.addf %128, %127 : vector<2x32xf32>
    %130 = arith.divf %128, %129 : vector<2x32xf32>
    %131 = vector.extract_strided_slice %118 {offsets = [0, 64], sizes = [2, 32], strides = [1, 1]} : vector<2x128xf32> to vector<2x32xf32>
    %132 = math.tanh %131 : vector<2x32xf32>
    %133 = vector.extract_strided_slice %118 {offsets = [0, 96], sizes = [2, 32], strides = [1, 1]} : vector<2x128xf32> to vector<2x32xf32>
    %134 = arith.negf %133 : vector<2x32xf32>
    %135 = math.exp %134 : vector<2x32xf32>
    %cst_40 = arith.constant 1.000000e+00 : f32
    %136 = vector.broadcast %cst_40 : f32 to vector<2x32xf32>
    %137 = arith.addf %136, %135 : vector<2x32xf32>
    %138 = arith.divf %136, %137 : vector<2x32xf32>
    %139 = arith.mulf %130, %77 : vector<2x32xf32>
    %140 = arith.mulf %124, %132 : vector<2x32xf32>
    %141 = arith.addf %139, %140 : vector<2x32xf32>
    %142 = math.tanh %141 : vector<2x32xf32>
    %143 = arith.mulf %138, %142 : vector<2x32xf32>
    %144 = vector.extract_strided_slice %115 {offsets = [0, 0], sizes = [1, 32], strides = [1, 1]} : vector<2x32xf32> to vector<1x32xf32>
    %c1 = arith.constant 1 : index
    %c0_41 = arith.constant 0 : index
    %145 = vector.load %arg17[%c1, %c0_41] : memref<16x64xf32, #tpu.memory_space<vmem>>, vector<1x32xf32>
    tpu.vector_store %arg17[%c1, %c0_41], %144 {strides = array<i32>} : memref<16x64xf32, #tpu.memory_space<vmem>>, vector<1x32xf32>,
    %146 = vector.extract_strided_slice %143 {offsets = [0, 0], sizes = [1, 32], strides = [1, 1]} : vector<2x32xf32> to vector<1x32xf32>
    %c6 = arith.constant 6 : index
    %c32_42 = arith.constant 32 : index
    %147 = vector.load %arg17[%c6, %c32_42] : memref<16x64xf32, #tpu.memory_space<vmem>>, vector<1x32xf32>
    tpu.vector_store %arg17[%c6, %c32_42], %146 {strides = array<i32>} : memref<16x64xf32, #tpu.memory_space<vmem>>, vector<1x32xf32>,
    %148 = vector.extract_strided_slice %115 {offsets = [1, 0], sizes = [1, 32], strides = [1, 1]} : vector<2x32xf32> to vector<1x32xf32>
    %c9 = arith.constant 9 : index
    %c0_43 = arith.constant 0 : index
    %149 = vector.load %arg17[%c9, %c0_43] : memref<16x64xf32, #tpu.memory_space<vmem>>, vector<1x32xf32>
    tpu.vector_store %arg17[%c9, %c0_43], %148 {strides = array<i32>} : memref<16x64xf32, #tpu.memory_space<vmem>>, vector<1x32xf32>,
    %150 = vector.extract_strided_slice %143 {offsets = [1, 0], sizes = [1, 32], strides = [1, 1]} : vector<2x32xf32> to vector<1x32xf32>
    %c14 = arith.constant 14 : index
    %c32_44 = arith.constant 32 : index
    %151 = vector.load %arg17[%c14, %c32_44] : memref<16x64xf32, #tpu.memory_space<vmem>>, vector<1x32xf32>
    tpu.vector_store %arg17[%c14, %c32_44], %150 {strides = array<i32>} : memref<16x64xf32, #tpu.memory_space<vmem>>, vector<1x32xf32>,
    %152 = vector.extract_strided_slice %12 {offsets = [4, 0], sizes = [2, 128], strides = [1, 1]} : vector<16x128xf32> to vector<2x128xf32>
    %cst_45 = arith.constant dense<0.000000e+00> : vector<2x128xf32>
    %153 = tpu.matmul %115, %18, %cst_45 {dimension_numbers = #tpu.dot_dimension_numbers<[1], [0], [0], [1], [0, 0, 1, 1], [], []>} : vector<2x32xf32>, vector<32x128xf32>, vector<2x128xf32> -> vector<2x128xf32>
    %154 = arith.addf %152, %153 : vector<2x128xf32>
    %155 = vector.extract_strided_slice %154 {offsets = [0, 0], sizes = [2, 32], strides = [1, 1]} : vector<2x128xf32> to vector<2x32xf32>
    %156 = arith.negf %155 : vector<2x32xf32>
    %157 = math.exp %156 : vector<2x32xf32>
    %cst_46 = arith.constant 1.000000e+00 : f32
    %158 = vector.broadcast %cst_46 : f32 to vector<2x32xf32>
    %159 = arith.addf %158, %157 : vector<2x32xf32>
    %160 = arith.divf %158, %159 : vector<2x32xf32>
    %161 = vector.extract_strided_slice %154 {offsets = [0, 32], sizes = [2, 32], strides = [1, 1]} : vector<2x128xf32> to vector<2x32xf32>
    %162 = arith.negf %161 : vector<2x32xf32>
    %163 = math.exp %162 : vector<2x32xf32>
    %cst_47 = arith.constant 1.000000e+00 : f32
    %164 = vector.broadcast %cst_47 : f32 to vector<2x32xf32>
    %165 = arith.addf %164, %163 : vector<2x32xf32>
    %166 = arith.divf %164, %165 : vector<2x32xf32>
    %167 = vector.extract_strided_slice %154 {offsets = [0, 64], sizes = [2, 32], strides = [1, 1]} : vector<2x128xf32> to vector<2x32xf32>
    %168 = math.tanh %167 : vector<2x32xf32>
    %169 = vector.extract_strided_slice %154 {offsets = [0, 96], sizes = [2, 32], strides = [1, 1]} : vector<2x128xf32> to vector<2x32xf32>
    %170 = arith.negf %169 : vector<2x32xf32>
    %171 = math.exp %170 : vector<2x32xf32>
    %cst_48 = arith.constant 1.000000e+00 : f32
    %172 = vector.broadcast %cst_48 : f32 to vector<2x32xf32>
    %173 = arith.addf %172, %171 : vector<2x32xf32>
    %174 = arith.divf %172, %173 : vector<2x32xf32>
    %175 = arith.mulf %166, %113 : vector<2x32xf32>
    %176 = arith.mulf %160, %168 : vector<2x32xf32>
    %177 = arith.addf %175, %176 : vector<2x32xf32>
    %178 = math.tanh %177 : vector<2x32xf32>
    %179 = arith.mulf %174, %178 : vector<2x32xf32>
    %180 = vector.extract_strided_slice %17 {offsets = [10, 0], sizes = [2, 128], strides = [1, 1]} : vector<16x128xf32> to vector<2x128xf32>
    %cst_49 = arith.constant dense<0.000000e+00> : vector<2x128xf32>
    %181 = tpu.matmul %143, %19, %cst_49 {dimension_numbers = #tpu.dot_dimension_numbers<[1], [0], [0], [1], [0, 0, 1, 1], [], []>} : vector<2x32xf32>, vector<32x128xf32>, vector<2x128xf32> -> vector<2x128xf32>
    %182 = arith.addf %180, %181 : vector<2x128xf32>
    %183 = vector.extract_strided_slice %182 {offsets = [0, 0], sizes = [2, 32], strides = [1, 1]} : vector<2x128xf32> to vector<2x32xf32>
    %184 = arith.negf %183 : vector<2x32xf32>
    %185 = math.exp %184 : vector<2x32xf32>
    %cst_50 = arith.constant 1.000000e+00 : f32
    %186 = vector.broadcast %cst_50 : f32 to vector<2x32xf32>
    %187 = arith.addf %186, %185 : vector<2x32xf32>
    %188 = arith.divf %186, %187 : vector<2x32xf32>
    %189 = vector.extract_strided_slice %182 {offsets = [0, 32], sizes = [2, 32], strides = [1, 1]} : vector<2x128xf32> to vector<2x32xf32>
    %190 = arith.negf %189 : vector<2x32xf32>
    %191 = math.exp %190 : vector<2x32xf32>
    %cst_51 = arith.constant 1.000000e+00 : f32
    %192 = vector.broadcast %cst_51 : f32 to vector<2x32xf32>
    %193 = arith.addf %192, %191 : vector<2x32xf32>
    %194 = arith.divf %192, %193 : vector<2x32xf32>
    %195 = vector.extract_strided_slice %182 {offsets = [0, 64], sizes = [2, 32], strides = [1, 1]} : vector<2x128xf32> to vector<2x32xf32>
    %196 = math.tanh %195 : vector<2x32xf32>
    %197 = vector.extract_strided_slice %182 {offsets = [0, 96], sizes = [2, 32], strides = [1, 1]} : vector<2x128xf32> to vector<2x32xf32>
    %198 = arith.negf %197 : vector<2x32xf32>
    %199 = math.exp %198 : vector<2x32xf32>
    %cst_52 = arith.constant 1.000000e+00 : f32
    %200 = vector.broadcast %cst_52 : f32 to vector<2x32xf32>
    %201 = arith.addf %200, %199 : vector<2x32xf32>
    %202 = arith.divf %200, %201 : vector<2x32xf32>
    %203 = arith.mulf %194, %141 : vector<2x32xf32>
    %204 = arith.mulf %188, %196 : vector<2x32xf32>
    %205 = arith.addf %203, %204 : vector<2x32xf32>
    %206 = math.tanh %205 : vector<2x32xf32>
    %207 = arith.mulf %202, %206 : vector<2x32xf32>
    %208 = vector.extract_strided_slice %179 {offsets = [0, 0], sizes = [1, 32], strides = [1, 1]} : vector<2x32xf32> to vector<1x32xf32>
    %c2 = arith.constant 2 : index
    %c0_53 = arith.constant 0 : index
    %209 = vector.load %arg17[%c2, %c0_53] : memref<16x64xf32, #tpu.memory_space<vmem>>, vector<1x32xf32>
    tpu.vector_store %arg17[%c2, %c0_53], %208 {strides = array<i32>} : memref<16x64xf32, #tpu.memory_space<vmem>>, vector<1x32xf32>,
    %210 = vector.extract_strided_slice %207 {offsets = [0, 0], sizes = [1, 32], strides = [1, 1]} : vector<2x32xf32> to vector<1x32xf32>
    %c5 = arith.constant 5 : index
    %c32_54 = arith.constant 32 : index
    %211 = vector.load %arg17[%c5, %c32_54] : memref<16x64xf32, #tpu.memory_space<vmem>>, vector<1x32xf32>
    tpu.vector_store %arg17[%c5, %c32_54], %210 {strides = array<i32>} : memref<16x64xf32, #tpu.memory_space<vmem>>, vector<1x32xf32>,
    %212 = vector.extract_strided_slice %179 {offsets = [1, 0], sizes = [1, 32], strides = [1, 1]} : vector<2x32xf32> to vector<1x32xf32>
    %c10 = arith.constant 10 : index
    %c0_55 = arith.constant 0 : index
    %213 = vector.load %arg17[%c10, %c0_55] : memref<16x64xf32, #tpu.memory_space<vmem>>, vector<1x32xf32>
    tpu.vector_store %arg17[%c10, %c0_55], %212 {strides = array<i32>} : memref<16x64xf32, #tpu.memory_space<vmem>>, vector<1x32xf32>,
    %214 = vector.extract_strided_slice %207 {offsets = [1, 0], sizes = [1, 32], strides = [1, 1]} : vector<2x32xf32> to vector<1x32xf32>
    %c13 = arith.constant 13 : index
    %c32_56 = arith.constant 32 : index
    %215 = vector.load %arg17[%c13, %c32_56] : memref<16x64xf32, #tpu.memory_space<vmem>>, vector<1x32xf32>
    tpu.vector_store %arg17[%c13, %c32_56], %214 {strides = array<i32>} : memref<16x64xf32, #tpu.memory_space<vmem>>, vector<1x32xf32>,
    %216 = vector.extract_strided_slice %12 {offsets = [6, 0], sizes = [2, 128], strides = [1, 1]} : vector<16x128xf32> to vector<2x128xf32>
    %cst_57 = arith.constant dense<0.000000e+00> : vector<2x128xf32>
    %217 = tpu.matmul %179, %18, %cst_57 {dimension_numbers = #tpu.dot_dimension_numbers<[1], [0], [0], [1], [0, 0, 1, 1], [], []>} : vector<2x32xf32>, vector<32x128xf32>, vector<2x128xf32> -> vector<2x128xf32>
    %218 = arith.addf %216, %217 : vector<2x128xf32>
    %219 = vector.extract_strided_slice %218 {offsets = [0, 0], sizes = [2, 32], strides = [1, 1]} : vector<2x128xf32> to vector<2x32xf32>
    %220 = arith.negf %219 : vector<2x32xf32>
    %221 = math.exp %220 : vector<2x32xf32>
    %cst_58 = arith.constant 1.000000e+00 : f32
    %222 = vector.broadcast %cst_58 : f32 to vector<2x32xf32>
    %223 = arith.addf %222, %221 : vector<2x32xf32>
    %224 = arith.divf %222, %223 : vector<2x32xf32>
    %225 = vector.extract_strided_slice %218 {offsets = [0, 32], sizes = [2, 32], strides = [1, 1]} : vector<2x128xf32> to vector<2x32xf32>
    %226 = arith.negf %225 : vector<2x32xf32>
    %227 = math.exp %226 : vector<2x32xf32>
    %cst_59 = arith.constant 1.000000e+00 : f32
    %228 = vector.broadcast %cst_59 : f32 to vector<2x32xf32>
    %229 = arith.addf %228, %227 : vector<2x32xf32>
    %230 = arith.divf %228, %229 : vector<2x32xf32>
    %231 = vector.extract_strided_slice %218 {offsets = [0, 64], sizes = [2, 32], strides = [1, 1]} : vector<2x128xf32> to vector<2x32xf32>
    %232 = math.tanh %231 : vector<2x32xf32>
    %233 = vector.extract_strided_slice %218 {offsets = [0, 96], sizes = [2, 32], strides = [1, 1]} : vector<2x128xf32> to vector<2x32xf32>
    %234 = arith.negf %233 : vector<2x32xf32>
    %235 = math.exp %234 : vector<2x32xf32>
    %cst_60 = arith.constant 1.000000e+00 : f32
    %236 = vector.broadcast %cst_60 : f32 to vector<2x32xf32>
    %237 = arith.addf %236, %235 : vector<2x32xf32>
    %238 = arith.divf %236, %237 : vector<2x32xf32>
    %239 = arith.mulf %230, %177 : vector<2x32xf32>
    %240 = arith.mulf %224, %232 : vector<2x32xf32>
    %241 = arith.addf %239, %240 : vector<2x32xf32>
    %242 = math.tanh %241 : vector<2x32xf32>
    %243 = arith.mulf %238, %242 : vector<2x32xf32>
    %244 = vector.extract_strided_slice %17 {offsets = [8, 0], sizes = [2, 128], strides = [1, 1]} : vector<16x128xf32> to vector<2x128xf32>
    %cst_61 = arith.constant dense<0.000000e+00> : vector<2x128xf32>
    %245 = tpu.matmul %207, %19, %cst_61 {dimension_numbers = #tpu.dot_dimension_numbers<[1], [0], [0], [1], [0, 0, 1, 1], [], []>} : vector<2x32xf32>, vector<32x128xf32>, vector<2x128xf32> -> vector<2x128xf32>
    %246 = arith.addf %244, %245 : vector<2x128xf32>
    %247 = vector.extract_strided_slice %246 {offsets = [0, 0], sizes = [2, 32], strides = [1, 1]} : vector<2x128xf32> to vector<2x32xf32>
    %248 = arith.negf %247 : vector<2x32xf32>
    %249 = math.exp %248 : vector<2x32xf32>
    %cst_62 = arith.constant 1.000000e+00 : f32
    %250 = vector.broadcast %cst_62 : f32 to vector<2x32xf32>
    %251 = arith.addf %250, %249 : vector<2x32xf32>
    %252 = arith.divf %250, %251 : vector<2x32xf32>
    %253 = vector.extract_strided_slice %246 {offsets = [0, 32], sizes = [2, 32], strides = [1, 1]} : vector<2x128xf32> to vector<2x32xf32>
    %254 = arith.negf %253 : vector<2x32xf32>
    %255 = math.exp %254 : vector<2x32xf32>
    %cst_63 = arith.constant 1.000000e+00 : f32
    %256 = vector.broadcast %cst_63 : f32 to vector<2x32xf32>
    %257 = arith.addf %256, %255 : vector<2x32xf32>
    %258 = arith.divf %256, %257 : vector<2x32xf32>
    %259 = vector.extract_strided_slice %246 {offsets = [0, 64], sizes = [2, 32], strides = [1, 1]} : vector<2x128xf32> to vector<2x32xf32>
    %260 = math.tanh %259 : vector<2x32xf32>
    %261 = vector.extract_strided_slice %246 {offsets = [0, 96], sizes = [2, 32], strides = [1, 1]} : vector<2x128xf32> to vector<2x32xf32>
    %262 = arith.negf %261 : vector<2x32xf32>
    %263 = math.exp %262 : vector<2x32xf32>
    %cst_64 = arith.constant 1.000000e+00 : f32
    %264 = vector.broadcast %cst_64 : f32 to vector<2x32xf32>
    %265 = arith.addf %264, %263 : vector<2x32xf32>
    %266 = arith.divf %264, %265 : vector<2x32xf32>
    %267 = arith.mulf %258, %205 : vector<2x32xf32>
    %268 = arith.mulf %252, %260 : vector<2x32xf32>
    %269 = arith.addf %267, %268 : vector<2x32xf32>
    %270 = math.tanh %269 : vector<2x32xf32>
    %271 = arith.mulf %266, %270 : vector<2x32xf32>
    %272 = vector.extract_strided_slice %243 {offsets = [0, 0], sizes = [1, 32], strides = [1, 1]} : vector<2x32xf32> to vector<1x32xf32>
    %c3 = arith.constant 3 : index
    %c0_65 = arith.constant 0 : index
    %273 = vector.load %arg17[%c3, %c0_65] : memref<16x64xf32, #tpu.memory_space<vmem>>, vector<1x32xf32>
    tpu.vector_store %arg17[%c3, %c0_65], %272 {strides = array<i32>} : memref<16x64xf32, #tpu.memory_space<vmem>>, vector<1x32xf32>,
    %274 = vector.extract_strided_slice %271 {offsets = [0, 0], sizes = [1, 32], strides = [1, 1]} : vector<2x32xf32> to vector<1x32xf32>
    %c4 = arith.constant 4 : index
    %c32_66 = arith.constant 32 : index
    %275 = vector.load %arg17[%c4, %c32_66] : memref<16x64xf32, #tpu.memory_space<vmem>>, vector<1x32xf32>
    tpu.vector_store %arg17[%c4, %c32_66], %274 {strides = array<i32>} : memref<16x64xf32, #tpu.memory_space<vmem>>, vector<1x32xf32>,
    %276 = vector.extract_strided_slice %243 {offsets = [1, 0], sizes = [1, 32], strides = [1, 1]} : vector<2x32xf32> to vector<1x32xf32>
    %c11 = arith.constant 11 : index
    %c0_67 = arith.constant 0 : index
    %277 = vector.load %arg17[%c11, %c0_67] : memref<16x64xf32, #tpu.memory_space<vmem>>, vector<1x32xf32>
    tpu.vector_store %arg17[%c11, %c0_67], %276 {strides = array<i32>} : memref<16x64xf32, #tpu.memory_space<vmem>>, vector<1x32xf32>,
    %278 = vector.extract_strided_slice %271 {offsets = [1, 0], sizes = [1, 32], strides = [1, 1]} : vector<2x32xf32> to vector<1x32xf32>
    %c12 = arith.constant 12 : index
    %c32_68 = arith.constant 32 : index
    %279 = vector.load %arg17[%c12, %c32_68] : memref<16x64xf32, #tpu.memory_space<vmem>>, vector<1x32xf32>
    tpu.vector_store %arg17[%c12, %c32_68], %278 {strides = array<i32>} : memref<16x64xf32, #tpu.memory_space<vmem>>, vector<1x32xf32>,
    %280 = vector.extract_strided_slice %12 {offsets = [8, 0], sizes = [2, 128], strides = [1, 1]} : vector<16x128xf32> to vector<2x128xf32>
    %cst_69 = arith.constant dense<0.000000e+00> : vector<2x128xf32>
    %281 = tpu.matmul %243, %18, %cst_69 {dimension_numbers = #tpu.dot_dimension_numbers<[1], [0], [0], [1], [0, 0, 1, 1], [], []>} : vector<2x32xf32>, vector<32x128xf32>, vector<2x128xf32> -> vector<2x128xf32>
    %282 = arith.addf %280, %281 : vector<2x128xf32>
    %283 = vector.extract_strided_slice %282 {offsets = [0, 0], sizes = [2, 32], strides = [1, 1]} : vector<2x128xf32> to vector<2x32xf32>
    %284 = arith.negf %283 : vector<2x32xf32>
    %285 = math.exp %284 : vector<2x32xf32>
    %cst_70 = arith.constant 1.000000e+00 : f32
    %286 = vector.broadcast %cst_70 : f32 to vector<2x32xf32>
    %287 = arith.addf %286, %285 : vector<2x32xf32>
    %288 = arith.divf %286, %287 : vector<2x32xf32>
    %289 = vector.extract_strided_slice %282 {offsets = [0, 32], sizes = [2, 32], strides = [1, 1]} : vector<2x128xf32> to vector<2x32xf32>
    %290 = arith.negf %289 : vector<2x32xf32>
    %291 = math.exp %290 : vector<2x32xf32>
    %cst_71 = arith.constant 1.000000e+00 : f32
    %292 = vector.broadcast %cst_71 : f32 to vector<2x32xf32>
    %293 = arith.addf %292, %291 : vector<2x32xf32>
    %294 = arith.divf %292, %293 : vector<2x32xf32>
    %295 = vector.extract_strided_slice %282 {offsets = [0, 64], sizes = [2, 32], strides = [1, 1]} : vector<2x128xf32> to vector<2x32xf32>
    %296 = math.tanh %295 : vector<2x32xf32>
    %297 = vector.extract_strided_slice %282 {offsets = [0, 96], sizes = [2, 32], strides = [1, 1]} : vector<2x128xf32> to vector<2x32xf32>
    %298 = arith.negf %297 : vector<2x32xf32>
    %299 = math.exp %298 : vector<2x32xf32>
    %cst_72 = arith.constant 1.000000e+00 : f32
    %300 = vector.broadcast %cst_72 : f32 to vector<2x32xf32>
    %301 = arith.addf %300, %299 : vector<2x32xf32>
    %302 = arith.divf %300, %301 : vector<2x32xf32>
    %303 = arith.mulf %294, %241 : vector<2x32xf32>
    %304 = arith.mulf %288, %296 : vector<2x32xf32>
    %305 = arith.addf %303, %304 : vector<2x32xf32>
    %306 = math.tanh %305 : vector<2x32xf32>
    %307 = arith.mulf %302, %306 : vector<2x32xf32>
    %308 = vector.extract_strided_slice %17 {offsets = [6, 0], sizes = [2, 128], strides = [1, 1]} : vector<16x128xf32> to vector<2x128xf32>
    %cst_73 = arith.constant dense<0.000000e+00> : vector<2x128xf32>
    %309 = tpu.matmul %271, %19, %cst_73 {dimension_numbers = #tpu.dot_dimension_numbers<[1], [0], [0], [1], [0, 0, 1, 1], [], []>} : vector<2x32xf32>, vector<32x128xf32>, vector<2x128xf32> -> vector<2x128xf32>
    %310 = arith.addf %308, %309 : vector<2x128xf32>
    %311 = vector.extract_strided_slice %310 {offsets = [0, 0], sizes = [2, 32], strides = [1, 1]} : vector<2x128xf32> to vector<2x32xf32>
    %312 = arith.negf %311 : vector<2x32xf32>
    %313 = math.exp %312 : vector<2x32xf32>
    %cst_74 = arith.constant 1.000000e+00 : f32
    %314 = vector.broadcast %cst_74 : f32 to vector<2x32xf32>
    %315 = arith.addf %314, %313 : vector<2x32xf32>
    %316 = arith.divf %314, %315 : vector<2x32xf32>
    %317 = vector.extract_strided_slice %310 {offsets = [0, 32], sizes = [2, 32], strides = [1, 1]} : vector<2x128xf32> to vector<2x32xf32>
    %318 = arith.negf %317 : vector<2x32xf32>
    %319 = math.exp %318 : vector<2x32xf32>
    %cst_75 = arith.constant 1.000000e+00 : f32
    %320 = vector.broadcast %cst_75 : f32 to vector<2x32xf32>
    %321 = arith.addf %320, %319 : vector<2x32xf32>
    %322 = arith.divf %320, %321 : vector<2x32xf32>
    %323 = vector.extract_strided_slice %310 {offsets = [0, 64], sizes = [2, 32], strides = [1, 1]} : vector<2x128xf32> to vector<2x32xf32>
    %324 = math.tanh %323 : vector<2x32xf32>
    %325 = vector.extract_strided_slice %310 {offsets = [0, 96], sizes = [2, 32], strides = [1, 1]} : vector<2x128xf32> to vector<2x32xf32>
    %326 = arith.negf %325 : vector<2x32xf32>
    %327 = math.exp %326 : vector<2x32xf32>
    %cst_76 = arith.constant 1.000000e+00 : f32
    %328 = vector.broadcast %cst_76 : f32 to vector<2x32xf32>
    %329 = arith.addf %328, %327 : vector<2x32xf32>
    %330 = arith.divf %328, %329 : vector<2x32xf32>
    %331 = arith.mulf %322, %269 : vector<2x32xf32>
    %332 = arith.mulf %316, %324 : vector<2x32xf32>
    %333 = arith.addf %331, %332 : vector<2x32xf32>
    %334 = math.tanh %333 : vector<2x32xf32>
    %335 = arith.mulf %330, %334 : vector<2x32xf32>
    %336 = vector.extract_strided_slice %307 {offsets = [0, 0], sizes = [1, 32], strides = [1, 1]} : vector<2x32xf32> to vector<1x32xf32>
    %c4_77 = arith.constant 4 : index
    %c0_78 = arith.constant 0 : index
    %337 = vector.load %arg17[%c4_77, %c0_78] : memref<16x64xf32, #tpu.memory_space<vmem>>, vector<1x32xf32>
    tpu.vector_store %arg17[%c4_77, %c0_78], %336 {strides = array<i32>} : memref<16x64xf32, #tpu.memory_space<vmem>>, vector<1x32xf32>,
    %338 = vector.extract_strided_slice %335 {offsets = [0, 0], sizes = [1, 32], strides = [1, 1]} : vector<2x32xf32> to vector<1x32xf32>
    %c3_79 = arith.constant 3 : index
    %c32_80 = arith.constant 32 : index
    %339 = vector.load %arg17[%c3_79, %c32_80] : memref<16x64xf32, #tpu.memory_space<vmem>>, vector<1x32xf32>
    tpu.vector_store %arg17[%c3_79, %c32_80], %338 {strides = array<i32>} : memref<16x64xf32, #tpu.memory_space<vmem>>, vector<1x32xf32>,
    %340 = vector.extract_strided_slice %307 {offsets = [1, 0], sizes = [1, 32], strides = [1, 1]} : vector<2x32xf32> to vector<1x32xf32>
    %c12_81 = arith.constant 12 : index
    %c0_82 = arith.constant 0 : index
    %341 = vector.load %arg17[%c12_81, %c0_82] : memref<16x64xf32, #tpu.memory_space<vmem>>, vector<1x32xf32>
    tpu.vector_store %arg17[%c12_81, %c0_82], %340 {strides = array<i32>} : memref<16x64xf32, #tpu.memory_space<vmem>>, vector<1x32xf32>,
    %342 = vector.extract_strided_slice %335 {offsets = [1, 0], sizes = [1, 32], strides = [1, 1]} : vector<2x32xf32> to vector<1x32xf32>
    %c11_83 = arith.constant 11 : index
    %c32_84 = arith.constant 32 : index
    %343 = vector.load %arg17[%c11_83, %c32_84] : memref<16x64xf32, #tpu.memory_space<vmem>>, vector<1x32xf32>
    tpu.vector_store %arg17[%c11_83, %c32_84], %342 {strides = array<i32>} : memref<16x64xf32, #tpu.memory_space<vmem>>, vector<1x32xf32>,
    %344 = vector.extract_strided_slice %12 {offsets = [10, 0], sizes = [2, 128], strides = [1, 1]} : vector<16x128xf32> to vector<2x128xf32>
    %cst_85 = arith.constant dense<0.000000e+00> : vector<2x128xf32>
    %345 = tpu.matmul %307, %18, %cst_85 {dimension_numbers = #tpu.dot_dimension_numbers<[1], [0], [0], [1], [0, 0, 1, 1], [], []>} : vector<2x32xf32>, vector<32x128xf32>, vector<2x128xf32> -> vector<2x128xf32>
    %346 = arith.addf %344, %345 : vector<2x128xf32>
    %347 = vector.extract_strided_slice %346 {offsets = [0, 0], sizes = [2, 32], strides = [1, 1]} : vector<2x128xf32> to vector<2x32xf32>
    %348 = arith.negf %347 : vector<2x32xf32>
    %349 = math.exp %348 : vector<2x32xf32>
    %cst_86 = arith.constant 1.000000e+00 : f32
    %350 = vector.broadcast %cst_86 : f32 to vector<2x32xf32>
    %351 = arith.addf %350, %349 : vector<2x32xf32>
    %352 = arith.divf %350, %351 : vector<2x32xf32>
    %353 = vector.extract_strided_slice %346 {offsets = [0, 32], sizes = [2, 32], strides = [1, 1]} : vector<2x128xf32> to vector<2x32xf32>
    %354 = arith.negf %353 : vector<2x32xf32>
    %355 = math.exp %354 : vector<2x32xf32>
    %cst_87 = arith.constant 1.000000e+00 : f32
    %356 = vector.broadcast %cst_87 : f32 to vector<2x32xf32>
    %357 = arith.addf %356, %355 : vector<2x32xf32>
    %358 = arith.divf %356, %357 : vector<2x32xf32>
    %359 = vector.extract_strided_slice %346 {offsets = [0, 64], sizes = [2, 32], strides = [1, 1]} : vector<2x128xf32> to vector<2x32xf32>
    %360 = math.tanh %359 : vector<2x32xf32>
    %361 = vector.extract_strided_slice %346 {offsets = [0, 96], sizes = [2, 32], strides = [1, 1]} : vector<2x128xf32> to vector<2x32xf32>
    %362 = arith.negf %361 : vector<2x32xf32>
    %363 = math.exp %362 : vector<2x32xf32>
    %cst_88 = arith.constant 1.000000e+00 : f32
    %364 = vector.broadcast %cst_88 : f32 to vector<2x32xf32>
    %365 = arith.addf %364, %363 : vector<2x32xf32>
    %366 = arith.divf %364, %365 : vector<2x32xf32>
    %367 = arith.mulf %358, %305 : vector<2x32xf32>
    %368 = arith.mulf %352, %360 : vector<2x32xf32>
    %369 = arith.addf %367, %368 : vector<2x32xf32>
    %370 = math.tanh %369 : vector<2x32xf32>
    %371 = arith.mulf %366, %370 : vector<2x32xf32>
    %372 = vector.extract_strided_slice %17 {offsets = [4, 0], sizes = [2, 128], strides = [1, 1]} : vector<16x128xf32> to vector<2x128xf32>
    %cst_89 = arith.constant dense<0.000000e+00> : vector<2x128xf32>
    %373 = tpu.matmul %335, %19, %cst_89 {dimension_numbers = #tpu.dot_dimension_numbers<[1], [0], [0], [1], [0, 0, 1, 1], [], []>} : vector<2x32xf32>, vector<32x128xf32>, vector<2x128xf32> -> vector<2x128xf32>
    %374 = arith.addf %372, %373 : vector<2x128xf32>
    %375 = vector.extract_strided_slice %374 {offsets = [0, 0], sizes = [2, 32], strides = [1, 1]} : vector<2x128xf32> to vector<2x32xf32>
    %376 = arith.negf %375 : vector<2x32xf32>
    %377 = math.exp %376 : vector<2x32xf32>
    %cst_90 = arith.constant 1.000000e+00 : f32
    %378 = vector.broadcast %cst_90 : f32 to vector<2x32xf32>
    %379 = arith.addf %378, %377 : vector<2x32xf32>
    %380 = arith.divf %378, %379 : vector<2x32xf32>
    %381 = vector.extract_strided_slice %374 {offsets = [0, 32], sizes = [2, 32], strides = [1, 1]} : vector<2x128xf32> to vector<2x32xf32>
    %382 = arith.negf %381 : vector<2x32xf32>
    %383 = math.exp %382 : vector<2x32xf32>
    %cst_91 = arith.constant 1.000000e+00 : f32
    %384 = vector.broadcast %cst_91 : f32 to vector<2x32xf32>
    %385 = arith.addf %384, %383 : vector<2x32xf32>
    %386 = arith.divf %384, %385 : vector<2x32xf32>
    %387 = vector.extract_strided_slice %374 {offsets = [0, 64], sizes = [2, 32], strides = [1, 1]} : vector<2x128xf32> to vector<2x32xf32>
    %388 = math.tanh %387 : vector<2x32xf32>
    %389 = vector.extract_strided_slice %374 {offsets = [0, 96], sizes = [2, 32], strides = [1, 1]} : vector<2x128xf32> to vector<2x32xf32>
    %390 = arith.negf %389 : vector<2x32xf32>
    %391 = math.exp %390 : vector<2x32xf32>
    %cst_92 = arith.constant 1.000000e+00 : f32
    %392 = vector.broadcast %cst_92 : f32 to vector<2x32xf32>
    %393 = arith.addf %392, %391 : vector<2x32xf32>
    %394 = arith.divf %392, %393 : vector<2x32xf32>
    %395 = arith.mulf %386, %333 : vector<2x32xf32>
    %396 = arith.mulf %380, %388 : vector<2x32xf32>
    %397 = arith.addf %395, %396 : vector<2x32xf32>
    %398 = math.tanh %397 : vector<2x32xf32>
    %399 = arith.mulf %394, %398 : vector<2x32xf32>
    %400 = vector.extract_strided_slice %371 {offsets = [0, 0], sizes = [1, 32], strides = [1, 1]} : vector<2x32xf32> to vector<1x32xf32>
    %c5_93 = arith.constant 5 : index
    %c0_94 = arith.constant 0 : index
    %401 = vector.load %arg17[%c5_93, %c0_94] : memref<16x64xf32, #tpu.memory_space<vmem>>, vector<1x32xf32>
    tpu.vector_store %arg17[%c5_93, %c0_94], %400 {strides = array<i32>} : memref<16x64xf32, #tpu.memory_space<vmem>>, vector<1x32xf32>,
    %402 = vector.extract_strided_slice %399 {offsets = [0, 0], sizes = [1, 32], strides = [1, 1]} : vector<2x32xf32> to vector<1x32xf32>
    %c2_95 = arith.constant 2 : index
    %c32_96 = arith.constant 32 : index
    %403 = vector.load %arg17[%c2_95, %c32_96] : memref<16x64xf32, #tpu.memory_space<vmem>>, vector<1x32xf32>
    tpu.vector_store %arg17[%c2_95, %c32_96], %402 {strides = array<i32>} : memref<16x64xf32, #tpu.memory_space<vmem>>, vector<1x32xf32>,
    %404 = vector.extract_strided_slice %371 {offsets = [1, 0], sizes = [1, 32], strides = [1, 1]} : vector<2x32xf32> to vector<1x32xf32>
    %c13_97 = arith.constant 13 : index
    %c0_98 = arith.constant 0 : index
    %405 = vector.load %arg17[%c13_97, %c0_98] : memref<16x64xf32, #tpu.memory_space<vmem>>, vector<1x32xf32>
    tpu.vector_store %arg17[%c13_97, %c0_98], %404 {strides = array<i32>} : memref<16x64xf32, #tpu.memory_space<vmem>>, vector<1x32xf32>,
    %406 = vector.extract_strided_slice %399 {offsets = [1, 0], sizes = [1, 32], strides = [1, 1]} : vector<2x32xf32> to vector<1x32xf32>
    %c10_99 = arith.constant 10 : index
    %c32_100 = arith.constant 32 : index
    %407 = vector.load %arg17[%c10_99, %c32_100] : memref<16x64xf32, #tpu.memory_space<vmem>>, vector<1x32xf32>
    tpu.vector_store %arg17[%c10_99, %c32_100], %406 {strides = array<i32>} : memref<16x64xf32, #tpu.memory_space<vmem>>, vector<1x32xf32>,
    %408 = vector.extract_strided_slice %12 {offsets = [12, 0], sizes = [2, 128], strides = [1, 1]} : vector<16x128xf32> to vector<2x128xf32>
    %cst_101 = arith.constant dense<0.000000e+00> : vector<2x128xf32>
    %409 = tpu.matmul %371, %18, %cst_101 {dimension_numbers = #tpu.dot_dimension_numbers<[1], [0], [0], [1], [0, 0, 1, 1], [], []>} : vector<2x32xf32>, vector<32x128xf32>, vector<2x128xf32> -> vector<2x128xf32>
    %410 = arith.addf %408, %409 : vector<2x128xf32>
    %411 = vector.extract_strided_slice %410 {offsets = [0, 0], sizes = [2, 32], strides = [1, 1]} : vector<2x128xf32> to vector<2x32xf32>
    %412 = arith.negf %411 : vector<2x32xf32>
    %413 = math.exp %412 : vector<2x32xf32>
    %cst_102 = arith.constant 1.000000e+00 : f32
    %414 = vector.broadcast %cst_102 : f32 to vector<2x32xf32>
    %415 = arith.addf %414, %413 : vector<2x32xf32>
    %416 = arith.divf %414, %415 : vector<2x32xf32>
    %417 = vector.extract_strided_slice %410 {offsets = [0, 32], sizes = [2, 32], strides = [1, 1]} : vector<2x128xf32> to vector<2x32xf32>
    %418 = arith.negf %417 : vector<2x32xf32>
    %419 = math.exp %418 : vector<2x32xf32>
    %cst_103 = arith.constant 1.000000e+00 : f32
    %420 = vector.broadcast %cst_103 : f32 to vector<2x32xf32>
    %421 = arith.addf %420, %419 : vector<2x32xf32>
    %422 = arith.divf %420, %421 : vector<2x32xf32>
    %423 = vector.extract_strided_slice %410 {offsets = [0, 64], sizes = [2, 32], strides = [1, 1]} : vector<2x128xf32> to vector<2x32xf32>
    %424 = math.tanh %423 : vector<2x32xf32>
    %425 = vector.extract_strided_slice %410 {offsets = [0, 96], sizes = [2, 32], strides = [1, 1]} : vector<2x128xf32> to vector<2x32xf32>
    %426 = arith.negf %425 : vector<2x32xf32>
    %427 = math.exp %426 : vector<2x32xf32>
    %cst_104 = arith.constant 1.000000e+00 : f32
    %428 = vector.broadcast %cst_104 : f32 to vector<2x32xf32>
    %429 = arith.addf %428, %427 : vector<2x32xf32>
    %430 = arith.divf %428, %429 : vector<2x32xf32>
    %431 = arith.mulf %422, %369 : vector<2x32xf32>
    %432 = arith.mulf %416, %424 : vector<2x32xf32>
    %433 = arith.addf %431, %432 : vector<2x32xf32>
    %434 = math.tanh %433 : vector<2x32xf32>
    %435 = arith.mulf %430, %434 : vector<2x32xf32>
    %436 = vector.extract_strided_slice %17 {offsets = [2, 0], sizes = [2, 128], strides = [1, 1]} : vector<16x128xf32> to vector<2x128xf32>
    %cst_105 = arith.constant dense<0.000000e+00> : vector<2x128xf32>
    %437 = tpu.matmul %399, %19, %cst_105 {dimension_numbers = #tpu.dot_dimension_numbers<[1], [0], [0], [1], [0, 0, 1, 1], [], []>} : vector<2x32xf32>, vector<32x128xf32>, vector<2x128xf32> -> vector<2x128xf32>
    %438 = arith.addf %436, %437 : vector<2x128xf32>
    %439 = vector.extract_strided_slice %438 {offsets = [0, 0], sizes = [2, 32], strides = [1, 1]} : vector<2x128xf32> to vector<2x32xf32>
    %440 = arith.negf %439 : vector<2x32xf32>
    %441 = math.exp %440 : vector<2x32xf32>
    %cst_106 = arith.constant 1.000000e+00 : f32
    %442 = vector.broadcast %cst_106 : f32 to vector<2x32xf32>
    %443 = arith.addf %442, %441 : vector<2x32xf32>
    %444 = arith.divf %442, %443 : vector<2x32xf32>
    %445 = vector.extract_strided_slice %438 {offsets = [0, 32], sizes = [2, 32], strides = [1, 1]} : vector<2x128xf32> to vector<2x32xf32>
    %446 = arith.negf %445 : vector<2x32xf32>
    %447 = math.exp %446 : vector<2x32xf32>
    %cst_107 = arith.constant 1.000000e+00 : f32
    %448 = vector.broadcast %cst_107 : f32 to vector<2x32xf32>
    %449 = arith.addf %448, %447 : vector<2x32xf32>
    %450 = arith.divf %448, %449 : vector<2x32xf32>
    %451 = vector.extract_strided_slice %438 {offsets = [0, 64], sizes = [2, 32], strides = [1, 1]} : vector<2x128xf32> to vector<2x32xf32>
    %452 = math.tanh %451 : vector<2x32xf32>
    %453 = vector.extract_strided_slice %438 {offsets = [0, 96], sizes = [2, 32], strides = [1, 1]} : vector<2x128xf32> to vector<2x32xf32>
    %454 = arith.negf %453 : vector<2x32xf32>
    %455 = math.exp %454 : vector<2x32xf32>
    %cst_108 = arith.constant 1.000000e+00 : f32
    %456 = vector.broadcast %cst_108 : f32 to vector<2x32xf32>
    %457 = arith.addf %456, %455 : vector<2x32xf32>
    %458 = arith.divf %456, %457 : vector<2x32xf32>
    %459 = arith.mulf %450, %397 : vector<2x32xf32>
    %460 = arith.mulf %444, %452 : vector<2x32xf32>
    %461 = arith.addf %459, %460 : vector<2x32xf32>
    %462 = math.tanh %461 : vector<2x32xf32>
    %463 = arith.mulf %458, %462 : vector<2x32xf32>
    %464 = vector.extract_strided_slice %435 {offsets = [0, 0], sizes = [1, 32], strides = [1, 1]} : vector<2x32xf32> to vector<1x32xf32>
    %c6_109 = arith.constant 6 : index
    %c0_110 = arith.constant 0 : index
    %465 = vector.load %arg17[%c6_109, %c0_110] : memref<16x64xf32, #tpu.memory_space<vmem>>, vector<1x32xf32>
    tpu.vector_store %arg17[%c6_109, %c0_110], %464 {strides = array<i32>} : memref<16x64xf32, #tpu.memory_space<vmem>>, vector<1x32xf32>,
    %466 = vector.extract_strided_slice %463 {offsets = [0, 0], sizes = [1, 32], strides = [1, 1]} : vector<2x32xf32> to vector<1x32xf32>
    %c1_111 = arith.constant 1 : index
    %c32_112 = arith.constant 32 : index
    %467 = vector.load %arg17[%c1_111, %c32_112] : memref<16x64xf32, #tpu.memory_space<vmem>>, vector<1x32xf32>
    tpu.vector_store %arg17[%c1_111, %c32_112], %466 {strides = array<i32>} : memref<16x64xf32, #tpu.memory_space<vmem>>, vector<1x32xf32>,
    %468 = vector.extract_strided_slice %435 {offsets = [1, 0], sizes = [1, 32], strides = [1, 1]} : vector<2x32xf32> to vector<1x32xf32>
    %c14_113 = arith.constant 14 : index
    %c0_114 = arith.constant 0 : index
    %469 = vector.load %arg17[%c14_113, %c0_114] : memref<16x64xf32, #tpu.memory_space<vmem>>, vector<1x32xf32>
    tpu.vector_store %arg17[%c14_113, %c0_114], %468 {strides = array<i32>} : memref<16x64xf32, #tpu.memory_space<vmem>>, vector<1x32xf32>,
    %470 = vector.extract_strided_slice %463 {offsets = [1, 0], sizes = [1, 32], strides = [1, 1]} : vector<2x32xf32> to vector<1x32xf32>
    %c9_115 = arith.constant 9 : index
    %c32_116 = arith.constant 32 : index
    %471 = vector.load %arg17[%c9_115, %c32_116] : memref<16x64xf32, #tpu.memory_space<vmem>>, vector<1x32xf32>
    tpu.vector_store %arg17[%c9_115, %c32_116], %470 {strides = array<i32>} : memref<16x64xf32, #tpu.memory_space<vmem>>, vector<1x32xf32>,
    %472 = vector.extract_strided_slice %12 {offsets = [14, 0], sizes = [2, 128], strides = [1, 1]} : vector<16x128xf32> to vector<2x128xf32>
    %cst_117 = arith.constant dense<0.000000e+00> : vector<2x128xf32>
    %473 = tpu.matmul %435, %18, %cst_117 {dimension_numbers = #tpu.dot_dimension_numbers<[1], [0], [0], [1], [0, 0, 1, 1], [], []>} : vector<2x32xf32>, vector<32x128xf32>, vector<2x128xf32> -> vector<2x128xf32>
    %474 = arith.addf %472, %473 : vector<2x128xf32>
    %475 = vector.extract_strided_slice %474 {offsets = [0, 0], sizes = [2, 32], strides = [1, 1]} : vector<2x128xf32> to vector<2x32xf32>
    %476 = arith.negf %475 : vector<2x32xf32>
    %477 = math.exp %476 : vector<2x32xf32>
    %cst_118 = arith.constant 1.000000e+00 : f32
    %478 = vector.broadcast %cst_118 : f32 to vector<2x32xf32>
    %479 = arith.addf %478, %477 : vector<2x32xf32>
    %480 = arith.divf %478, %479 : vector<2x32xf32>
    %481 = vector.extract_strided_slice %474 {offsets = [0, 32], sizes = [2, 32], strides = [1, 1]} : vector<2x128xf32> to vector<2x32xf32>
    %482 = arith.negf %481 : vector<2x32xf32>
    %483 = math.exp %482 : vector<2x32xf32>
    %cst_119 = arith.constant 1.000000e+00 : f32
    %484 = vector.broadcast %cst_119 : f32 to vector<2x32xf32>
    %485 = arith.addf %484, %483 : vector<2x32xf32>
    %486 = arith.divf %484, %485 : vector<2x32xf32>
    %487 = vector.extract_strided_slice %474 {offsets = [0, 64], sizes = [2, 32], strides = [1, 1]} : vector<2x128xf32> to vector<2x32xf32>
    %488 = math.tanh %487 : vector<2x32xf32>
    %489 = vector.extract_strided_slice %474 {offsets = [0, 96], sizes = [2, 32], strides = [1, 1]} : vector<2x128xf32> to vector<2x32xf32>
    %490 = arith.negf %489 : vector<2x32xf32>
    %491 = math.exp %490 : vector<2x32xf32>
    %cst_120 = arith.constant 1.000000e+00 : f32
    %492 = vector.broadcast %cst_120 : f32 to vector<2x32xf32>
    %493 = arith.addf %492, %491 : vector<2x32xf32>
    %494 = arith.divf %492, %493 : vector<2x32xf32>
    %495 = arith.mulf %486, %433 : vector<2x32xf32>
    %496 = arith.mulf %480, %488 : vector<2x32xf32>
    %497 = arith.addf %495, %496 : vector<2x32xf32>
    %498 = math.tanh %497 : vector<2x32xf32>
    %499 = arith.mulf %494, %498 : vector<2x32xf32>
    %500 = vector.extract_strided_slice %17 {offsets = [0, 0], sizes = [2, 128], strides = [1, 1]} : vector<16x128xf32> to vector<2x128xf32>
    %cst_121 = arith.constant dense<0.000000e+00> : vector<2x128xf32>
    %501 = tpu.matmul %463, %19, %cst_121 {dimension_numbers = #tpu.dot_dimension_numbers<[1], [0], [0], [1], [0, 0, 1, 1], [], []>} : vector<2x32xf32>, vector<32x128xf32>, vector<2x128xf32> -> vector<2x128xf32>
    %502 = arith.addf %500, %501 : vector<2x128xf32>
    %503 = vector.extract_strided_slice %502 {offsets = [0, 0], sizes = [2, 32], strides = [1, 1]} : vector<2x128xf32> to vector<2x32xf32>
    %504 = arith.negf %503 : vector<2x32xf32>
    %505 = math.exp %504 : vector<2x32xf32>
    %cst_122 = arith.constant 1.000000e+00 : f32
    %506 = vector.broadcast %cst_122 : f32 to vector<2x32xf32>
    %507 = arith.addf %506, %505 : vector<2x32xf32>
    %508 = arith.divf %506, %507 : vector<2x32xf32>
    %509 = vector.extract_strided_slice %502 {offsets = [0, 32], sizes = [2, 32], strides = [1, 1]} : vector<2x128xf32> to vector<2x32xf32>
    %510 = arith.negf %509 : vector<2x32xf32>
    %511 = math.exp %510 : vector<2x32xf32>
    %cst_123 = arith.constant 1.000000e+00 : f32
    %512 = vector.broadcast %cst_123 : f32 to vector<2x32xf32>
    %513 = arith.addf %512, %511 : vector<2x32xf32>
    %514 = arith.divf %512, %513 : vector<2x32xf32>
    %515 = vector.extract_strided_slice %502 {offsets = [0, 64], sizes = [2, 32], strides = [1, 1]} : vector<2x128xf32> to vector<2x32xf32>
    %516 = math.tanh %515 : vector<2x32xf32>
    %517 = vector.extract_strided_slice %502 {offsets = [0, 96], sizes = [2, 32], strides = [1, 1]} : vector<2x128xf32> to vector<2x32xf32>
    %518 = arith.negf %517 : vector<2x32xf32>
    %519 = math.exp %518 : vector<2x32xf32>
    %cst_124 = arith.constant 1.000000e+00 : f32
    %520 = vector.broadcast %cst_124 : f32 to vector<2x32xf32>
    %521 = arith.addf %520, %519 : vector<2x32xf32>
    %522 = arith.divf %520, %521 : vector<2x32xf32>
    %523 = arith.mulf %514, %461 : vector<2x32xf32>
    %524 = arith.mulf %508, %516 : vector<2x32xf32>
    %525 = arith.addf %523, %524 : vector<2x32xf32>
    %526 = math.tanh %525 : vector<2x32xf32>
    %527 = arith.mulf %522, %526 : vector<2x32xf32>
    %528 = vector.extract_strided_slice %499 {offsets = [0, 0], sizes = [1, 32], strides = [1, 1]} : vector<2x32xf32> to vector<1x32xf32>
    %c7_125 = arith.constant 7 : index
    %c0_126 = arith.constant 0 : index
    %529 = vector.load %arg17[%c7_125, %c0_126] : memref<16x64xf32, #tpu.memory_space<vmem>>, vector<1x32xf32>
    tpu.vector_store %arg17[%c7_125, %c0_126], %528 {strides = array<i32>} : memref<16x64xf32, #tpu.memory_space<vmem>>, vector<1x32xf32>,
    %530 = vector.extract_strided_slice %527 {offsets = [0, 0], sizes = [1, 32], strides = [1, 1]} : vector<2x32xf32> to vector<1x32xf32>
    %c0_127 = arith.constant 0 : index
    %c32_128 = arith.constant 32 : index
    %531 = vector.load %arg17[%c0_127, %c32_128] : memref<16x64xf32, #tpu.memory_space<vmem>>, vector<1x32xf32>
    tpu.vector_store %arg17[%c0_127, %c32_128], %530 {strides = array<i32>} : memref<16x64xf32, #tpu.memory_space<vmem>>, vector<1x32xf32>,
    %532 = vector.extract_strided_slice %499 {offsets = [1, 0], sizes = [1, 32], strides = [1, 1]} : vector<2x32xf32> to vector<1x32xf32>
    %c15_129 = arith.constant 15 : index
    %c0_130 = arith.constant 0 : index
    %533 = vector.load %arg17[%c15_129, %c0_130] : memref<16x64xf32, #tpu.memory_space<vmem>>, vector<1x32xf32>
    tpu.vector_store %arg17[%c15_129, %c0_130], %532 {strides = array<i32>} : memref<16x64xf32, #tpu.memory_space<vmem>>, vector<1x32xf32>,
    %534 = vector.extract_strided_slice %527 {offsets = [1, 0], sizes = [1, 32], strides = [1, 1]} : vector<2x32xf32> to vector<1x32xf32>
    %c8_131 = arith.constant 8 : index
    %c32_132 = arith.constant 32 : index
    %535 = vector.load %arg17[%c8_131, %c32_132] : memref<16x64xf32, #tpu.memory_space<vmem>>, vector<1x32xf32>
    tpu.vector_store %arg17[%c8_131, %c32_132], %534 {strides = array<i32>} : memref<16x64xf32, #tpu.memory_space<vmem>>, vector<1x32xf32>,
    %c0_133 = arith.constant 0 : index
    %c0_134 = arith.constant 0 : index
    %536 = vector.load %arg17[%c0_133, %c0_134] : memref<16x64xf32, #tpu.memory_space<vmem>>, vector<16x64xf32>
    %c0_135 = arith.constant 0 : index
    %c0_136 = arith.constant 0 : index
    %537 = vector.load %arg10[%c0_135, %c0_136] : memref<64x16xf32, #tpu.memory_space<vmem>>, vector<64x16xf32>
    %cst_137 = arith.constant dense<0.000000e+00> : vector<16x16xf32>
    %538 = tpu.matmul %536, %537, %cst_137 {dimension_numbers = #tpu.dot_dimension_numbers<[1], [0], [0], [1], [0, 0, 1, 1], [], []>} : vector<16x64xf32>, vector<64x16xf32>, vector<16x16xf32> -> vector<16x16xf32>
    %539 = math.tanh %538 : vector<16x16xf32>
    %c0_138 = arith.constant 0 : index
    %c0_139 = arith.constant 0 : index
    %540 = vector.load %arg11[%c0_138, %c0_139] : memref<4x16xf32, #tpu.memory_space<vmem>>, vector<4x16xf32>
    %cst_140 = arith.constant dense<0.000000e+00> : vector<4x16xf32>
    %541 = tpu.matmul %540, %539, %cst_140 {dimension_numbers = #tpu.dot_dimension_numbers<[1], [1], [0], [0], [0, 0, 1, 0], [], []>} : vector<4x16xf32>, vector<16x16xf32>, vector<4x16xf32> -> vector<4x16xf32>
    %542 = vector.extract_strided_slice %541 {offsets = [0, 0], sizes = [4, 8], strides = [1, 1]} : vector<4x16xf32> to vector<4x8xf32>
    %c0_141 = arith.constant 0 : index
    %c0_142 = arith.constant 0 : index
    %543 = vector.load %arg2[%c0_141, %c0_142] : memref<2x8xf32, #tpu.memory_space<vmem>>, vector<1x8xf32>
    %544 = vector.broadcast %543 : vector<1x8xf32> to vector<4x8xf32>
    %545 = arith.addf %542, %544 : vector<4x8xf32>
    %cst_143 = arith.constant dense<0xFF800000> : vector<4xf32>
    %546 = vector.multi_reduction <maximumf>, %545, %cst_143 [1] : vector<4x8xf32> to vector<4xf32>
    %547 = vector.shape_cast %546 : vector<4xf32> to vector<4x1xf32>
    %548 = vector.broadcast %547 : vector<4x1xf32> to vector<4x8xf32>
    %549 = arith.subf %545, %548 : vector<4x8xf32>
    %550 = math.exp %549 : vector<4x8xf32>
    %cst_144 = arith.constant dense<0.000000e+00> : vector<4xf32>
    %551 = vector.multi_reduction <add>, %550, %cst_144 [1] : vector<4x8xf32> to vector<4xf32>
    %552 = vector.shape_cast %551 : vector<4xf32> to vector<4x1xf32>
    %553 = vector.broadcast %552 : vector<4x1xf32> to vector<4x8xf32>
    %554 = arith.divf %550, %553 : vector<4x8xf32>
    %555 = vector.extract_strided_slice %536 {offsets = [0, 0], sizes = [8, 64], strides = [1, 1]} : vector<16x64xf32> to vector<8x64xf32>
    %cst_145 = arith.constant dense<0.000000e+00> : vector<4x64xf32>
    %556 = tpu.matmul %554, %555, %cst_145 {dimension_numbers = #tpu.dot_dimension_numbers<[1], [0], [0], [1], [0, 0, 1, 1], [], []>} : vector<4x8xf32>, vector<8x64xf32>, vector<4x64xf32> -> vector<4x64xf32>
    %557 = vector.extract_strided_slice %556 {offsets = [0, 0], sizes = [1, 64], strides = [1, 1]} : vector<4x64xf32> to vector<1x64xf32>
    %558 = vector.extract_strided_slice %556 {offsets = [1, 0], sizes = [1, 64], strides = [1, 1]} : vector<4x64xf32> to vector<1x64xf32>
    %559 = vector.extract_strided_slice %556 {offsets = [2, 0], sizes = [1, 64], strides = [1, 1]} : vector<4x64xf32> to vector<1x64xf32>
    %560 = vector.extract_strided_slice %556 {offsets = [3, 0], sizes = [1, 64], strides = [1, 1]} : vector<4x64xf32> to vector<1x64xf32>
    %561 = tpu.concatenate %557, %558, %559, %560 in 1 : vector<1x64xf32>, vector<1x64xf32>, vector<1x64xf32>, vector<1x64xf32> -> vector<1x256xf32>
    %562 = vector.extract_strided_slice %541 {offsets = [0, 8], sizes = [4, 8], strides = [1, 1]} : vector<4x16xf32> to vector<4x8xf32>
    %c1_146 = arith.constant 1 : index
    %c0_147 = arith.constant 0 : index
    %563 = vector.load %arg2[%c1_146, %c0_147] : memref<2x8xf32, #tpu.memory_space<vmem>>, vector<1x8xf32>
    %564 = vector.broadcast %563 : vector<1x8xf32> to vector<4x8xf32>
    %565 = arith.addf %562, %564 : vector<4x8xf32>
    %cst_148 = arith.constant dense<0xFF800000> : vector<4xf32>
    %566 = vector.multi_reduction <maximumf>, %565, %cst_148 [1] : vector<4x8xf32> to vector<4xf32>
    %567 = vector.shape_cast %566 : vector<4xf32> to vector<4x1xf32>
    %568 = vector.broadcast %567 : vector<4x1xf32> to vector<4x8xf32>
    %569 = arith.subf %565, %568 : vector<4x8xf32>
    %570 = math.exp %569 : vector<4x8xf32>
    %cst_149 = arith.constant dense<0.000000e+00> : vector<4xf32>
    %571 = vector.multi_reduction <add>, %570, %cst_149 [1] : vector<4x8xf32> to vector<4xf32>
    %572 = vector.shape_cast %571 : vector<4xf32> to vector<4x1xf32>
    %573 = vector.broadcast %572 : vector<4x1xf32> to vector<4x8xf32>
    %574 = arith.divf %570, %573 : vector<4x8xf32>
    %575 = vector.extract_strided_slice %536 {offsets = [8, 0], sizes = [8, 64], strides = [1, 1]} : vector<16x64xf32> to vector<8x64xf32>
    %cst_150 = arith.constant dense<0.000000e+00> : vector<4x64xf32>
    %576 = tpu.matmul %574, %575, %cst_150 {dimension_numbers = #tpu.dot_dimension_numbers<[1], [0], [0], [1], [0, 0, 1, 1], [], []>} : vector<4x8xf32>, vector<8x64xf32>, vector<4x64xf32> -> vector<4x64xf32>
    %577 = vector.extract_strided_slice %576 {offsets = [0, 0], sizes = [1, 64], strides = [1, 1]} : vector<4x64xf32> to vector<1x64xf32>
    %578 = vector.extract_strided_slice %576 {offsets = [1, 0], sizes = [1, 64], strides = [1, 1]} : vector<4x64xf32> to vector<1x64xf32>
    %579 = vector.extract_strided_slice %576 {offsets = [2, 0], sizes = [1, 64], strides = [1, 1]} : vector<4x64xf32> to vector<1x64xf32>
    %580 = vector.extract_strided_slice %576 {offsets = [3, 0], sizes = [1, 64], strides = [1, 1]} : vector<4x64xf32> to vector<1x64xf32>
    %581 = tpu.concatenate %577, %578, %579, %580 in 1 : vector<1x64xf32>, vector<1x64xf32>, vector<1x64xf32>, vector<1x64xf32> -> vector<1x256xf32>
    %582 = tpu.concatenate %554, %574 in 0 : vector<4x8xf32>, vector<4x8xf32> -> vector<8x8xf32>
    %583 = tpu.concatenate %561, %581 in 0 : vector<1x256xf32>, vector<1x256xf32> -> vector<2x256xf32>
    %c0_151 = arith.constant 0 : index
    %c0_152 = arith.constant 0 : index
    %584 = vector.load %arg12[%c0_151, %c0_152] : memref<256x32xf32, #tpu.memory_space<vmem>>, vector<256x32xf32>
    %cst_153 = arith.constant dense<0.000000e+00> : vector<2x32xf32>
    %585 = tpu.matmul %583, %584, %cst_153 {dimension_numbers = #tpu.dot_dimension_numbers<[1], [0], [0], [1], [0, 0, 1, 1], [], []>} : vector<2x256xf32>, vector<256x32xf32>, vector<2x32xf32> -> vector<2x32xf32>
    %c0_154 = arith.constant 0 : index
    %c0_155 = arith.constant 0 : index
    %586 = vector.load %arg13[%c0_154, %c0_155] : memref<1x32xf32, #tpu.memory_space<vmem>>, vector<1x32xf32>
    %587 = vector.broadcast %586 : vector<1x32xf32> to vector<2x32xf32>
    %588 = arith.addf %585, %587 : vector<2x32xf32>
    %589 = math.tanh %588 : vector<2x32xf32>
    %c0_156 = arith.constant 0 : index
    %c0_157 = arith.constant 0 : index
    %590 = vector.load %arg14[%c0_156, %c0_157] : memref<32x3xf32, #tpu.memory_space<vmem>>, vector<32x3xf32>
    %cst_158 = arith.constant dense<0.000000e+00> : vector<2x3xf32>
    %591 = tpu.matmul %589, %590, %cst_158 {dimension_numbers = #tpu.dot_dimension_numbers<[1], [0], [0], [1], [0, 0, 1, 1], [], []>} : vector<2x32xf32>, vector<32x3xf32>, vector<2x3xf32> -> vector<2x3xf32>
    %c0_159 = arith.constant 0 : index
    %c0_160 = arith.constant 0 : index
    %592 = vector.load %arg15[%c0_159, %c0_160] : memref<1x3xf32, #tpu.memory_space<vmem>>, vector<1x3xf32>
    %593 = vector.broadcast %592 : vector<1x3xf32> to vector<2x3xf32>
    %594 = arith.addf %591, %593 : vector<2x3xf32>
    %cst_161 = arith.constant 0.000000e+00 : f32
    %595 = vector.broadcast %cst_161 : f32 to vector<8x120xf32>
    %596 = tpu.concatenate %582, %595 in 1 : vector<8x8xf32>, vector<8x120xf32> -> vector<8x128xf32>
    %cst_162 = arith.constant 0.000000e+00 : f32
    %597 = vector.broadcast %cst_162 : f32 to vector<2x125xf32>
    %598 = tpu.concatenate %594, %597 in 1 : vector<2x3xf32>, vector<2x125xf32> -> vector<2x128xf32>
    %cst_163 = arith.constant 0.000000e+00 : f32
    %599 = vector.broadcast %cst_163 : f32 to vector<6x128xf32>
    %600 = tpu.concatenate %596, %598, %599 in 0 : vector<8x128xf32>, vector<2x128xf32>, vector<6x128xf32> -> vector<16x128xf32>
    %c0_164 = arith.constant 0 : index
    %c0_165 = arith.constant 0 : index
    %601 = vector.load %arg16[%c0_164, %c0_165] : memref<16x128xf32, #tpu.memory_space<vmem>>, vector<16x128xf32>
    tpu.vector_store %arg16[%c0_164, %c0_165], %600 {strides = array<i32>} : memref<16x128xf32, #tpu.memory_space<vmem>>, vector<16x128xf32>,
    return
  }
  func.func @transform_0(%arg0: i32) -> (i32, i32) {
    %c0_i32 = arith.constant 0 : i32
    %c0_i32_0 = arith.constant 0 : i32
    %c0_i32_1 = arith.constant 0 : i32
    return %c0_i32, %c0_i32_0 : i32, i32
  }
  func.func @transform_1(%arg0: i32) -> (i32, i32) {
    %c0_i32 = arith.constant 0 : i32
    %c0_i32_0 = arith.constant 0 : i32
    %c0_i32_1 = arith.constant 0 : i32
    return %c0_i32, %c0_i32_0 : i32, i32
  }
  func.func @transform_2(%arg0: i32) -> (i32, i32) {
    %c0_i32 = arith.constant 0 : i32
    %c0_i32_0 = arith.constant 0 : i32
    %c0_i32_1 = arith.constant 0 : i32
    return %c0_i32, %c0_i32_0 : i32, i32
  }
  func.func @transform_3(%arg0: i32) -> (i32, i32) {
    %c0_i32 = arith.constant 0 : i32
    %c0_i32_0 = arith.constant 0 : i32
    %c0_i32_1 = arith.constant 0 : i32
    return %c0_i32, %c0_i32_0 : i32, i32
  }
  func.func @transform_4(%arg0: i32) -> (i32, i32) {
    %c0_i32 = arith.constant 0 : i32
    %c0_i32_0 = arith.constant 0 : i32
    %c0_i32_1 = arith.constant 0 : i32
    return %c0_i32, %c0_i32_0 : i32, i32
  }
  func.func @transform_5(%arg0: i32) -> (i32, i32) {
    %c0_i32 = arith.constant 0 : i32
    %c0_i32_0 = arith.constant 0 : i32
    %c0_i32_1 = arith.constant 0 : i32
    return %c0_i32, %c0_i32_0 : i32, i32
  }
  func.func @transform_6(%arg0: i32) -> (i32, i32) {
    %c0_i32 = arith.constant 0 : i32
    %c0_i32_0 = arith.constant 0 : i32
    %c0_i32_1 = arith.constant 0 : i32
    return %c0_i32, %c0_i32_0 : i32, i32
  }
  func.func @transform_7(%arg0: i32) -> (i32, i32) {
    %c0_i32 = arith.constant 0 : i32
    %c0_i32_0 = arith.constant 0 : i32
    %c0_i32_1 = arith.constant 0 : i32
    return %c0_i32, %c0_i32_0 : i32, i32
  }
  func.func @transform_8(%arg0: i32) -> (i32, i32) {
    %c0_i32 = arith.constant 0 : i32
    %c0_i32_0 = arith.constant 0 : i32
    %c0_i32_1 = arith.constant 0 : i32
    return %c0_i32, %c0_i32_0 : i32, i32
  }
  func.func @transform_9(%arg0: i32) -> (i32, i32) {
    %c0_i32 = arith.constant 0 : i32
    %c0_i32_0 = arith.constant 0 : i32
    %c0_i32_1 = arith.constant 0 : i32
    return %c0_i32, %c0_i32_0 : i32, i32
  }
  func.func @transform_10(%arg0: i32) -> (i32, i32) {
    %c0_i32 = arith.constant 0 : i32
    %c0_i32_0 = arith.constant 0 : i32
    %c0_i32_1 = arith.constant 0 : i32
    return %c0_i32, %c0_i32_0 : i32, i32
  }
  func.func @transform_11(%arg0: i32) -> (i32, i32) {
    %c0_i32 = arith.constant 0 : i32
    %c0_i32_0 = arith.constant 0 : i32
    %c0_i32_1 = arith.constant 0 : i32
    return %c0_i32, %c0_i32_0 : i32, i32
  }
  func.func @transform_12(%arg0: i32) -> (i32, i32) {
    %c0_i32 = arith.constant 0 : i32
    %c0_i32_0 = arith.constant 0 : i32
    %c0_i32_1 = arith.constant 0 : i32
    return %c0_i32, %c0_i32_0 : i32, i32
  }
  func.func @transform_13(%arg0: i32) -> (i32, i32) {
    %c0_i32 = arith.constant 0 : i32
    %c0_i32_0 = arith.constant 0 : i32
    %c0_i32_1 = arith.constant 0 : i32
    return %c0_i32, %c0_i32_0 : i32, i32
  }
  func.func @transform_14(%arg0: i32) -> (i32, i32) {
    %c0_i32 = arith.constant 0 : i32
    %c0_i32_0 = arith.constant 0 : i32
    %c0_i32_1 = arith.constant 0 : i32
    return %c0_i32, %c0_i32_0 : i32, i32
  }
  func.func @transform_15(%arg0: i32) -> (i32, i32) {
    %c0_i32 = arith.constant 0 : i32
    %c0_i32_0 = arith.constant 0 : i32
    %c0_i32_1 = arith.constant 0 : i32
    return %c0_i32, %c0_i32_0 : i32, i32
  }
}

</mosaic_0001>

<llo_original>
// kernel: high_att_forward.1
$region0: #{high_att_forward.1}
  #allocation0 [shape = 'u32[]', space=smem, size = 0x4, offset = 0x4, fixed_abs, tag = 'smem constant byte address 0x4 - core index']
  #allocation1 [shape = 'u32[144,128]{1,0:T(1,128)}', space=vmem, size = 0x12000, scoped, tag = 'internal scratch']
  #allocation2 [shape = 'f32[16,64]{1,0:T(8,128)}', space=vmem, size = 0x2000, scoped, tag = 'scratch operand']
  %s0 = inlined_call_operand.vmem [shape: s32[16,1], index: 0, kind: input, shape index: {}]
  %s1 = inlined_call_operand.vmem [shape: f32[2,8], index: 1, kind: input, shape index: {}]
  %s2 = inlined_call_operand.vmem [shape: f32[50,16], index: 2, kind: input, shape index: {}]
  %s3 = inlined_call_operand.vmem [shape: f32[16,128], index: 3, kind: input, shape index: {}]
  %s4 = inlined_call_operand.vmem [shape: f32[32,128], index: 4, kind: input, shape index: {}]
  %s5 = inlined_call_operand.vmem [shape: f32[1,128], index: 5, kind: input, shape index: {}]
  %s6 = inlined_call_operand.vmem [shape: f32[16,128], index: 6, kind: input, shape index: {}]
  %s7 = inlined_call_operand.vmem [shape: f32[32,128], index: 7, kind: input, shape index: {}]
  %s8 = inlined_call_operand.vmem [shape: f32[1,128], index: 8, kind: input, shape index: {}]
  %s9 = inlined_call_operand.vmem [shape: f32[64,16], index: 9, kind: input, shape index: {}]
  %s10 = inlined_call_operand.vmem [shape: f32[4,16], index: 10, kind: input, shape index: {}]
  %s11 = inlined_call_operand.vmem [shape: f32[256,32], index: 11, kind: input, shape index: {}]
  %s12 = inlined_call_operand.vmem [shape: f32[1,32], index: 12, kind: input, shape index: {}]
  %s13 = inlined_call_operand.vmem [shape: f32[32,3], index: 13, kind: input, shape index: {}]
  %s14 = inlined_call_operand.vmem [shape: f32[1,3], index: 14, kind: input, shape index: {}]
  %s15 = inlined_call_operand.vmem [shape: f32[16,128], index: 15, kind: output, shape index: {}]
  %s16 = sld [smem:[#allocation0]]
  $region70: #{high_att_forward.1} parent=0
    _
  %s18 = ssub.s32 1, %s16
  %s19 = scalar_select 0, %s18, %s16
  // Predicated region
  $region2: #{high_att_forward.1} parent=0 // pred_check
    _
  $region3: #{high_att_forward.1} parent=0 // pred_check_branch
    %21 = sbr.rel (0) target = $region5
  $region4: #{high_att_forward.1} parent=0 // pred_region
    _
  $region5: #{high_att_forward.1} parent=0 // pred_fallthru
    _
  // Predicated region
  $region6: #{high_att_forward.1} parent=0 // pred_check
    _
  $region7: #{high_att_forward.1} parent=0 // pred_check_branch
    %23 = sbr.rel (0) target = $region9
  $region8: #{high_att_forward.1} parent=0 // pred_region
    _
  $region9: #{high_att_forward.1} parent=0 // pred_fallthru
    _
  // Predicated region
  $region10: #{high_att_forward.1} parent=0 // pred_check
    _
  $region11: #{high_att_forward.1} parent=0 // pred_check_branch
    %25 = sbr.rel (0) target = $region13
  $region12: #{high_att_forward.1} parent=0 // pred_region
    _
  $region13: #{high_att_forward.1} parent=0 // pred_fallthru
    _
  // Predicated region
  $region14: #{high_att_forward.1} parent=0 // pred_check
    _
  $region15: #{high_att_forward.1} parent=0 // pred_check_branch
    %27 = sbr.rel (0) target = $region17
  $region16: #{high_att_forward.1} parent=0 // pred_region
    _
  $region17: #{high_att_forward.1} parent=0 // pred_fallthru
    _
  // Predicated region
  $region18: #{high_att_forward.1} parent=0 // pred_check
    _
  $region19: #{high_att_forward.1} parent=0 // pred_check_branch
    %29 = sbr.rel (0) target = $region21
  $region20: #{high_att_forward.1} parent=0 // pred_region
    _
  $region21: #{high_att_forward.1} parent=0 // pred_fallthru
    _
  // Predicated region
  $region22: #{high_att_forward.1} parent=0 // pred_check
    _
  $region23: #{high_att_forward.1} parent=0 // pred_check_branch
    %31 = sbr.rel (0) target = $region25
  $region24: #{high_att_forward.1} parent=0 // pred_region
    _
  $region25: #{high_att_forward.1} parent=0 // pred_fallthru
    _
  // Predicated region
  $region26: #{high_att_forward.1} parent=0 // pred_check
    _
  $region27: #{high_att_forward.1} parent=0 // pred_check_branch
    %33 = sbr.rel (0) target = $region29
  $region28: #{high_att_forward.1} parent=0 // pred_region
    _
  $region29: #{high_att_forward.1} parent=0 // pred_fallthru
    _
  // Predicated region
  $region30: #{high_att_forward.1} parent=0 // pred_check
    _
  $region31: #{high_att_forward.1} parent=0 // pred_check_branch
    %35 = sbr.rel (0) target = $region33
  $region32: #{high_att_forward.1} parent=0 // pred_region
    _
  $region33: #{high_att_forward.1} parent=0 // pred_fallthru
    _
  // Predicated region
  $region34: #{high_att_forward.1} parent=0 // pred_check
    _
  $region35: #{high_att_forward.1} parent=0 // pred_check_branch
    %37 = sbr.rel (0) target = $region37
  $region36: #{high_att_forward.1} parent=0 // pred_region
    _
  $region37: #{high_att_forward.1} parent=0 // pred_fallthru
    _
  // Predicated region
  $region38: #{high_att_forward.1} parent=0 // pred_check
    _
  $region39: #{high_att_forward.1} parent=0 // pred_check_branch
    %39 = sbr.rel (0) target = $region41
  $region40: #{high_att_forward.1} parent=0 // pred_region
    _
  $region41: #{high_att_forward.1} parent=0 // pred_fallthru
    _
  // Predicated region
  $region42: #{high_att_forward.1} parent=0 // pred_check
    _
  $region43: #{high_att_forward.1} parent=0 // pred_check_branch
    %41 = sbr.rel (0) target = $region45
  $region44: #{high_att_forward.1} parent=0 // pred_region
    _
  $region45: #{high_att_forward.1} parent=0 // pred_fallthru
    _
  // Predicated region
  $region46: #{high_att_forward.1} parent=0 // pred_check
    _
  $region47: #{high_att_forward.1} parent=0 // pred_check_branch
    %43 = sbr.rel (0) target = $region49
  $region48: #{high_att_forward.1} parent=0 // pred_region
    _
  $region49: #{high_att_forward.1} parent=0 // pred_fallthru
    _
  // Predicated region
  $region50: #{high_att_forward.1} parent=0 // pred_check
    _
  $region51: #{high_att_forward.1} parent=0 // pred_check_branch
    %45 = sbr.rel (0) target = $region53
  $region52: #{high_att_forward.1} parent=0 // pred_region
    _
  $region53: #{high_att_forward.1} parent=0 // pred_fallthru
    _
  // Predicated region
  $region54: #{high_att_forward.1} parent=0 // pred_check
    _
  $region55: #{high_att_forward.1} parent=0 // pred_check_branch
    %47 = sbr.rel (0) target = $region57
  $region56: #{high_att_forward.1} parent=0 // pred_region
    _
  $region57: #{high_att_forward.1} parent=0 // pred_fallthru
    _
  // Predicated region
  $region58: #{high_att_forward.1} parent=0 // pred_check
    _
  $region59: #{high_att_forward.1} parent=0 // pred_check_branch
    %49 = sbr.rel (0) target = $region61
  $region60: #{high_att_forward.1} parent=0 // pred_region
    _
  $region61: #{high_att_forward.1} parent=0 // pred_fallthru
    _
  %v50 = vld [vmem:[%s0] sm:$0xff]
  %v51 = vld [vmem:[%s0 + $0x8] sm:$0xff]
  %v52 = vlaneseq
  %v53 = vand.u32 %v52, 127
  %54 = vset.pattern.permute.xlu0 0
  %55 = vperm.xlu0 %54, %v50
  %v56 = vpop.permute.xlu0 %55
  %57 = vset.pattern.permute.xlu0 0
  %58 = vperm.xlu0 %57, %v51
  %v59 = vpop.permute.xlu0 %58
  %vm60 = vcmp.eq.s32.totalorder %v56, %v53
  %vm61 = vcmp.eq.s32.totalorder %v59, %v53
  %v62 = vsel %vm60, 1, 0
  %v63 = vsel %vm61, 1, 0
  %v64 = vcvt.s32.f32 %v62
  %v65 = vcvt.s32.f32 %v63
  %v66 = vld [vmem:[%s2] sm:$0xff]
  %v67 = vld [vmem:[%s2 + $0x8] sm:$0xff]
  %v68 = vld [vmem:[%s2 + $0x10] sm:$0xff]
  %v69 = vld [vmem:[%s2 + $0x18] sm:$0xff]
  %v70 = vld [vmem:[%s2 + $0x20] sm:$0xff]
  %v71 = vld [vmem:[%s2 + $0x28] sm:$0xff]
  %v72 = vld [vmem:[%s2 + $0x30] sm:$0x3]
  %vm73 = vcmask 408576
  %v75 = vsel %vm73, %v64, 0
  %v78 = vsel %vm73, %v65, 0
  %vm80 = vcmask 1041408
  %v82 = vsel %vm80, %v72, 0
  %84 = vmatprep.subr.mxu0 0.0
  %85 = vmatpush1.msra.mxu0 %v66
  %86 = vmatprep.subr.mxu0 0.0
  %87 = vmatpush1.msra.mxu0 %v67
  %88 = vmatprep.subr.mxu0 0.0
  %89 = vmatpush1.msra.mxu0 %v68
  %90 = vmatprep.subr.mxu0 0.0
  %91 = vmatpush1.msra.mxu0 %v69
  %92 = vmatprep.subr.mxu0 0.0
  %93 = vmatpush1.msra.mxu0 %v70
  %94 = vmatprep.subr.mxu0 0.0
  %95 = vmatpush1.msra.mxu0 %v71
  %96 = vmatprep.subr.mxu0 0.0
  %97 = vmatpush1.msra.mxu0 %v82
  %98 = vmatprep.subr.mxu0 0.0
  %99 = vmatpush1.msra.mxu0 0.0
  %100 = vmatprep.subr.mxu0 0.0
  %101 = vmatpush1.msra.mxu0 0.0
  %102 = vmatprep.subr.mxu0 0.0
  %103 = vmatpush1.msra.mxu0 0.0
  %104 = vmatprep.subr.mxu0 0.0
  %105 = vmatpush1.msra.mxu0 0.0
  %106 = vmatprep.subr.mxu0 0.0
  %107 = vmatpush1.msra.mxu0 0.0
  %108 = vmatprep.subr.mxu0 0.0
  %109 = vmatpush1.msra.mxu0 0.0
  %110 = vmatprep.subr.mxu0 0.0
  %111 = vmatpush1.msra.mxu0 0.0
  %112 = vmatprep.subr.mxu0 0.0
  %113 = vmatpush1.msra.mxu0 0.0
  %114 = vmatprep.subr.mxu0 0.0
  %115 = vmatpush1.msra.mxu0 0.0
  %116 = vmatprep.subr.mxu0 0.0
  %117 = vmatpush1.msra.mxu0 0.0
  %118 = vmatprep.subr.mxu0 0.0
  %119 = vmatpush1.msra.mxu0 0.0
  %120 = vmatprep.subr.mxu0 0.0
  %121 = vmatpush1.msra.mxu0 0.0
  %122 = vmatprep.subr.mxu0 0.0
  %123 = vmatpush1.msra.mxu0 0.0
  %124 = vmatprep.subr.mxu0 0.0
  %125 = vmatpush1.msra.mxu0 0.0
  %126 = vmatprep.subr.mxu0 0.0
  %127 = vmatpush1.msra.mxu0 0.0
  %128 = vmatprep.subr.mxu0 0.0
  %129 = vmatpush1.msra.mxu0 0.0
  %130 = vmatprep.subr.mxu0 0.0
  %131 = vmatpush1.msra.mxu0 0.0
  %132 = vmatprep.subr.mxu0 0.0
  %133 = vmatpush1.msra.mxu0 0.0
  %134 = vmatprep.subr.mxu0 0.0
  %135 = vmatpush1.msra.mxu0 0.0
  %136 = vmatprep.subr.mxu0 0.0
  %137 = vmatpush1.msra.mxu0 0.0
  %138 = vmatprep.subr.mxu0 0.0
  %139 = vmatpush1.msra.mxu0 0.0
  %140 = vmatprep.subr.mxu0 0.0
  %141 = vmatpush1.msra.mxu0 0.0
  %142 = vmatprep.subr.mxu0 0.0
  %143 = vmatpush1.msra.mxu0 0.0
  %144 = vmatprep.subr.mxu0 0.0
  %145 = vmatpush1.msra.mxu0 0.0
  %146 = vmatprep.subr.mxu0 0.0
  %147 = vmatpush1.msra.mxu0 0.0
  %148 = vmatprep.mubr.f32.mxu0 0.0
  %149 = vmatmul.mubr.f32.gmra.mrb[0].mxu0 %v75
  %v150 = vpop.f32.mrb[0].mxu0
  %v151 = vadd.f32 0.0, %v150
  %v152 = vpop.f32.mrb[0].mxu0
  %153 = vmatprep.mubr.f32.mxu0 0.0
  %154 = vmatmul.mubr.f32.gmra.mrb[0].mxu0 %v78
  %v155 = vpop.f32.mrb[0].mxu0
  %v156 = vadd.f32 0.0, %v155
  %v157 = vpop.f32.mrb[0].mxu0
  %158 = vdwg.mxu0
  %v159 = vld [vmem:[%s3] sm:$0xff]
  %v160 = vld [vmem:[%s3 + $0x8] sm:$0xff]
  %v161 = vld [vmem:[%s5] sm:$0x1]
  %v163 = vlaneseq
  %v164 = vshrl.u32 %v163, 7
  %v165 = vsub.s32 0, %v164
  %v166 = vrot.slane %v161, %v165
  %vm168 = vcmask 130048
  %v170 = vsel %vm168, %v151, 0
  %v173 = vsel %vm168, %v156, 0
  %175 = vmatprep.subr.mxu0 0.0
  %176 = vmatpush1.msra.mxu0 %v159
  %177 = vmatprep.subr.mxu0 0.0
  %178 = vmatpush1.msra.mxu0 %v160
  %179 = vmatprep.subr.mxu0 0.0
  %180 = vmatpush1.msra.mxu0 0.0
  %181 = vmatprep.subr.mxu0 0.0
  %182 = vmatpush1.msra.mxu0 0.0
  %183 = vmatprep.subr.mxu0 0.0
  %184 = vmatpush1.msra.mxu0 0.0
  %185 = vmatprep.subr.mxu0 0.0
  %186 = vmatpush1.msra.mxu0 0.0
  %187 = vmatprep.subr.mxu0 0.0
  %188 = vmatpush1.msra.mxu0 0.0
  %189 = vmatprep.subr.mxu0 0.0
  %190 = vmatpush1.msra.mxu0 0.0
  %191 = vmatprep.subr.mxu0 0.0
  %192 = vmatpush1.msra.mxu0 0.0
  %193 = vmatprep.subr.mxu0 0.0
  %194 = vmatpush1.msra.mxu0 0.0
  %195 = vmatprep.subr.mxu0 0.0
  %196 = vmatpush1.msra.mxu0 0.0
  %197 = vmatprep.subr.mxu0 0.0
  %198 = vmatpush1.msra.mxu0 0.0
  %199 = vmatprep.subr.mxu0 0.0
  %200 = vmatpush1.msra.mxu0 0.0
  %201 = vmatprep.subr.mxu0 0.0
  %202 = vmatpush1.msra.mxu0 0.0
  %203 = vmatprep.subr.mxu0 0.0
  %204 = vmatpush1.msra.mxu0 0.0
  %205 = vmatprep.subr.mxu0 0.0
  %206 = vmatpush1.msra.mxu0 0.0
  %207 = vmatprep.subr.mxu0 0.0
  %208 = vmatpush1.msra.mxu0 0.0
  %209 = vmatprep.subr.mxu0 0.0
  %210 = vmatpush1.msra.mxu0 0.0
  %211 = vmatprep.subr.mxu0 0.0
  %212 = vmatpush1.msra.mxu0 0.0
  %213 = vmatprep.subr.mxu0 0.0
  %214 = vmatpush1.msra.mxu0 0.0
  %215 = vmatprep.subr.mxu0 0.0
  %216 = vmatpush1.msra.mxu0 0.0
  %217 = vmatprep.subr.mxu0 0.0
  %218 = vmatpush1.msra.mxu0 0.0
  %219 = vmatprep.subr.mxu0 0.0
  %220 = vmatpush1.msra.mxu0 0.0
  %221 = vmatprep.subr.mxu0 0.0
  %222 = vmatpush1.msra.mxu0 0.0
  %223 = vmatprep.subr.mxu0 0.0
  %224 = vmatpush1.msra.mxu0 0.0
  %225 = vmatprep.subr.mxu0 0.0
  %226 = vmatpush1.msra.mxu0 0.0
  %227 = vmatprep.subr.mxu0 0.0
  %228 = vmatpush1.msra.mxu0 0.0
  %229 = vmatprep.subr.mxu0 0.0
  %230 = vmatpush1.msra.mxu0 0.0
  %231 = vmatprep.subr.mxu0 0.0
  %232 = vmatpush1.msra.mxu0 0.0
  %233 = vmatprep.subr.mxu0 0.0
  %234 = vmatpush1.msra.mxu0 0.0
  %235 = vmatprep.subr.mxu0 0.0
  %236 = vmatpush1.msra.mxu0 0.0
  %237 = vmatprep.subr.mxu0 0.0
  %238 = vmatpush1.msra.mxu0 0.0
  %239 = vmatprep.mubr.f32.mxu0 0.0
  %240 = vmatmul.mubr.f32.gmra.mrb[0].mxu0 %v170
  %v241 = vpop.f32.mrb[0].mxu0
  %v242 = vadd.f32 %v166, %v241
  %v243 = vpop.f32.mrb[0].mxu0
  %244 = vmatprep.mubr.f32.mxu0 0.0
  %245 = vmatmul.mubr.f32.gmra.mrb[0].mxu0 %v173
  %v246 = vpop.f32.mrb[0].mxu0
  %v247 = vadd.f32 %v166, %v246
  %v248 = vpop.f32.mrb[0].mxu0
  %249 = vdwg.mxu0
  %v250 = vld [vmem:[%s6] sm:$0xff]
  %v251 = vld [vmem:[%s6 + $0x8] sm:$0xff]
  %v252 = vld [vmem:[%s8] sm:$0x1]
  %v254 = vlaneseq
  %v255 = vshrl.u32 %v254, 7
  %v256 = vsub.s32 0, %v255
  %v257 = vrot.slane %v252, %v256
  %259 = vmatprep.subr.mxu0 0.0
  %260 = vmatpush1.msra.mxu0 %v250
  %261 = vmatprep.subr.mxu0 0.0
  %262 = vmatpush1.msra.mxu0 %v251
  %263 = vmatprep.subr.mxu0 0.0
  %264 = vmatpush1.msra.mxu0 0.0
  %265 = vmatprep.subr.mxu0 0.0
  %266 = vmatpush1.msra.mxu0 0.0
  %267 = vmatprep.subr.mxu0 0.0
  %268 = vmatpush1.msra.mxu0 0.0
  %269 = vmatprep.subr.mxu0 0.0
  %270 = vmatpush1.msra.mxu0 0.0
  %271 = vmatprep.subr.mxu0 0.0
  %272 = vmatpush1.msra.mxu0 0.0
  %273 = vmatprep.subr.mxu0 0.0
  %274 = vmatpush1.msra.mxu0 0.0
  %275 = vmatprep.subr.mxu0 0.0
  %276 = vmatpush1.msra.mxu0 0.0
  %277 = vmatprep.subr.mxu0 0.0
  %278 = vmatpush1.msra.mxu0 0.0
  %279 = vmatprep.subr.mxu0 0.0
  %280 = vmatpush1.msra.mxu0 0.0
  %281 = vmatprep.subr.mxu0 0.0
  %282 = vmatpush1.msra.mxu0 0.0
  %283 = vmatprep.subr.mxu0 0.0
  %284 = vmatpush1.msra.mxu0 0.0
  %285 = vmatprep.subr.mxu0 0.0
  %286 = vmatpush1.msra.mxu0 0.0
  %287 = vmatprep.subr.mxu0 0.0
  %288 = vmatpush1.msra.mxu0 0.0
  %289 = vmatprep.subr.mxu0 0.0
  %290 = vmatpush1.msra.mxu0 0.0
  %291 = vmatprep.subr.mxu0 0.0
  %292 = vmatpush1.msra.mxu0 0.0
  %293 = vmatprep.subr.mxu0 0.0
  %294 = vmatpush1.msra.mxu0 0.0
  %295 = vmatprep.subr.mxu0 0.0
  %296 = vmatpush1.msra.mxu0 0.0
  %297 = vmatprep.subr.mxu0 0.0
  %298 = vmatpush1.msra.mxu0 0.0
  %299 = vmatprep.subr.mxu0 0.0
  %300 = vmatpush1.msra.mxu0 0.0
  %301 = vmatprep.subr.mxu0 0.0
  %302 = vmatpush1.msra.mxu0 0.0
  %303 = vmatprep.subr.mxu0 0.0
  %304 = vmatpush1.msra.mxu0 0.0
  %305 = vmatprep.subr.mxu0 0.0
  %306 = vmatpush1.msra.mxu0 0.0
  %307 = vmatprep.subr.mxu0 0.0
  %308 = vmatpush1.msra.mxu0 0.0
  %309 = vmatprep.subr.mxu0 0.0
  %310 = vmatpush1.msra.mxu0 0.0
  %311 = vmatprep.subr.mxu0 0.0
  %312 = vmatpush1.msra.mxu0 0.0
  %313 = vmatprep.subr.mxu0 0.0
  %314 = vmatpush1.msra.mxu0 0.0
  %315 = vmatprep.subr.mxu0 0.0
  %316 = vmatpush1.msra.mxu0 0.0
  %317 = vmatprep.subr.mxu0 0.0
  %318 = vmatpush1.msra.mxu0 0.0
  %319 = vmatprep.subr.mxu0 0.0
  %320 = vmatpush1.msra.mxu0 0.0
  %321 = vmatprep.subr.mxu0 0.0
  %322 = vmatpush1.msra.mxu0 0.0
  %323 = vmatprep.mubr.f32.mxu0 0.0
  %324 = vmatmul.mubr.f32.gmra.mrb[0].mxu0 %v170
  %v325 = vpop.f32.mrb[0].mxu0
  %v326 = vadd.f32 %v257, %v325
  %v327 = vpop.f32.mrb[0].mxu0
  %328 = vmatprep.mubr.f32.mxu0 0.0
  %329 = vmatmul.mubr.f32.gmra.mrb[0].mxu0 %v173
  %v330 = vpop.f32.mrb[0].mxu0
  %v331 = vadd.f32 %v257, %v330
  %v332 = vpop.f32.mrb[0].mxu0
  %333 = vdwg.mxu0
  %v334 = vld [vmem:[%s4] sm:$0xff]
  %v335 = vld [vmem:[%s4 + $0x8] sm:$0xff]
  %v336 = vld [vmem:[%s4 + $0x10] sm:$0xff]
  %v337 = vld [vmem:[%s4 + $0x18] sm:$0xff]
  %v338 = vld [vmem:[%s7] sm:$0xff]
  %v339 = vld [vmem:[%s7 + $0x8] sm:$0xff]
  %v340 = vld [vmem:[%s7 + $0x10] sm:$0xff]
  %v341 = vld [vmem:[%s7 + $0x18] sm:$0xff]
  %vm342 = vcmask 261120
  %v344 = vsel %vm342, 0.0, 0
  %346 = vmatprep.subr.mxu0 0.0
  %347 = vmatpush1.msra.mxu0 %v334
  %348 = vmatprep.subr.mxu0 0.0
  %349 = vmatpush1.msra.mxu0 %v335
  %350 = vmatprep.subr.mxu0 0.0
  %351 = vmatpush1.msra.mxu0 %v336
  %352 = vmatprep.subr.mxu0 0.0
  %353 = vmatpush1.msra.mxu0 %v337
  %354 = vmatprep.subr.mxu0 0.0
  %355 = vmatpush1.msra.mxu0 0.0
  %356 = vmatprep.subr.mxu0 0.0
  %357 = vmatpush1.msra.mxu0 0.0
  %358 = vmatprep.subr.mxu0 0.0
  %359 = vmatpush1.msra.mxu0 0.0
  %360 = vmatprep.subr.mxu0 0.0
  %361 = vmatpush1.msra.mxu0 0.0
  %362 = vmatprep.subr.mxu0 0.0
  %363 = vmatpush1.msra.mxu0 0.0
  %364 = vmatprep.subr.mxu0 0.0
  %365 = vmatpush1.msra.mxu0 0.0
  %366 = vmatprep.subr.mxu0 0.0
  %367 = vmatpush1.msra.mxu0 0.0
  %368 = vmatprep.subr.mxu0 0.0
  %369 = vmatpush1.msra.mxu0 0.0
  %370 = vmatprep.subr.mxu0 0.0
  %371 = vmatpush1.msra.mxu0 0.0
  %372 = vmatprep.subr.mxu0 0.0
  %373 = vmatpush1.msra.mxu0 0.0
  %374 = vmatprep.subr.mxu0 0.0
  %375 = vmatpush1.msra.mxu0 0.0
  %376 = vmatprep.subr.mxu0 0.0
  %377 = vmatpush1.msra.mxu0 0.0
  %378 = vmatprep.subr.mxu0 0.0
  %379 = vmatpush1.msra.mxu0 0.0
  %380 = vmatprep.subr.mxu0 0.0
  %381 = vmatpush1.msra.mxu0 0.0
  %382 = vmatprep.subr.mxu0 0.0
  %383 = vmatpush1.msra.mxu0 0.0
  %384 = vmatprep.subr.mxu0 0.0
  %385 = vmatpush1.msra.mxu0 0.0
  %386 = vmatprep.subr.mxu0 0.0
  %387 = vmatpush1.msra.mxu0 0.0
  %388 = vmatprep.subr.mxu0 0.0
  %389 = vmatpush1.msra.mxu0 0.0
  %390 = vmatprep.subr.mxu0 0.0
  %391 = vmatpush1.msra.mxu0 0.0
  %392 = vmatprep.subr.mxu0 0.0
  %393 = vmatpush1.msra.mxu0 0.0
  %394 = vmatprep.subr.mxu0 0.0
  %395 = vmatpush1.msra.mxu0 0.0
  %396 = vmatprep.subr.mxu0 0.0
  %397 = vmatpush1.msra.mxu0 0.0
  %398 = vmatprep.subr.mxu0 0.0
  %399 = vmatpush1.msra.mxu0 0.0
  %400 = vmatprep.subr.mxu0 0.0
  %401 = vmatpush1.msra.mxu0 0.0
  %402 = vmatprep.subr.mxu0 0.0
  %403 = vmatpush1.msra.mxu0 0.0
  %404 = vmatprep.subr.mxu0 0.0
  %405 = vmatpush1.msra.mxu0 0.0
  %406 = vmatprep.subr.mxu0 0.0
  %407 = vmatpush1.msra.mxu0 0.0
  %408 = vmatprep.subr.mxu0 0.0
  %409 = vmatpush1.msra.mxu0 0.0
  %410 = vmatprep.mubr.f32.mxu0 0.0
  %411 = vmatmul.mubr.f32.gmra.mrb[0].mxu0 %v344
  %v412 = vpop.f32.mrb[0].mxu0
  %v413 = vadd.f32 0.0, %v412
  %v414 = vpop.f32.mrb[0].mxu0
  %415 = vdwg.mxu0
  %v416 = vadd.f32 %v242, %v413
  %v417 = vxor.u32 %v416, 2147483648
  %v418 = vmul.f32 %v417, 1.442695
  %v419 = vpow.pop %v418
  %v420 = vadd.f32 %v419, 1.0
  %v421 = vrcp.pop %v420
  %v422 = vmul.f32 1.0, %v421
  %v423 = vtanh.pop %v416
  %v424 = vmul.f32 %v422, 0.0
  %426 = vrot.lane.b32.xlu0 %v423, 64
  %v427 = vpop.permute.xlu0 %426
  %v429 = vmul.f32 %v422, %v427
  %431 = vrot.lane.b32.xlu0 %v429, 32
  %v432 = vpop.permute.xlu0 %431
  %v434 = vadd.f32 %v424, %v432
  %v435 = vtanh.pop %v434
  %437 = vrot.lane.b32.xlu0 %v435, 64
  %v438 = vpop.permute.xlu0 %437
  %v440 = vmul.f32 %v422, %v438
  %441 = vmatprep.subr.mxu0 0.0
  %442 = vmatpush1.msra.mxu0 %v338
  %443 = vmatprep.subr.mxu0 0.0
  %444 = vmatpush1.msra.mxu0 %v339
  %445 = vmatprep.subr.mxu0 0.0
  %446 = vmatpush1.msra.mxu0 %v340
  %447 = vmatprep.subr.mxu0 0.0
  %448 = vmatpush1.msra.mxu0 %v341
  %449 = vmatprep.subr.mxu0 0.0
  %450 = vmatpush1.msra.mxu0 0.0
  %451 = vmatprep.subr.mxu0 0.0
  %452 = vmatpush1.msra.mxu0 0.0
  %453 = vmatprep.subr.mxu0 0.0
  %454 = vmatpush1.msra.mxu0 0.0
  %455 = vmatprep.subr.mxu0 0.0
  %456 = vmatpush1.msra.mxu0 0.0
  %457 = vmatprep.subr.mxu0 0.0
  %458 = vmatpush1.msra.mxu0 0.0
  %459 = vmatprep.subr.mxu0 0.0
  %460 = vmatpush1.msra.mxu0 0.0
  %461 = vmatprep.subr.mxu0 0.0
  %462 = vmatpush1.msra.mxu0 0.0
  %463 = vmatprep.subr.mxu0 0.0
  %464 = vmatpush1.msra.mxu0 0.0
  %465 = vmatprep.subr.mxu0 0.0
  %466 = vmatpush1.msra.mxu0 0.0
  %467 = vmatprep.subr.mxu0 0.0
  %468 = vmatpush1.msra.mxu0 0.0
  %469 = vmatprep.subr.mxu0 0.0
  %470 = vmatpush1.msra.mxu0 0.0
  %471 = vmatprep.subr.mxu0 0.0
  %472 = vmatpush1.msra.mxu0 0.0
  %473 = vmatprep.subr.mxu0 0.0
  %474 = vmatpush1.msra.mxu0 0.0
  %475 = vmatprep.subr.mxu0 0.0
  %476 = vmatpush1.msra.mxu0 0.0
  %477 = vmatprep.subr.mxu0 0.0
  %478 = vmatpush1.msra.mxu0 0.0
  %479 = vmatprep.subr.mxu0 0.0
  %480 = vmatpush1.msra.mxu0 0.0
  %481 = vmatprep.subr.mxu0 0.0
  %482 = vmatpush1.msra.mxu0 0.0
  %483 = vmatprep.subr.mxu0 0.0
  %484 = vmatpush1.msra.mxu0 0.0
  %485 = vmatprep.subr.mxu0 0.0
  %486 = vmatpush1.msra.mxu0 0.0
  %487 = vmatprep.subr.mxu0 0.0
  %488 = vmatpush1.msra.mxu0 0.0
  %489 = vmatprep.subr.mxu0 0.0
  %490 = vmatpush1.msra.mxu0 0.0
  %491 = vmatprep.subr.mxu0 0.0
  %492 = vmatpush1.msra.mxu0 0.0
  %493 = vmatprep.subr.mxu0 0.0
  %494 = vmatpush1.msra.mxu0 0.0
  %495 = vmatprep.subr.mxu0 0.0
  %496 = vmatpush1.msra.mxu0 0.0
  %497 = vmatprep.subr.mxu0 0.0
  %498 = vmatpush1.msra.mxu0 0.0
  %499 = vmatprep.subr.mxu0 0.0
  %500 = vmatpush1.msra.mxu0 0.0
  %501 = vmatprep.subr.mxu0 0.0
  %502 = vmatpush1.msra.mxu0 0.0
  %503 = vmatprep.subr.mxu0 0.0
  %504 = vmatpush1.msra.mxu0 0.0
  %505 = vmatprep.mubr.f32.mxu0 0.0
  %506 = vmatmul.mubr.f32.gmra.mrb[0].mxu0 %v344
  %v507 = vpop.f32.mrb[0].mxu0
  %v508 = vadd.f32 0.0, %v507
  %v509 = vpop.f32.mrb[0].mxu0
  %510 = vdwg.mxu0
  %v512 = vrot.slane %v508, 2
  %v514 = vadd.f32 %v331, %v512
  %v515 = vxor.u32 %v514, 2147483648
  %v516 = vmul.f32 %v515, 1.442695
  %v517 = vpow.pop %v516
  %v518 = vadd.f32 %v517, 1.0
  %v519 = vrcp.pop %v518
  %v520 = vmul.f32 1.0, %v519
  %v521 = vtanh.pop %v514
  %v522 = vmul.f32 %v520, 0.0
  %524 = vrot.lane.b32.xlu0 %v521, 64
  %v525 = vpop.permute.xlu0 %524
  %v527 = vmul.f32 %v520, %v525
  %529 = vrot.lane.b32.xlu0 %v527, 32
  %v530 = vpop.permute.xlu0 %529
  %v532 = vadd.f32 %v522, %v530
  %v533 = vtanh.pop %v532
  %535 = vrot.lane.b32.xlu0 %v533, 64
  %v536 = vpop.permute.xlu0 %535
  %v538 = vmul.f32 %v520, %v536
  %540 = vrot.lane.b32.xlu0 %v440, 32
  %v541 = vpop.permute.xlu0 %540
  %vm543 = vcmask 253952
  %544 = vst.msk [vmem:[#allocation2] sm:$0x1] %vm543, %v541
  %546 = vrot.lane.b32.xlu0 %v538, 64
  %v547 = vpop.permute.xlu0 %546
  %vm549 = vcmask 522502
  %550 = vst.msk [vmem:[#allocation2 + $0x1] sm:$0x40] %vm549, %v547
  %vm551 = vcmask 254977
  %552 = vst.msk [vmem:[#allocation2 + $0x7] sm:$0x2] %vm551, %v541
  %vm553 = vcmask 523527
  %554 = vst.msk [vmem:[#allocation2 + $0x8] sm:$0x80] %vm553, %v547
  %v555 = vsel %vm342, %v541, 0
  %557 = vmatprep.subr.mxu0 0.0
  %558 = vmatpush1.msra.mxu0 %v334
  %559 = vmatprep.subr.mxu0 0.0
  %560 = vmatpush1.msra.mxu0 %v335
  %561 = vmatprep.subr.mxu0 0.0
  %562 = vmatpush1.msra.mxu0 %v336
  %563 = vmatprep.subr.mxu0 0.0
  %564 = vmatpush1.msra.mxu0 %v337
  %565 = vmatprep.subr.mxu0 0.0
  %566 = vmatpush1.msra.mxu0 0.0
  %567 = vmatprep.subr.mxu0 0.0
  %568 = vmatpush1.msra.mxu0 0.0
  %569 = vmatprep.subr.mxu0 0.0
  %570 = vmatpush1.msra.mxu0 0.0
  %571 = vmatprep.subr.mxu0 0.0
  %572 = vmatpush1.msra.mxu0 0.0
  %573 = vmatprep.subr.mxu0 0.0
  %574 = vmatpush1.msra.mxu0 0.0
  %575 = vmatprep.subr.mxu0 0.0
  %576 = vmatpush1.msra.mxu0 0.0
  %577 = vmatprep.subr.mxu0 0.0
  %578 = vmatpush1.msra.mxu0 0.0
  %579 = vmatprep.subr.mxu0 0.0
  %580 = vmatpush1.msra.mxu0 0.0
  %581 = vmatprep.subr.mxu0 0.0
  %582 = vmatpush1.msra.mxu0 0.0
  %583 = vmatprep.subr.mxu0 0.0
  %584 = vmatpush1.msra.mxu0 0.0
  %585 = vmatprep.subr.mxu0 0.0
  %586 = vmatpush1.msra.mxu0 0.0
  %587 = vmatprep.subr.mxu0 0.0
  %588 = vmatpush1.msra.mxu0 0.0
  %589 = vmatprep.subr.mxu0 0.0
  %590 = vmatpush1.msra.mxu0 0.0
  %591 = vmatprep.subr.mxu0 0.0
  %592 = vmatpush1.msra.mxu0 0.0
  %593 = vmatprep.subr.mxu0 0.0
  %594 = vmatpush1.msra.mxu0 0.0
  %595 = vmatprep.subr.mxu0 0.0
  %596 = vmatpush1.msra.mxu0 0.0
  %597 = vmatprep.subr.mxu0 0.0
  %598 = vmatpush1.msra.mxu0 0.0
  %599 = vmatprep.subr.mxu0 0.0
  %600 = vmatpush1.msra.mxu0 0.0
  %601 = vmatprep.subr.mxu0 0.0
  %602 = vmatpush1.msra.mxu0 0.0
  %603 = vmatprep.subr.mxu0 0.0
  %604 = vmatpush1.msra.mxu0 0.0
  %605 = vmatprep.subr.mxu0 0.0
  %606 = vmatpush1.msra.mxu0 0.0
  %607 = vmatprep.subr.mxu0 0.0
  %608 = vmatpush1.msra.mxu0 0.0
  %609 = vmatprep.subr.mxu0 0.0
  %610 = vmatpush1.msra.mxu0 0.0
  %611 = vmatprep.subr.mxu0 0.0
  %612 = vmatpush1.msra.mxu0 0.0
  %613 = vmatprep.subr.mxu0 0.0
  %614 = vmatpush1.msra.mxu0 0.0
  %615 = vmatprep.subr.mxu0 0.0
  %616 = vmatpush1.msra.mxu0 0.0
  %617 = vmatprep.subr.mxu0 0.0
  %618 = vmatpush1.msra.mxu0 0.0
  %619 = vmatprep.subr.mxu0 0.0
  %620 = vmatpush1.msra.mxu0 0.0
  %621 = vmatprep.mubr.f32.mxu0 0.0
  %622 = vmatmul.mubr.f32.gmra.mrb[0].mxu0 %v555
  %v623 = vpop.f32.mrb[0].mxu0
  %v624 = vadd.f32 0.0, %v623
  %v625 = vpop.f32.mrb[0].mxu0
  %626 = vdwg.mxu0
  %v628 = vrot.slane %v624, 6
  %v630 = vadd.f32 %v242, %v628
  %v631 = vxor.u32 %v630, 2147483648
  %v632 = vmul.f32 %v631, 1.442695
  %v633 = vpow.pop %v632
  %v634 = vadd.f32 %v633, 1.0
  %v635 = vrcp.pop %v634
  %v636 = vmul.f32 1.0, %v635
  %v637 = vtanh.pop %v630
  %v639 = vrot.slane %v434, 6
  %v641 = vmul.f32 %v636, %v639
  %643 = vrot.lane.b32.xlu0 %v637, 64
  %v644 = vpop.permute.xlu0 %643
  %v646 = vmul.f32 %v636, %v644
  %648 = vrot.lane.b32.xlu0 %v646, 32
  %v649 = vpop.permute.xlu0 %648
  %v651 = vadd.f32 %v641, %v649
  %v652 = vtanh.pop %v651
  %654 = vrot.lane.b32.xlu0 %v652, 64
  %v655 = vpop.permute.xlu0 %654
  %v657 = vmul.f32 %v636, %v655
  %v658 = vrot.slane %v538, 6
  %659 = vrot.lane.b32.xlu0 %v658, 32
  %v660 = vpop.permute.xlu0 %659
  %v661 = vsel %vm342, %v660, 0
  %663 = vmatprep.subr.mxu0 0.0
  %664 = vmatpush1.msra.mxu0 %v338
  %665 = vmatprep.subr.mxu0 0.0
  %666 = vmatpush1.msra.mxu0 %v339
  %667 = vmatprep.subr.mxu0 0.0
  %668 = vmatpush1.msra.mxu0 %v340
  %669 = vmatprep.subr.mxu0 0.0
  %670 = vmatpush1.msra.mxu0 %v341
  %671 = vmatprep.subr.mxu0 0.0
  %672 = vmatpush1.msra.mxu0 0.0
  %673 = vmatprep.subr.mxu0 0.0
  %674 = vmatpush1.msra.mxu0 0.0
  %675 = vmatprep.subr.mxu0 0.0
  %676 = vmatpush1.msra.mxu0 0.0
  %677 = vmatprep.subr.mxu0 0.0
  %678 = vmatpush1.msra.mxu0 0.0
  %679 = vmatprep.subr.mxu0 0.0
  %680 = vmatpush1.msra.mxu0 0.0
  %681 = vmatprep.subr.mxu0 0.0
  %682 = vmatpush1.msra.mxu0 0.0
  %683 = vmatprep.subr.mxu0 0.0
  %684 = vmatpush1.msra.mxu0 0.0
  %685 = vmatprep.subr.mxu0 0.0
  %686 = vmatpush1.msra.mxu0 0.0
  %687 = vmatprep.subr.mxu0 0.0
  %688 = vmatpush1.msra.mxu0 0.0
  %689 = vmatprep.subr.mxu0 0.0
  %690 = vmatpush1.msra.mxu0 0.0
  %691 = vmatprep.subr.mxu0 0.0
  %692 = vmatpush1.msra.mxu0 0.0
  %693 = vmatprep.subr.mxu0 0.0
  %694 = vmatpush1.msra.mxu0 0.0
  %695 = vmatprep.subr.mxu0 0.0
  %696 = vmatpush1.msra.mxu0 0.0
  %697 = vmatprep.subr.mxu0 0.0
  %698 = vmatpush1.msra.mxu0 0.0
  %699 = vmatprep.subr.mxu0 0.0
  %700 = vmatpush1.msra.mxu0 0.0
  %701 = vmatprep.subr.mxu0 0.0
  %702 = vmatpush1.msra.mxu0 0.0
  %703 = vmatprep.subr.mxu0 0.0
  %704 = vmatpush1.msra.mxu0 0.0
  %705 = vmatprep.subr.mxu0 0.0
  %706 = vmatpush1.msra.mxu0 0.0
  %707 = vmatprep.subr.mxu0 0.0
  %708 = vmatpush1.msra.mxu0 0.0
  %709 = vmatprep.subr.mxu0 0.0
  %710 = vmatpush1.msra.mxu0 0.0
  %711 = vmatprep.subr.mxu0 0.0
  %712 = vmatpush1.msra.mxu0 0.0
  %713 = vmatprep.subr.mxu0 0.0
  %714 = vmatpush1.msra.mxu0 0.0
  %715 = vmatprep.subr.mxu0 0.0
  %716 = vmatpush1.msra.mxu0 0.0
  %717 = vmatprep.subr.mxu0 0.0
  %718 = vmatpush1.msra.mxu0 0.0
  %719 = vmatprep.subr.mxu0 0.0
  %720 = vmatpush1.msra.mxu0 0.0
  %721 = vmatprep.subr.mxu0 0.0
  %722 = vmatpush1.msra.mxu0 0.0
  %723 = vmatprep.subr.mxu0 0.0
  %724 = vmatpush1.msra.mxu0 0.0
  %725 = vmatprep.subr.mxu0 0.0
  %726 = vmatpush1.msra.mxu0 0.0
  %727 = vmatprep.mubr.f32.mxu0 0.0
  %728 = vmatmul.mubr.f32.gmra.mrb[0].mxu0 %v661
  %v729 = vpop.f32.mrb[0].mxu0
  %v730 = vadd.f32 0.0, %v729
  %v731 = vpop.f32.mrb[0].mxu0
  %732 = vdwg.mxu0
  %v734 = vrot.slane %v730, 4
  %v736 = vadd.f32 %v331, %v734
  %v737 = vxor.u32 %v736, 2147483648
  %v738 = vmul.f32 %v737, 1.442695
  %v739 = vpow.pop %v738
  %v740 = vadd.f32 %v739, 1.0
  %v741 = vrcp.pop %v740
  %v742 = vmul.f32 1.0, %v741
  %v743 = vtanh.pop %v736
  %v745 = vrot.slane %v532, 2
  %v747 = vmul.f32 %v742, %v745
  %749 = vrot.lane.b32.xlu0 %v743, 64
  %v750 = vpop.permute.xlu0 %749
  %v752 = vmul.f32 %v742, %v750
  %754 = vrot.lane.b32.xlu0 %v752, 32
  %v755 = vpop.permute.xlu0 %754
  %v757 = vadd.f32 %v747, %v755
  %v758 = vtanh.pop %v757
  %760 = vrot.lane.b32.xlu0 %v758, 64
  %v761 = vpop.permute.xlu0 %760
  %v763 = vmul.f32 %v742, %v761
  %765 = vrot.lane.b32.xlu0 %v657, 32
  %v766 = vpop.permute.xlu0 %765
  %vm768 = vcmask 256002
  %769 = vst.msk [vmem:[#allocation2 - $0x1] sm:$0x4] %vm768, %v766
  %771 = vrot.lane.b32.xlu0 %v763, 64
  %v772 = vpop.permute.xlu0 %771
  %vm774 = vcmask 520452
  %775 = vst.msk [vmem:[#allocation2 + $0x2] sm:$0x10] %vm774, %v772
  %vm776 = vcmask 257027
  %777 = vst.msk [vmem:[#allocation2 + $0x6] sm:$0x8] %vm776, %v766
  %vm778 = vcmask 521477
  %779 = vst.msk [vmem:[#allocation2 + $0x9] sm:$0x20] %vm778, %v772
  %v780 = vrot.slane %v657, 2
  %781 = vrot.lane.b32.xlu0 %v780, 32
  %v782 = vpop.permute.xlu0 %781
  %v783 = vsel %vm342, %v782, 0
  %785 = vmatprep.subr.mxu0 0.0
  %786 = vmatpush1.msra.mxu0 %v334
  %787 = vmatprep.subr.mxu0 0.0
  %788 = vmatpush1.msra.mxu0 %v335
  %789 = vmatprep.subr.mxu0 0.0
  %790 = vmatpush1.msra.mxu0 %v336
  %791 = vmatprep.subr.mxu0 0.0
  %792 = vmatpush1.msra.mxu0 %v337
  %793 = vmatprep.subr.mxu0 0.0
  %794 = vmatpush1.msra.mxu0 0.0
  %795 = vmatprep.subr.mxu0 0.0
  %796 = vmatpush1.msra.mxu0 0.0
  %797 = vmatprep.subr.mxu0 0.0
  %798 = vmatpush1.msra.mxu0 0.0
  %799 = vmatprep.subr.mxu0 0.0
  %800 = vmatpush1.msra.mxu0 0.0
  %801 = vmatprep.subr.mxu0 0.0
  %802 = vmatpush1.msra.mxu0 0.0
  %803 = vmatprep.subr.mxu0 0.0
  %804 = vmatpush1.msra.mxu0 0.0
  %805 = vmatprep.subr.mxu0 0.0
  %806 = vmatpush1.msra.mxu0 0.0
  %807 = vmatprep.subr.mxu0 0.0
  %808 = vmatpush1.msra.mxu0 0.0
  %809 = vmatprep.subr.mxu0 0.0
  %810 = vmatpush1.msra.mxu0 0.0
  %811 = vmatprep.subr.mxu0 0.0
  %812 = vmatpush1.msra.mxu0 0.0
  %813 = vmatprep.subr.mxu0 0.0
  %814 = vmatpush1.msra.mxu0 0.0
  %815 = vmatprep.subr.mxu0 0.0
  %816 = vmatpush1.msra.mxu0 0.0
  %817 = vmatprep.subr.mxu0 0.0
  %818 = vmatpush1.msra.mxu0 0.0
  %819 = vmatprep.subr.mxu0 0.0
  %820 = vmatpush1.msra.mxu0 0.0
  %821 = vmatprep.subr.mxu0 0.0
  %822 = vmatpush1.msra.mxu0 0.0
  %823 = vmatprep.subr.mxu0 0.0
  %824 = vmatpush1.msra.mxu0 0.0
  %825 = vmatprep.subr.mxu0 0.0
  %826 = vmatpush1.msra.mxu0 0.0
  %827 = vmatprep.subr.mxu0 0.0
  %828 = vmatpush1.msra.mxu0 0.0
  %829 = vmatprep.subr.mxu0 0.0
  %830 = vmatpush1.msra.mxu0 0.0
  %831 = vmatprep.subr.mxu0 0.0
  %832 = vmatpush1.msra.mxu0 0.0
  %833 = vmatprep.subr.mxu0 0.0
  %834 = vmatpush1.msra.mxu0 0.0
  %835 = vmatprep.subr.mxu0 0.0
  %836 = vmatpush1.msra.mxu0 0.0
  %837 = vmatprep.subr.mxu0 0.0
  %838 = vmatpush1.msra.mxu0 0.0
  %839 = vmatprep.subr.mxu0 0.0
  %840 = vmatpush1.msra.mxu0 0.0
  %841 = vmatprep.subr.mxu0 0.0
  %842 = vmatpush1.msra.mxu0 0.0
  %843 = vmatprep.subr.mxu0 0.0
  %844 = vmatpush1.msra.mxu0 0.0
  %845 = vmatprep.subr.mxu0 0.0
  %846 = vmatpush1.msra.mxu0 0.0
  %847 = vmatprep.subr.mxu0 0.0
  %848 = vmatpush1.msra.mxu0 0.0
  %849 = vmatprep.mubr.f32.mxu0 0.0
  %850 = vmatmul.mubr.f32.gmra.mrb[0].mxu0 %v783
  %v851 = vpop.f32.mrb[0].mxu0
  %v852 = vadd.f32 0.0, %v851
  %v853 = vpop.f32.mrb[0].mxu0
  %854 = vdwg.mxu0
  %v856 = vrot.slane %v852, 4
  %v858 = vadd.f32 %v242, %v856
  %v859 = vxor.u32 %v858, 2147483648
  %v860 = vmul.f32 %v859, 1.442695
  %v861 = vpow.pop %v860
  %v862 = vadd.f32 %v861, 1.0
  %v863 = vrcp.pop %v862
  %v864 = vmul.f32 1.0, %v863
  %v865 = vtanh.pop %v858
  %v867 = vrot.slane %v651, 6
  %v869 = vmul.f32 %v864, %v867
  %871 = vrot.lane.b32.xlu0 %v865, 64
  %v872 = vpop.permute.xlu0 %871
  %v874 = vmul.f32 %v864, %v872
  %876 = vrot.lane.b32.xlu0 %v874, 32
  %v877 = vpop.permute.xlu0 %876
  %v879 = vadd.f32 %v869, %v877
  %v880 = vtanh.pop %v879
  %882 = vrot.lane.b32.xlu0 %v880, 64
  %v883 = vpop.permute.xlu0 %882
  %v885 = vmul.f32 %v864, %v883
  %v886 = vrot.slane %v763, 4
  %887 = vrot.lane.b32.xlu0 %v886, 32
  %v888 = vpop.permute.xlu0 %887
  %v889 = vsel %vm342, %v888, 0
  %891 = vmatprep.subr.mxu0 0.0
  %892 = vmatpush1.msra.mxu0 %v338
  %893 = vmatprep.subr.mxu0 0.0
  %894 = vmatpush1.msra.mxu0 %v339
  %895 = vmatprep.subr.mxu0 0.0
  %896 = vmatpush1.msra.mxu0 %v340
  %897 = vmatprep.subr.mxu0 0.0
  %898 = vmatpush1.msra.mxu0 %v341
  %899 = vmatprep.subr.mxu0 0.0
  %900 = vmatpush1.msra.mxu0 0.0
  %901 = vmatprep.subr.mxu0 0.0
  %902 = vmatpush1.msra.mxu0 0.0
  %903 = vmatprep.subr.mxu0 0.0
  %904 = vmatpush1.msra.mxu0 0.0
  %905 = vmatprep.subr.mxu0 0.0
  %906 = vmatpush1.msra.mxu0 0.0
  %907 = vmatprep.subr.mxu0 0.0
  %908 = vmatpush1.msra.mxu0 0.0
  %909 = vmatprep.subr.mxu0 0.0
  %910 = vmatpush1.msra.mxu0 0.0
  %911 = vmatprep.subr.mxu0 0.0
  %912 = vmatpush1.msra.mxu0 0.0
  %913 = vmatprep.subr.mxu0 0.0
  %914 = vmatpush1.msra.mxu0 0.0
  %915 = vmatprep.subr.mxu0 0.0
  %916 = vmatpush1.msra.mxu0 0.0
  %917 = vmatprep.subr.mxu0 0.0
  %918 = vmatpush1.msra.mxu0 0.0
  %919 = vmatprep.subr.mxu0 0.0
  %920 = vmatpush1.msra.mxu0 0.0
  %921 = vmatprep.subr.mxu0 0.0
  %922 = vmatpush1.msra.mxu0 0.0
  %923 = vmatprep.subr.mxu0 0.0
  %924 = vmatpush1.msra.mxu0 0.0
  %925 = vmatprep.subr.mxu0 0.0
  %926 = vmatpush1.msra.mxu0 0.0
  %927 = vmatprep.subr.mxu0 0.0
  %928 = vmatpush1.msra.mxu0 0.0
  %929 = vmatprep.subr.mxu0 0.0
  %930 = vmatpush1.msra.mxu0 0.0
  %931 = vmatprep.subr.mxu0 0.0
  %932 = vmatpush1.msra.mxu0 0.0
  %933 = vmatprep.subr.mxu0 0.0
  %934 = vmatpush1.msra.mxu0 0.0
  %935 = vmatprep.subr.mxu0 0.0
  %936 = vmatpush1.msra.mxu0 0.0
  %937 = vmatprep.subr.mxu0 0.0
  %938 = vmatpush1.msra.mxu0 0.0
  %939 = vmatprep.subr.mxu0 0.0
  %940 = vmatpush1.msra.mxu0 0.0
  %941 = vmatprep.subr.mxu0 0.0
  %942 = vmatpush1.msra.mxu0 0.0
  %943 = vmatprep.subr.mxu0 0.0
  %944 = vmatpush1.msra.mxu0 0.0
  %945 = vmatprep.subr.mxu0 0.0
  %946 = vmatpush1.msra.mxu0 0.0
  %947 = vmatprep.subr.mxu0 0.0
  %948 = vmatpush1.msra.mxu0 0.0
  %949 = vmatprep.subr.mxu0 0.0
  %950 = vmatpush1.msra.mxu0 0.0
  %951 = vmatprep.subr.mxu0 0.0
  %952 = vmatpush1.msra.mxu0 0.0
  %953 = vmatprep.subr.mxu0 0.0
  %954 = vmatpush1.msra.mxu0 0.0
  %955 = vmatprep.mubr.f32.mxu0 0.0
  %956 = vmatmul.mubr.f32.gmra.mrb[0].mxu0 %v889
  %v957 = vpop.f32.mrb[0].mxu0
  %v958 = vadd.f32 0.0, %v957
  %v959 = vpop.f32.mrb[0].mxu0
  %960 = vdwg.mxu0
  %v962 = vrot.slane %v958, 6
  %v964 = vadd.f32 %v331, %v962
  %v965 = vxor.u32 %v964, 2147483648
  %v966 = vmul.f32 %v965, 1.442695
  %v967 = vpow.pop %v966
  %v968 = vadd.f32 %v967, 1.0
  %v969 = vrcp.pop %v968
  %v970 = vmul.f32 1.0, %v969
  %v971 = vtanh.pop %v964
  %v973 = vrot.slane %v757, 2
  %v975 = vmul.f32 %v970, %v973
  %977 = vrot.lane.b32.xlu0 %v971, 64
  %v978 = vpop.permute.xlu0 %977
  %v980 = vmul.f32 %v970, %v978
  %982 = vrot.lane.b32.xlu0 %v980, 32
  %v983 = vpop.permute.xlu0 %982
  %v985 = vadd.f32 %v975, %v983
  %v986 = vtanh.pop %v985
  %988 = vrot.lane.b32.xlu0 %v986, 64
  %v989 = vpop.permute.xlu0 %988
  %v991 = vmul.f32 %v970, %v989
  %993 = vrot.lane.b32.xlu0 %v885, 32
  %v994 = vpop.permute.xlu0 %993
  %vm996 = vcmask 258052
  %997 = vst.msk [vmem:[#allocation2 - $0x2] sm:$0x10] %vm996, %v994
  %999 = vrot.lane.b32.xlu0 %v991, 64
  %v1000 = vpop.permute.xlu0 %999
  %vm1002 = vcmask 518402
  %1003 = vst.msk [vmem:[#allocation2 + $0x3] sm:$0x4] %vm1002, %v1000
  %vm1004 = vcmask 259077
  %1005 = vst.msk [vmem:[#allocation2 + $0x5] sm:$0x20] %vm1004, %v994
  %vm1006 = vcmask 519427
  %1007 = vst.msk [vmem:[#allocation2 + $0xa] sm:$0x8] %vm1006, %v1000
  %v1008 = vrot.slane %v885, 4
  %1009 = vrot.lane.b32.xlu0 %v1008, 32
  %v1010 = vpop.permute.xlu0 %1009
  %v1011 = vsel %vm342, %v1010, 0
  %1013 = vmatprep.subr.mxu0 0.0
  %1014 = vmatpush1.msra.mxu0 %v334
  %1015 = vmatprep.subr.mxu0 0.0
  %1016 = vmatpush1.msra.mxu0 %v335
  %1017 = vmatprep.subr.mxu0 0.0
  %1018 = vmatpush1.msra.mxu0 %v336
  %1019 = vmatprep.subr.mxu0 0.0
  %1020 = vmatpush1.msra.mxu0 %v337
  %1021 = vmatprep.subr.mxu0 0.0
  %1022 = vmatpush1.msra.mxu0 0.0
  %1023 = vmatprep.subr.mxu0 0.0
  %1024 = vmatpush1.msra.mxu0 0.0
  %1025 = vmatprep.subr.mxu0 0.0
  %1026 = vmatpush1.msra.mxu0 0.0
  %1027 = vmatprep.subr.mxu0 0.0
  %1028 = vmatpush1.msra.mxu0 0.0
  %1029 = vmatprep.subr.mxu0 0.0
  %1030 = vmatpush1.msra.mxu0 0.0
  %1031 = vmatprep.subr.mxu0 0.0
  %1032 = vmatpush1.msra.mxu0 0.0
  %1033 = vmatprep.subr.mxu0 0.0
  %1034 = vmatpush1.msra.mxu0 0.0
  %1035 = vmatprep.subr.mxu0 0.0
  %1036 = vmatpush1.msra.mxu0 0.0
  %1037 = vmatprep.subr.mxu0 0.0
  %1038 = vmatpush1.msra.mxu0 0.0
  %1039 = vmatprep.subr.mxu0 0.0
  %1040 = vmatpush1.msra.mxu0 0.0
  %1041 = vmatprep.subr.mxu0 0.0
  %1042 = vmatpush1.msra.mxu0 0.0
  %1043 = vmatprep.subr.mxu0 0.0
  %1044 = vmatpush1.msra.mxu0 0.0
  %1045 = vmatprep.subr.mxu0 0.0
  %1046 = vmatpush1.msra.mxu0 0.0
  %1047 = vmatprep.subr.mxu0 0.0
  %1048 = vmatpush1.msra.mxu0 0.0
  %1049 = vmatprep.subr.mxu0 0.0
  %1050 = vmatpush1.msra.mxu0 0.0
  %1051 = vmatprep.subr.mxu0 0.0
  %1052 = vmatpush1.msra.mxu0 0.0
  %1053 = vmatprep.subr.mxu0 0.0
  %1054 = vmatpush1.msra.mxu0 0.0
  %1055 = vmatprep.subr.mxu0 0.0
  %1056 = vmatpush1.msra.mxu0 0.0
  %1057 = vmatprep.subr.mxu0 0.0
  %1058 = vmatpush1.msra.mxu0 0.0
  %1059 = vmatprep.subr.mxu0 0.0
  %1060 = vmatpush1.msra.mxu0 0.0
  %1061 = vmatprep.subr.mxu0 0.0
  %1062 = vmatpush1.msra.mxu0 0.0
  %1063 = vmatprep.subr.mxu0 0.0
  %1064 = vmatpush1.msra.mxu0 0.0
  %1065 = vmatprep.subr.mxu0 0.0
  %1066 = vmatpush1.msra.mxu0 0.0
  %1067 = vmatprep.subr.mxu0 0.0
  %1068 = vmatpush1.msra.mxu0 0.0
  %1069 = vmatprep.subr.mxu0 0.0
  %1070 = vmatpush1.msra.mxu0 0.0
  %1071 = vmatprep.subr.mxu0 0.0
  %1072 = vmatpush1.msra.mxu0 0.0
  %1073 = vmatprep.subr.mxu0 0.0
  %1074 = vmatpush1.msra.mxu0 0.0
  %1075 = vmatprep.subr.mxu0 0.0
  %1076 = vmatpush1.msra.mxu0 0.0
  %1077 = vmatprep.mubr.f32.mxu0 0.0
  %1078 = vmatmul.mubr.f32.gmra.mrb[0].mxu0 %v1011
  %v1079 = vpop.f32.mrb[0].mxu0
  %v1080 = vadd.f32 0.0, %v1079
  %v1081 = vpop.f32.mrb[0].mxu0
  %1082 = vdwg.mxu0
  %v1084 = vrot.slane %v1080, 2
  %v1086 = vadd.f32 %v242, %v1084
  %v1087 = vxor.u32 %v1086, 2147483648
  %v1088 = vmul.f32 %v1087, 1.442695
  %v1089 = vpow.pop %v1088
  %v1090 = vadd.f32 %v1089, 1.0
  %v1091 = vrcp.pop %v1090
  %v1092 = vmul.f32 1.0, %v1091
  %v1093 = vtanh.pop %v1086
  %v1095 = vrot.slane %v879, 6
  %v1097 = vmul.f32 %v1092, %v1095
  %1099 = vrot.lane.b32.xlu0 %v1093, 64
  %v1100 = vpop.permute.xlu0 %1099
  %v1102 = vmul.f32 %v1092, %v1100
  %1104 = vrot.lane.b32.xlu0 %v1102, 32
  %v1105 = vpop.permute.xlu0 %1104
  %v1107 = vadd.f32 %v1097, %v1105
  %v1108 = vtanh.pop %v1107
  %1110 = vrot.lane.b32.xlu0 %v1108, 64
  %v1111 = vpop.permute.xlu0 %1110
  %v1113 = vmul.f32 %v1092, %v1111
  %v1114 = vrot.slane %v991, 2
  %1115 = vrot.lane.b32.xlu0 %v1114, 32
  %v1116 = vpop.permute.xlu0 %1115
  %v1117 = vsel %vm342, %v1116, 0
  %1119 = vmatprep.subr.mxu0 0.0
  %1120 = vmatpush1.msra.mxu0 %v338
  %1121 = vmatprep.subr.mxu0 0.0
  %1122 = vmatpush1.msra.mxu0 %v339
  %1123 = vmatprep.subr.mxu0 0.0
  %1124 = vmatpush1.msra.mxu0 %v340
  %1125 = vmatprep.subr.mxu0 0.0
  %1126 = vmatpush1.msra.mxu0 %v341
  %1127 = vmatprep.subr.mxu0 0.0
  %1128 = vmatpush1.msra.mxu0 0.0
  %1129 = vmatprep.subr.mxu0 0.0
  %1130 = vmatpush1.msra.mxu0 0.0
  %1131 = vmatprep.subr.mxu0 0.0
  %1132 = vmatpush1.msra.mxu0 0.0
  %1133 = vmatprep.subr.mxu0 0.0
  %1134 = vmatpush1.msra.mxu0 0.0
  %1135 = vmatprep.subr.mxu0 0.0
  %1136 = vmatpush1.msra.mxu0 0.0
  %1137 = vmatprep.subr.mxu0 0.0
  %1138 = vmatpush1.msra.mxu0 0.0
  %1139 = vmatprep.subr.mxu0 0.0
  %1140 = vmatpush1.msra.mxu0 0.0
  %1141 = vmatprep.subr.mxu0 0.0
  %1142 = vmatpush1.msra.mxu0 0.0
  %1143 = vmatprep.subr.mxu0 0.0
  %1144 = vmatpush1.msra.mxu0 0.0
  %1145 = vmatprep.subr.mxu0 0.0
  %1146 = vmatpush1.msra.mxu0 0.0
  %1147 = vmatprep.subr.mxu0 0.0
  %1148 = vmatpush1.msra.mxu0 0.0
  %1149 = vmatprep.subr.mxu0 0.0
  %1150 = vmatpush1.msra.mxu0 0.0
  %1151 = vmatprep.subr.mxu0 0.0
  %1152 = vmatpush1.msra.mxu0 0.0
  %1153 = vmatprep.subr.mxu0 0.0
  %1154 = vmatpush1.msra.mxu0 0.0
  %1155 = vmatprep.subr.mxu0 0.0
  %1156 = vmatpush1.msra.mxu0 0.0
  %1157 = vmatprep.subr.mxu0 0.0
  %1158 = vmatpush1.msra.mxu0 0.0
  %1159 = vmatprep.subr.mxu0 0.0
  %1160 = vmatpush1.msra.mxu0 0.0
  %1161 = vmatprep.subr.mxu0 0.0
  %1162 = vmatpush1.msra.mxu0 0.0
  %1163 = vmatprep.subr.mxu0 0.0
  %1164 = vmatpush1.msra.mxu0 0.0
  %1165 = vmatprep.subr.mxu0 0.0
  %1166 = vmatpush1.msra.mxu0 0.0
  %1167 = vmatprep.subr.mxu0 0.0
  %1168 = vmatpush1.msra.mxu0 0.0
  %1169 = vmatprep.subr.mxu0 0.0
  %1170 = vmatpush1.msra.mxu0 0.0
  %1171 = vmatprep.subr.mxu0 0.0
  %1172 = vmatpush1.msra.mxu0 0.0
  %1173 = vmatprep.subr.mxu0 0.0
  %1174 = vmatpush1.msra.mxu0 0.0
  %1175 = vmatprep.subr.mxu0 0.0
  %1176 = vmatpush1.msra.mxu0 0.0
  %1177 = vmatprep.subr.mxu0 0.0
  %1178 = vmatpush1.msra.mxu0 0.0
  %1179 = vmatprep.subr.mxu0 0.0
  %1180 = vmatpush1.msra.mxu0 0.0
  %1181 = vmatprep.subr.mxu0 0.0
  %1182 = vmatpush1.msra.mxu0 0.0
  %1183 = vmatprep.mubr.f32.mxu0 0.0
  %1184 = vmatmul.mubr.f32.gmra.mrb[0].mxu0 %v1117
  %v1185 = vpop.f32.mrb[0].mxu0
  %v1186 = vadd.f32 0.0, %v1185
  %v1187 = vpop.f32.mrb[0].mxu0
  %1188 = vdwg.mxu0
  %v1189 = vadd.f32 %v331, %v1186
  %v1190 = vxor.u32 %v1189, 2147483648
  %v1191 = vmul.f32 %v1190, 1.442695
  %v1192 = vpow.pop %v1191
  %v1193 = vadd.f32 %v1192, 1.0
  %v1194 = vrcp.pop %v1193
  %v1195 = vmul.f32 1.0, %v1194
  %v1196 = vtanh.pop %v1189
  %v1198 = vrot.slane %v985, 2
  %v1200 = vmul.f32 %v1195, %v1198
  %1202 = vrot.lane.b32.xlu0 %v1196, 64
  %v1203 = vpop.permute.xlu0 %1202
  %v1205 = vmul.f32 %v1195, %v1203
  %1207 = vrot.lane.b32.xlu0 %v1205, 32
  %v1208 = vpop.permute.xlu0 %1207
  %v1210 = vadd.f32 %v1200, %v1208
  %v1211 = vtanh.pop %v1210
  %1213 = vrot.lane.b32.xlu0 %v1211, 64
  %v1214 = vpop.permute.xlu0 %1213
  %v1216 = vmul.f32 %v1195, %v1214
  %1218 = vrot.lane.b32.xlu0 %v1113, 32
  %v1219 = vpop.permute.xlu0 %1218
  %vm1221 = vcmask 260102
  %1222 = vst.msk [vmem:[#allocation2 - $0x3] sm:$0x40] %vm1221, %v1219
  %1224 = vrot.lane.b32.xlu0 %v1216, 64
  %v1225 = vpop.permute.xlu0 %1224
  %vm1227 = vcmask 516352
  %1228 = vst.msk [vmem:[#allocation2 + $0x4] sm:$0x1] %vm1227, %v1225
  %vm1229 = vcmask 261127
  %1230 = vst.msk [vmem:[#allocation2 + $0x4] sm:$0x80] %vm1229, %v1219
  %vm1231 = vcmask 517377
  %1232 = vst.msk [vmem:[#allocation2 + $0xb] sm:$0x2] %vm1231, %v1225
  %v1233 = vrot.slane %v1113, 6
  %1234 = vrot.lane.b32.xlu0 %v1233, 32
  %v1235 = vpop.permute.xlu0 %1234
  %v1236 = vsel %vm342, %v1235, 0
  %1238 = vmatprep.subr.mxu0 0.0
  %1239 = vmatpush1.msra.mxu0 %v334
  %1240 = vmatprep.subr.mxu0 0.0
  %1241 = vmatpush1.msra.mxu0 %v335
  %1242 = vmatprep.subr.mxu0 0.0
  %1243 = vmatpush1.msra.mxu0 %v336
  %1244 = vmatprep.subr.mxu0 0.0
  %1245 = vmatpush1.msra.mxu0 %v337
  %1246 = vmatprep.subr.mxu0 0.0
  %1247 = vmatpush1.msra.mxu0 0.0
  %1248 = vmatprep.subr.mxu0 0.0
  %1249 = vmatpush1.msra.mxu0 0.0
  %1250 = vmatprep.subr.mxu0 0.0
  %1251 = vmatpush1.msra.mxu0 0.0
  %1252 = vmatprep.subr.mxu0 0.0
  %1253 = vmatpush1.msra.mxu0 0.0
  %1254 = vmatprep.subr.mxu0 0.0
  %1255 = vmatpush1.msra.mxu0 0.0
  %1256 = vmatprep.subr.mxu0 0.0
  %1257 = vmatpush1.msra.mxu0 0.0
  %1258 = vmatprep.subr.mxu0 0.0
  %1259 = vmatpush1.msra.mxu0 0.0
  %1260 = vmatprep.subr.mxu0 0.0
  %1261 = vmatpush1.msra.mxu0 0.0
  %1262 = vmatprep.subr.mxu0 0.0
  %1263 = vmatpush1.msra.mxu0 0.0
  %1264 = vmatprep.subr.mxu0 0.0
  %1265 = vmatpush1.msra.mxu0 0.0
  %1266 = vmatprep.subr.mxu0 0.0
  %1267 = vmatpush1.msra.mxu0 0.0
  %1268 = vmatprep.subr.mxu0 0.0
  %1269 = vmatpush1.msra.mxu0 0.0
  %1270 = vmatprep.subr.mxu0 0.0
  %1271 = vmatpush1.msra.mxu0 0.0
  %1272 = vmatprep.subr.mxu0 0.0
  %1273 = vmatpush1.msra.mxu0 0.0
  %1274 = vmatprep.subr.mxu0 0.0
  %1275 = vmatpush1.msra.mxu0 0.0
  %1276 = vmatprep.subr.mxu0 0.0
  %1277 = vmatpush1.msra.mxu0 0.0
  %1278 = vmatprep.subr.mxu0 0.0
  %1279 = vmatpush1.msra.mxu0 0.0
  %1280 = vmatprep.subr.mxu0 0.0
  %1281 = vmatpush1.msra.mxu0 0.0
  %1282 = vmatprep.subr.mxu0 0.0
  %1283 = vmatpush1.msra.mxu0 0.0
  %1284 = vmatprep.subr.mxu0 0.0
  %1285 = vmatpush1.msra.mxu0 0.0
  %1286 = vmatprep.subr.mxu0 0.0
  %1287 = vmatpush1.msra.mxu0 0.0
  %1288 = vmatprep.subr.mxu0 0.0
  %1289 = vmatpush1.msra.mxu0 0.0
  %1290 = vmatprep.subr.mxu0 0.0
  %1291 = vmatpush1.msra.mxu0 0.0
  %1292 = vmatprep.subr.mxu0 0.0
  %1293 = vmatpush1.msra.mxu0 0.0
  %1294 = vmatprep.subr.mxu0 0.0
  %1295 = vmatpush1.msra.mxu0 0.0
  %1296 = vmatprep.subr.mxu0 0.0
  %1297 = vmatpush1.msra.mxu0 0.0
  %1298 = vmatprep.subr.mxu0 0.0
  %1299 = vmatpush1.msra.mxu0 0.0
  %1300 = vmatprep.subr.mxu0 0.0
  %1301 = vmatpush1.msra.mxu0 0.0
  %1302 = vmatprep.mubr.f32.mxu0 0.0
  %1303 = vmatmul.mubr.f32.gmra.mrb[0].mxu0 %v1236
  %v1304 = vpop.f32.mrb[0].mxu0
  %v1305 = vadd.f32 0.0, %v1304
  %v1306 = vpop.f32.mrb[0].mxu0
  %1307 = vdwg.mxu0
  %v1308 = vadd.f32 %v247, %v1305
  %v1309 = vxor.u32 %v1308, 2147483648
  %v1310 = vmul.f32 %v1309, 1.442695
  %v1311 = vpow.pop %v1310
  %v1312 = vadd.f32 %v1311, 1.0
  %v1313 = vrcp.pop %v1312
  %v1314 = vmul.f32 1.0, %v1313
  %v1315 = vtanh.pop %v1308
  %v1317 = vrot.slane %v1107, 6
  %v1319 = vmul.f32 %v1314, %v1317
  %1321 = vrot.lane.b32.xlu0 %v1315, 64
  %v1322 = vpop.permute.xlu0 %1321
  %v1324 = vmul.f32 %v1314, %v1322
  %1326 = vrot.lane.b32.xlu0 %v1324, 32
  %v1327 = vpop.permute.xlu0 %1326
  %v1329 = vadd.f32 %v1319, %v1327
  %v1330 = vtanh.pop %v1329
  %1332 = vrot.lane.b32.xlu0 %v1330, 64
  %v1333 = vpop.permute.xlu0 %1332
  %v1335 = vmul.f32 %v1314, %v1333
  %1336 = vrot.lane.b32.xlu0 %v1216, 32
  %v1337 = vpop.permute.xlu0 %1336
  %v1338 = vsel %vm342, %v1337, 0
  %1340 = vmatprep.subr.mxu0 0.0
  %1341 = vmatpush1.msra.mxu0 %v338
  %1342 = vmatprep.subr.mxu0 0.0
  %1343 = vmatpush1.msra.mxu0 %v339
  %1344 = vmatprep.subr.mxu0 0.0
  %1345 = vmatpush1.msra.mxu0 %v340
  %1346 = vmatprep.subr.mxu0 0.0
  %1347 = vmatpush1.msra.mxu0 %v341
  %1348 = vmatprep.subr.mxu0 0.0
  %1349 = vmatpush1.msra.mxu0 0.0
  %1350 = vmatprep.subr.mxu0 0.0
  %1351 = vmatpush1.msra.mxu0 0.0
  %1352 = vmatprep.subr.mxu0 0.0
  %1353 = vmatpush1.msra.mxu0 0.0
  %1354 = vmatprep.subr.mxu0 0.0
  %1355 = vmatpush1.msra.mxu0 0.0
  %1356 = vmatprep.subr.mxu0 0.0
  %1357 = vmatpush1.msra.mxu0 0.0
  %1358 = vmatprep.subr.mxu0 0.0
  %1359 = vmatpush1.msra.mxu0 0.0
  %1360 = vmatprep.subr.mxu0 0.0
  %1361 = vmatpush1.msra.mxu0 0.0
  %1362 = vmatprep.subr.mxu0 0.0
  %1363 = vmatpush1.msra.mxu0 0.0
  %1364 = vmatprep.subr.mxu0 0.0
  %1365 = vmatpush1.msra.mxu0 0.0
  %1366 = vmatprep.subr.mxu0 0.0
  %1367 = vmatpush1.msra.mxu0 0.0
  %1368 = vmatprep.subr.mxu0 0.0
  %1369 = vmatpush1.msra.mxu0 0.0
  %1370 = vmatprep.subr.mxu0 0.0
  %1371 = vmatpush1.msra.mxu0 0.0
  %1372 = vmatprep.subr.mxu0 0.0
  %1373 = vmatpush1.msra.mxu0 0.0
  %1374 = vmatprep.subr.mxu0 0.0
  %1375 = vmatpush1.msra.mxu0 0.0
  %1376 = vmatprep.subr.mxu0 0.0
  %1377 = vmatpush1.msra.mxu0 0.0
  %1378 = vmatprep.subr.mxu0 0.0
  %1379 = vmatpush1.msra.mxu0 0.0
  %1380 = vmatprep.subr.mxu0 0.0
  %1381 = vmatpush1.msra.mxu0 0.0
  %1382 = vmatprep.subr.mxu0 0.0
  %1383 = vmatpush1.msra.mxu0 0.0
  %1384 = vmatprep.subr.mxu0 0.0
  %1385 = vmatpush1.msra.mxu0 0.0
  %1386 = vmatprep.subr.mxu0 0.0
  %1387 = vmatpush1.msra.mxu0 0.0
  %1388 = vmatprep.subr.mxu0 0.0
  %1389 = vmatpush1.msra.mxu0 0.0
  %1390 = vmatprep.subr.mxu0 0.0
  %1391 = vmatpush1.msra.mxu0 0.0
  %1392 = vmatprep.subr.mxu0 0.0
  %1393 = vmatpush1.msra.mxu0 0.0
  %1394 = vmatprep.subr.mxu0 0.0
  %1395 = vmatpush1.msra.mxu0 0.0
  %1396 = vmatprep.subr.mxu0 0.0
  %1397 = vmatpush1.msra.mxu0 0.0
  %1398 = vmatprep.subr.mxu0 0.0
  %1399 = vmatpush1.msra.mxu0 0.0
  %1400 = vmatprep.subr.mxu0 0.0
  %1401 = vmatpush1.msra.mxu0 0.0
  %1402 = vmatprep.subr.mxu0 0.0
  %1403 = vmatpush1.msra.mxu0 0.0
  %1404 = vmatprep.mubr.f32.mxu0 0.0
  %1405 = vmatmul.mubr.f32.gmra.mrb[0].mxu0 %v1338
  %v1406 = vpop.f32.mrb[0].mxu0
  %v1407 = vadd.f32 0.0, %v1406
  %v1408 = vpop.f32.mrb[0].mxu0
  %1409 = vdwg.mxu0
  %v1411 = vrot.slane %v1407, 2
  %v1413 = vadd.f32 %v326, %v1411
  %v1414 = vxor.u32 %v1413, 2147483648
  %v1415 = vmul.f32 %v1414, 1.442695
  %v1416 = vpow.pop %v1415
  %v1417 = vadd.f32 %v1416, 1.0
  %v1418 = vrcp.pop %v1417
  %v1419 = vmul.f32 1.0, %v1418
  %v1420 = vtanh.pop %v1413
  %v1422 = vrot.slane %v1210, 2
  %v1424 = vmul.f32 %v1419, %v1422
  %1426 = vrot.lane.b32.xlu0 %v1420, 64
  %v1427 = vpop.permute.xlu0 %1426
  %v1429 = vmul.f32 %v1419, %v1427
  %1431 = vrot.lane.b32.xlu0 %v1429, 32
  %v1432 = vpop.permute.xlu0 %1431
  %v1434 = vadd.f32 %v1424, %v1432
  %v1435 = vtanh.pop %v1434
  %1437 = vrot.lane.b32.xlu0 %v1435, 64
  %v1438 = vpop.permute.xlu0 %1437
  %v1440 = vmul.f32 %v1419, %v1438
  %1442 = vrot.lane.b32.xlu0 %v1335, 32
  %v1443 = vpop.permute.xlu0 %1442
  %1445 = vst.msk [vmem:[#allocation2 + $0x4] sm:$0x1] %vm543, %v1443
  %1447 = vrot.lane.b32.xlu0 %v1440, 64
  %v1448 = vpop.permute.xlu0 %1447
  %1450 = vst.msk [vmem:[#allocation2 - $0x3] sm:$0x40] %vm549, %v1448
  %1451 = vst.msk [vmem:[#allocation2 + $0xb] sm:$0x2] %vm551, %v1443
  %1452 = vst.msk [vmem:[#allocation2 + $0x4] sm:$0x80] %vm553, %v1448
  %v1453 = vsel %vm342, %v1443, 0
  %1455 = vmatprep.subr.mxu0 0.0
  %1456 = vmatpush1.msra.mxu0 %v334
  %1457 = vmatprep.subr.mxu0 0.0
  %1458 = vmatpush1.msra.mxu0 %v335
  %1459 = vmatprep.subr.mxu0 0.0
  %1460 = vmatpush1.msra.mxu0 %v336
  %1461 = vmatprep.subr.mxu0 0.0
  %1462 = vmatpush1.msra.mxu0 %v337
  %1463 = vmatprep.subr.mxu0 0.0
  %1464 = vmatpush1.msra.mxu0 0.0
  %1465 = vmatprep.subr.mxu0 0.0
  %1466 = vmatpush1.msra.mxu0 0.0
  %1467 = vmatprep.subr.mxu0 0.0
  %1468 = vmatpush1.msra.mxu0 0.0
  %1469 = vmatprep.subr.mxu0 0.0
  %1470 = vmatpush1.msra.mxu0 0.0
  %1471 = vmatprep.subr.mxu0 0.0
  %1472 = vmatpush1.msra.mxu0 0.0
  %1473 = vmatprep.subr.mxu0 0.0
  %1474 = vmatpush1.msra.mxu0 0.0
  %1475 = vmatprep.subr.mxu0 0.0
  %1476 = vmatpush1.msra.mxu0 0.0
  %1477 = vmatprep.subr.mxu0 0.0
  %1478 = vmatpush1.msra.mxu0 0.0
  %1479 = vmatprep.subr.mxu0 0.0
  %1480 = vmatpush1.msra.mxu0 0.0
  %1481 = vmatprep.subr.mxu0 0.0
  %1482 = vmatpush1.msra.mxu0 0.0
  %1483 = vmatprep.subr.mxu0 0.0
  %1484 = vmatpush1.msra.mxu0 0.0
  %1485 = vmatprep.subr.mxu0 0.0
  %1486 = vmatpush1.msra.mxu0 0.0
  %1487 = vmatprep.subr.mxu0 0.0
  %1488 = vmatpush1.msra.mxu0 0.0
  %1489 = vmatprep.subr.mxu0 0.0
  %1490 = vmatpush1.msra.mxu0 0.0
  %1491 = vmatprep.subr.mxu0 0.0
  %1492 = vmatpush1.msra.mxu0 0.0
  %1493 = vmatprep.subr.mxu0 0.0
  %1494 = vmatpush1.msra.mxu0 0.0
  %1495 = vmatprep.subr.mxu0 0.0
  %1496 = vmatpush1.msra.mxu0 0.0
  %1497 = vmatprep.subr.mxu0 0.0
  %1498 = vmatpush1.msra.mxu0 0.0
  %1499 = vmatprep.subr.mxu0 0.0
  %1500 = vmatpush1.msra.mxu0 0.0
  %1501 = vmatprep.subr.mxu0 0.0
  %1502 = vmatpush1.msra.mxu0 0.0
  %1503 = vmatprep.subr.mxu0 0.0
  %1504 = vmatpush1.msra.mxu0 0.0
  %1505 = vmatprep.subr.mxu0 0.0
  %1506 = vmatpush1.msra.mxu0 0.0
  %1507 = vmatprep.subr.mxu0 0.0
  %1508 = vmatpush1.msra.mxu0 0.0
  %1509 = vmatprep.subr.mxu0 0.0
  %1510 = vmatpush1.msra.mxu0 0.0
  %1511 = vmatprep.subr.mxu0 0.0
  %1512 = vmatpush1.msra.mxu0 0.0
  %1513 = vmatprep.subr.mxu0 0.0
  %1514 = vmatpush1.msra.mxu0 0.0
  %1515 = vmatprep.subr.mxu0 0.0
  %1516 = vmatpush1.msra.mxu0 0.0
  %1517 = vmatprep.subr.mxu0 0.0
  %1518 = vmatpush1.msra.mxu0 0.0
  %1519 = vmatprep.mubr.f32.mxu0 0.0
  %1520 = vmatmul.mubr.f32.gmra.mrb[0].mxu0 %v1453
  %v1521 = vpop.f32.mrb[0].mxu0
  %v1522 = vadd.f32 0.0, %v1521
  %v1523 = vpop.f32.mrb[0].mxu0
  %1524 = vdwg.mxu0
  %v1526 = vrot.slane %v1522, 6
  %v1528 = vadd.f32 %v247, %v1526
  %v1529 = vxor.u32 %v1528, 2147483648
  %v1530 = vmul.f32 %v1529, 1.442695
  %v1531 = vpow.pop %v1530
  %v1532 = vadd.f32 %v1531, 1.0
  %v1533 = vrcp.pop %v1532
  %v1534 = vmul.f32 1.0, %v1533
  %v1535 = vtanh.pop %v1528
  %v1537 = vrot.slane %v1329, 6
  %v1539 = vmul.f32 %v1534, %v1537
  %1541 = vrot.lane.b32.xlu0 %v1535, 64
  %v1542 = vpop.permute.xlu0 %1541
  %v1544 = vmul.f32 %v1534, %v1542
  %1546 = vrot.lane.b32.xlu0 %v1544, 32
  %v1547 = vpop.permute.xlu0 %1546
  %v1549 = vadd.f32 %v1539, %v1547
  %v1550 = vtanh.pop %v1549
  %1552 = vrot.lane.b32.xlu0 %v1550, 64
  %v1553 = vpop.permute.xlu0 %1552
  %v1555 = vmul.f32 %v1534, %v1553
  %v1556 = vrot.slane %v1440, 6
  %1557 = vrot.lane.b32.xlu0 %v1556, 32
  %v1558 = vpop.permute.xlu0 %1557
  %v1559 = vsel %vm342, %v1558, 0
  %1561 = vmatprep.subr.mxu0 0.0
  %1562 = vmatpush1.msra.mxu0 %v338
  %1563 = vmatprep.subr.mxu0 0.0
  %1564 = vmatpush1.msra.mxu0 %v339
  %1565 = vmatprep.subr.mxu0 0.0
  %1566 = vmatpush1.msra.mxu0 %v340
  %1567 = vmatprep.subr.mxu0 0.0
  %1568 = vmatpush1.msra.mxu0 %v341
  %1569 = vmatprep.subr.mxu0 0.0
  %1570 = vmatpush1.msra.mxu0 0.0
  %1571 = vmatprep.subr.mxu0 0.0
  %1572 = vmatpush1.msra.mxu0 0.0
  %1573 = vmatprep.subr.mxu0 0.0
  %1574 = vmatpush1.msra.mxu0 0.0
  %1575 = vmatprep.subr.mxu0 0.0
  %1576 = vmatpush1.msra.mxu0 0.0
  %1577 = vmatprep.subr.mxu0 0.0
  %1578 = vmatpush1.msra.mxu0 0.0
  %1579 = vmatprep.subr.mxu0 0.0
  %1580 = vmatpush1.msra.mxu0 0.0
  %1581 = vmatprep.subr.mxu0 0.0
  %1582 = vmatpush1.msra.mxu0 0.0
  %1583 = vmatprep.subr.mxu0 0.0
  %1584 = vmatpush1.msra.mxu0 0.0
  %1585 = vmatprep.subr.mxu0 0.0
  %1586 = vmatpush1.msra.mxu0 0.0
  %1587 = vmatprep.subr.mxu0 0.0
  %1588 = vmatpush1.msra.mxu0 0.0
  %1589 = vmatprep.subr.mxu0 0.0
  %1590 = vmatpush1.msra.mxu0 0.0
  %1591 = vmatprep.subr.mxu0 0.0
  %1592 = vmatpush1.msra.mxu0 0.0
  %1593 = vmatprep.subr.mxu0 0.0
  %1594 = vmatpush1.msra.mxu0 0.0
  %1595 = vmatprep.subr.mxu0 0.0
  %1596 = vmatpush1.msra.mxu0 0.0
  %1597 = vmatprep.subr.mxu0 0.0
  %1598 = vmatpush1.msra.mxu0 0.0
  %1599 = vmatprep.subr.mxu0 0.0
  %1600 = vmatpush1.msra.mxu0 0.0
  %1601 = vmatprep.subr.mxu0 0.0
  %1602 = vmatpush1.msra.mxu0 0.0
  %1603 = vmatprep.subr.mxu0 0.0
  %1604 = vmatpush1.msra.mxu0 0.0
  %1605 = vmatprep.subr.mxu0 0.0
  %1606 = vmatpush1.msra.mxu0 0.0
  %1607 = vmatprep.subr.mxu0 0.0
  %1608 = vmatpush1.msra.mxu0 0.0
  %1609 = vmatprep.subr.mxu0 0.0
  %1610 = vmatpush1.msra.mxu0 0.0
  %1611 = vmatprep.subr.mxu0 0.0
  %1612 = vmatpush1.msra.mxu0 0.0
  %1613 = vmatprep.subr.mxu0 0.0
  %1614 = vmatpush1.msra.mxu0 0.0
  %1615 = vmatprep.subr.mxu0 0.0
  %1616 = vmatpush1.msra.mxu0 0.0
  %1617 = vmatprep.subr.mxu0 0.0
  %1618 = vmatpush1.msra.mxu0 0.0
  %1619 = vmatprep.subr.mxu0 0.0
  %1620 = vmatpush1.msra.mxu0 0.0
  %1621 = vmatprep.subr.mxu0 0.0
  %1622 = vmatpush1.msra.mxu0 0.0
  %1623 = vmatprep.subr.mxu0 0.0
  %1624 = vmatpush1.msra.mxu0 0.0
  %1625 = vmatprep.mubr.f32.mxu0 0.0
  %1626 = vmatmul.mubr.f32.gmra.mrb[0].mxu0 %v1559
  %v1627 = vpop.f32.mrb[0].mxu0
  %v1628 = vadd.f32 0.0, %v1627
  %v1629 = vpop.f32.mrb[0].mxu0
  %1630 = vdwg.mxu0
  %v1632 = vrot.slane %v1628, 4
  %v1634 = vadd.f32 %v326, %v1632
  %v1635 = vxor.u32 %v1634, 2147483648
  %v1636 = vmul.f32 %v1635, 1.442695
  %v1637 = vpow.pop %v1636
  %v1638 = vadd.f32 %v1637, 1.0
  %v1639 = vrcp.pop %v1638
  %v1640 = vmul.f32 1.0, %v1639
  %v1641 = vtanh.pop %v1634
  %v1643 = vrot.slane %v1434, 2
  %v1645 = vmul.f32 %v1640, %v1643
  %1647 = vrot.lane.b32.xlu0 %v1641, 64
  %v1648 = vpop.permute.xlu0 %1647
  %v1650 = vmul.f32 %v1640, %v1648
  %1652 = vrot.lane.b32.xlu0 %v1650, 32
  %v1653 = vpop.permute.xlu0 %1652
  %v1655 = vadd.f32 %v1645, %v1653
  %v1656 = vtanh.pop %v1655
  %1658 = vrot.lane.b32.xlu0 %v1656, 64
  %v1659 = vpop.permute.xlu0 %1658
  %v1661 = vmul.f32 %v1640, %v1659
  %1663 = vrot.lane.b32.xlu0 %v1555, 32
  %v1664 = vpop.permute.xlu0 %1663
  %1666 = vst.msk [vmem:[#allocation2 + $0x3] sm:$0x4] %vm768, %v1664
  %1668 = vrot.lane.b32.xlu0 %v1661, 64
  %v1669 = vpop.permute.xlu0 %1668
  %1671 = vst.msk [vmem:[#allocation2 - $0x2] sm:$0x10] %vm774, %v1669
  %1672 = vst.msk [vmem:[#allocation2 + $0xa] sm:$0x8] %vm776, %v1664
  %1673 = vst.msk [vmem:[#allocation2 + $0x5] sm:$0x20] %vm778, %v1669
  %v1674 = vrot.slane %v1555, 2
  %1675 = vrot.lane.b32.xlu0 %v1674, 32
  %v1676 = vpop.permute.xlu0 %1675
  %v1677 = vsel %vm342, %v1676, 0
  %1679 = vmatprep.subr.mxu0 0.0
  %1680 = vmatpush1.msra.mxu0 %v334
  %1681 = vmatprep.subr.mxu0 0.0
  %1682 = vmatpush1.msra.mxu0 %v335
  %1683 = vmatprep.subr.mxu0 0.0
  %1684 = vmatpush1.msra.mxu0 %v336
  %1685 = vmatprep.subr.mxu0 0.0
  %1686 = vmatpush1.msra.mxu0 %v337
  %1687 = vmatprep.subr.mxu0 0.0
  %1688 = vmatpush1.msra.mxu0 0.0
  %1689 = vmatprep.subr.mxu0 0.0
  %1690 = vmatpush1.msra.mxu0 0.0
  %1691 = vmatprep.subr.mxu0 0.0
  %1692 = vmatpush1.msra.mxu0 0.0
  %1693 = vmatprep.subr.mxu0 0.0
  %1694 = vmatpush1.msra.mxu0 0.0
  %1695 = vmatprep.subr.mxu0 0.0
  %1696 = vmatpush1.msra.mxu0 0.0
  %1697 = vmatprep.subr.mxu0 0.0
  %1698 = vmatpush1.msra.mxu0 0.0
  %1699 = vmatprep.subr.mxu0 0.0
  %1700 = vmatpush1.msra.mxu0 0.0
  %1701 = vmatprep.subr.mxu0 0.0
  %1702 = vmatpush1.msra.mxu0 0.0
  %1703 = vmatprep.subr.mxu0 0.0
  %1704 = vmatpush1.msra.mxu0 0.0
  %1705 = vmatprep.subr.mxu0 0.0
  %1706 = vmatpush1.msra.mxu0 0.0
  %1707 = vmatprep.subr.mxu0 0.0
  %1708 = vmatpush1.msra.mxu0 0.0
  %1709 = vmatprep.subr.mxu0 0.0
  %1710 = vmatpush1.msra.mxu0 0.0
  %1711 = vmatprep.subr.mxu0 0.0
  %1712 = vmatpush1.msra.mxu0 0.0
  %1713 = vmatprep.subr.mxu0 0.0
  %1714 = vmatpush1.msra.mxu0 0.0
  %1715 = vmatprep.subr.mxu0 0.0
  %1716 = vmatpush1.msra.mxu0 0.0
  %1717 = vmatprep.subr.mxu0 0.0
  %1718 = vmatpush1.msra.mxu0 0.0
  %1719 = vmatprep.subr.mxu0 0.0
  %1720 = vmatpush1.msra.mxu0 0.0
  %1721 = vmatprep.subr.mxu0 0.0
  %1722 = vmatpush1.msra.mxu0 0.0
  %1723 = vmatprep.subr.mxu0 0.0
  %1724 = vmatpush1.msra.mxu0 0.0
  %1725 = vmatprep.subr.mxu0 0.0
  %1726 = vmatpush1.msra.mxu0 0.0
  %1727 = vmatprep.subr.mxu0 0.0
  %1728 = vmatpush1.msra.mxu0 0.0
  %1729 = vmatprep.subr.mxu0 0.0
  %1730 = vmatpush1.msra.mxu0 0.0
  %1731 = vmatprep.subr.mxu0 0.0
  %1732 = vmatpush1.msra.mxu0 0.0
  %1733 = vmatprep.subr.mxu0 0.0
  %1734 = vmatpush1.msra.mxu0 0.0
  %1735 = vmatprep.subr.mxu0 0.0
  %1736 = vmatpush1.msra.mxu0 0.0
  %1737 = vmatprep.subr.mxu0 0.0
  %1738 = vmatpush1.msra.mxu0 0.0
  %1739 = vmatprep.subr.mxu0 0.0
  %1740 = vmatpush1.msra.mxu0 0.0
  %1741 = vmatprep.subr.mxu0 0.0
  %1742 = vmatpush1.msra.mxu0 0.0
  %1743 = vmatprep.mubr.f32.mxu0 0.0
  %1744 = vmatmul.mubr.f32.gmra.mrb[0].mxu0 %v1677
  %v1745 = vpop.f32.mrb[0].mxu0
  %v1746 = vadd.f32 0.0, %v1745
  %v1747 = vpop.f32.mrb[0].mxu0
  %1748 = vdwg.mxu0
  %v1750 = vrot.slane %v1746, 4
  %v1752 = vadd.f32 %v247, %v1750
  %v1753 = vxor.u32 %v1752, 2147483648
  %v1754 = vmul.f32 %v1753, 1.442695
  %v1755 = vpow.pop %v1754
  %v1756 = vadd.f32 %v1755, 1.0
  %v1757 = vrcp.pop %v1756
  %v1758 = vmul.f32 1.0, %v1757
  %v1759 = vtanh.pop %v1752
  %v1761 = vrot.slane %v1549, 6
  %v1763 = vmul.f32 %v1758, %v1761
  %1765 = vrot.lane.b32.xlu0 %v1759, 64
  %v1766 = vpop.permute.xlu0 %1765
  %v1768 = vmul.f32 %v1758, %v1766
  %1770 = vrot.lane.b32.xlu0 %v1768, 32
  %v1771 = vpop.permute.xlu0 %1770
  %v1773 = vadd.f32 %v1763, %v1771
  %v1774 = vtanh.pop %v1773
  %1776 = vrot.lane.b32.xlu0 %v1774, 64
  %v1777 = vpop.permute.xlu0 %1776
  %v1779 = vmul.f32 %v1758, %v1777
  %v1780 = vrot.slane %v1661, 4
  %1781 = vrot.lane.b32.xlu0 %v1780, 32
  %v1782 = vpop.permute.xlu0 %1781
  %v1783 = vsel %vm342, %v1782, 0
  %1785 = vmatprep.subr.mxu0 0.0
  %1786 = vmatpush1.msra.mxu0 %v338
  %1787 = vmatprep.subr.mxu0 0.0
  %1788 = vmatpush1.msra.mxu0 %v339
  %1789 = vmatprep.subr.mxu0 0.0
  %1790 = vmatpush1.msra.mxu0 %v340
  %1791 = vmatprep.subr.mxu0 0.0
  %1792 = vmatpush1.msra.mxu0 %v341
  %1793 = vmatprep.subr.mxu0 0.0
  %1794 = vmatpush1.msra.mxu0 0.0
  %1795 = vmatprep.subr.mxu0 0.0
  %1796 = vmatpush1.msra.mxu0 0.0
  %1797 = vmatprep.subr.mxu0 0.0
  %1798 = vmatpush1.msra.mxu0 0.0
  %1799 = vmatprep.subr.mxu0 0.0
  %1800 = vmatpush1.msra.mxu0 0.0
  %1801 = vmatprep.subr.mxu0 0.0
  %1802 = vmatpush1.msra.mxu0 0.0
  %1803 = vmatprep.subr.mxu0 0.0
  %1804 = vmatpush1.msra.mxu0 0.0
  %1805 = vmatprep.subr.mxu0 0.0
  %1806 = vmatpush1.msra.mxu0 0.0
  %1807 = vmatprep.subr.mxu0 0.0
  %1808 = vmatpush1.msra.mxu0 0.0
  %1809 = vmatprep.subr.mxu0 0.0
  %1810 = vmatpush1.msra.mxu0 0.0
  %1811 = vmatprep.subr.mxu0 0.0
  %1812 = vmatpush1.msra.mxu0 0.0
  %1813 = vmatprep.subr.mxu0 0.0
  %1814 = vmatpush1.msra.mxu0 0.0
  %1815 = vmatprep.subr.mxu0 0.0
  %1816 = vmatpush1.msra.mxu0 0.0
  %1817 = vmatprep.subr.mxu0 0.0
  %1818 = vmatpush1.msra.mxu0 0.0
  %1819 = vmatprep.subr.mxu0 0.0
  %1820 = vmatpush1.msra.mxu0 0.0
  %1821 = vmatprep.subr.mxu0 0.0
  %1822 = vmatpush1.msra.mxu0 0.0
  %1823 = vmatprep.subr.mxu0 0.0
  %1824 = vmatpush1.msra.mxu0 0.0
  %1825 = vmatprep.subr.mxu0 0.0
  %1826 = vmatpush1.msra.mxu0 0.0
  %1827 = vmatprep.subr.mxu0 0.0
  %1828 = vmatpush1.msra.mxu0 0.0
  %1829 = vmatprep.subr.mxu0 0.0
  %1830 = vmatpush1.msra.mxu0 0.0
  %1831 = vmatprep.subr.mxu0 0.0
  %1832 = vmatpush1.msra.mxu0 0.0
  %1833 = vmatprep.subr.mxu0 0.0
  %1834 = vmatpush1.msra.mxu0 0.0
  %1835 = vmatprep.subr.mxu0 0.0
  %1836 = vmatpush1.msra.mxu0 0.0
  %1837 = vmatprep.subr.mxu0 0.0
  %1838 = vmatpush1.msra.mxu0 0.0
  %1839 = vmatprep.subr.mxu0 0.0
  %1840 = vmatpush1.msra.mxu0 0.0
  %1841 = vmatprep.subr.mxu0 0.0
  %1842 = vmatpush1.msra.mxu0 0.0
  %1843 = vmatprep.subr.mxu0 0.0
  %1844 = vmatpush1.msra.mxu0 0.0
  %1845 = vmatprep.subr.mxu0 0.0
  %1846 = vmatpush1.msra.mxu0 0.0
  %1847 = vmatprep.subr.mxu0 0.0
  %1848 = vmatpush1.msra.mxu0 0.0
  %1849 = vmatprep.mubr.f32.mxu0 0.0
  %1850 = vmatmul.mubr.f32.gmra.mrb[0].mxu0 %v1783
  %v1851 = vpop.f32.mrb[0].mxu0
  %v1852 = vadd.f32 0.0, %v1851
  %v1853 = vpop.f32.mrb[0].mxu0
  %1854 = vdwg.mxu0
  %v1856 = vrot.slane %v1852, 6
  %v1858 = vadd.f32 %v326, %v1856
  %v1859 = vxor.u32 %v1858, 2147483648
  %v1860 = vmul.f32 %v1859, 1.442695
  %v1861 = vpow.pop %v1860
  %v1862 = vadd.f32 %v1861, 1.0
  %v1863 = vrcp.pop %v1862
  %v1864 = vmul.f32 1.0, %v1863
  %v1865 = vtanh.pop %v1858
  %v1867 = vrot.slane %v1655, 2
  %v1869 = vmul.f32 %v1864, %v1867
  %1871 = vrot.lane.b32.xlu0 %v1865, 64
  %v1872 = vpop.permute.xlu0 %1871
  %v1874 = vmul.f32 %v1864, %v1872
  %1876 = vrot.lane.b32.xlu0 %v1874, 32
  %v1877 = vpop.permute.xlu0 %1876
  %v1879 = vadd.f32 %v1869, %v1877
  %v1880 = vtanh.pop %v1879
  %1882 = vrot.lane.b32.xlu0 %v1880, 64
  %v1883 = vpop.permute.xlu0 %1882
  %v1885 = vmul.f32 %v1864, %v1883
  %1887 = vrot.lane.b32.xlu0 %v1779, 32
  %v1888 = vpop.permute.xlu0 %1887
  %1890 = vst.msk [vmem:[#allocation2 + $0x2] sm:$0x10] %vm996, %v1888
  %1892 = vrot.lane.b32.xlu0 %v1885, 64
  %v1893 = vpop.permute.xlu0 %1892
  %1895 = vst.msk [vmem:[#allocation2 - $0x1] sm:$0x4] %vm1002, %v1893
  %1896 = vst.msk [vmem:[#allocation2 + $0x9] sm:$0x20] %vm1004, %v1888
  %1897 = vst.msk [vmem:[#allocation2 + $0x6] sm:$0x8] %vm1006, %v1893
  %v1898 = vrot.slane %v1779, 4
  %1899 = vrot.lane.b32.xlu0 %v1898, 32
  %v1900 = vpop.permute.xlu0 %1899
  %v1901 = vsel %vm342, %v1900, 0
  %1903 = vmatprep.subr.mxu0 0.0
  %1904 = vmatpush1.msra.mxu0 %v334
  %1905 = vmatprep.subr.mxu0 0.0
  %1906 = vmatpush1.msra.mxu0 %v335
  %1907 = vmatprep.subr.mxu0 0.0
  %1908 = vmatpush1.msra.mxu0 %v336
  %1909 = vmatprep.subr.mxu0 0.0
  %1910 = vmatpush1.msra.mxu0 %v337
  %1911 = vmatprep.subr.mxu0 0.0
  %1912 = vmatpush1.msra.mxu0 0.0
  %1913 = vmatprep.subr.mxu0 0.0
  %1914 = vmatpush1.msra.mxu0 0.0
  %1915 = vmatprep.subr.mxu0 0.0
  %1916 = vmatpush1.msra.mxu0 0.0
  %1917 = vmatprep.subr.mxu0 0.0
  %1918 = vmatpush1.msra.mxu0 0.0
  %1919 = vmatprep.subr.mxu0 0.0
  %1920 = vmatpush1.msra.mxu0 0.0
  %1921 = vmatprep.subr.mxu0 0.0
  %1922 = vmatpush1.msra.mxu0 0.0
  %1923 = vmatprep.subr.mxu0 0.0
  %1924 = vmatpush1.msra.mxu0 0.0
  %1925 = vmatprep.subr.mxu0 0.0
  %1926 = vmatpush1.msra.mxu0 0.0
  %1927 = vmatprep.subr.mxu0 0.0
  %1928 = vmatpush1.msra.mxu0 0.0
  %1929 = vmatprep.subr.mxu0 0.0
  %1930 = vmatpush1.msra.mxu0 0.0
  %1931 = vmatprep.subr.mxu0 0.0
  %1932 = vmatpush1.msra.mxu0 0.0
  %1933 = vmatprep.subr.mxu0 0.0
  %1934 = vmatpush1.msra.mxu0 0.0
  %1935 = vmatprep.subr.mxu0 0.0
  %1936 = vmatpush1.msra.mxu0 0.0
  %1937 = vmatprep.subr.mxu0 0.0
  %1938 = vmatpush1.msra.mxu0 0.0
  %1939 = vmatprep.subr.mxu0 0.0
  %1940 = vmatpush1.msra.mxu0 0.0
  %1941 = vmatprep.subr.mxu0 0.0
  %1942 = vmatpush1.msra.mxu0 0.0
  %1943 = vmatprep.subr.mxu0 0.0
  %1944 = vmatpush1.msra.mxu0 0.0
  %1945 = vmatprep.subr.mxu0 0.0
  %1946 = vmatpush1.msra.mxu0 0.0
  %1947 = vmatprep.subr.mxu0 0.0
  %1948 = vmatpush1.msra.mxu0 0.0
  %1949 = vmatprep.subr.mxu0 0.0
  %1950 = vmatpush1.msra.mxu0 0.0
  %1951 = vmatprep.subr.mxu0 0.0
  %1952 = vmatpush1.msra.mxu0 0.0
  %1953 = vmatprep.subr.mxu0 0.0
  %1954 = vmatpush1.msra.mxu0 0.0
  %1955 = vmatprep.subr.mxu0 0.0
  %1956 = vmatpush1.msra.mxu0 0.0
  %1957 = vmatprep.subr.mxu0 0.0
  %1958 = vmatpush1.msra.mxu0 0.0
  %1959 = vmatprep.subr.mxu0 0.0
  %1960 = vmatpush1.msra.mxu0 0.0
  %1961 = vmatprep.subr.mxu0 0.0
  %1962 = vmatpush1.msra.mxu0 0.0
  %1963 = vmatprep.subr.mxu0 0.0
  %1964 = vmatpush1.msra.mxu0 0.0
  %1965 = vmatprep.subr.mxu0 0.0
  %1966 = vmatpush1.msra.mxu0 0.0
  %1967 = vmatprep.mubr.f32.mxu0 0.0
  %1968 = vmatmul.mubr.f32.gmra.mrb[0].mxu0 %v1901
  %v1969 = vpop.f32.mrb[0].mxu0
  %v1970 = vadd.f32 0.0, %v1969
  %v1971 = vpop.f32.mrb[0].mxu0
  %1972 = vdwg.mxu0
  %v1974 = vrot.slane %v1970, 2
  %v1976 = vadd.f32 %v247, %v1974
  %v1977 = vxor.u32 %v1976, 2147483648
  %v1978 = vmul.f32 %v1977, 1.442695
  %v1979 = vpow.pop %v1978
  %v1980 = vadd.f32 %v1979, 1.0
  %v1981 = vrcp.pop %v1980
  %v1982 = vmul.f32 1.0, %v1981
  %v1983 = vtanh.pop %v1976
  %v1985 = vrot.slane %v1773, 6
  %v1987 = vmul.f32 %v1982, %v1985
  %1989 = vrot.lane.b32.xlu0 %v1983, 64
  %v1990 = vpop.permute.xlu0 %1989
  %v1992 = vmul.f32 %v1982, %v1990
  %1994 = vrot.lane.b32.xlu0 %v1992, 32
  %v1995 = vpop.permute.xlu0 %1994
  %v1997 = vadd.f32 %v1987, %v1995
  %v1998 = vtanh.pop %v1997
  %2000 = vrot.lane.b32.xlu0 %v1998, 64
  %v2001 = vpop.permute.xlu0 %2000
  %v2003 = vmul.f32 %v1982, %v2001
  %v2004 = vrot.slane %v1885, 2
  %2005 = vrot.lane.b32.xlu0 %v2004, 32
  %v2006 = vpop.permute.xlu0 %2005
  %v2007 = vsel %vm342, %v2006, 0
  %2009 = vmatprep.subr.mxu0 0.0
  %2010 = vmatpush1.msra.mxu0 %v338
  %2011 = vmatprep.subr.mxu0 0.0
  %2012 = vmatpush1.msra.mxu0 %v339
  %2013 = vmatprep.subr.mxu0 0.0
  %2014 = vmatpush1.msra.mxu0 %v340
  %2015 = vmatprep.subr.mxu0 0.0
  %2016 = vmatpush1.msra.mxu0 %v341
  %2017 = vmatprep.subr.mxu0 0.0
  %2018 = vmatpush1.msra.mxu0 0.0
  %2019 = vmatprep.subr.mxu0 0.0
  %2020 = vmatpush1.msra.mxu0 0.0
  %2021 = vmatprep.subr.mxu0 0.0
  %2022 = vmatpush1.msra.mxu0 0.0
  %2023 = vmatprep.subr.mxu0 0.0
  %2024 = vmatpush1.msra.mxu0 0.0
  %2025 = vmatprep.subr.mxu0 0.0
  %2026 = vmatpush1.msra.mxu0 0.0
  %2027 = vmatprep.subr.mxu0 0.0
  %2028 = vmatpush1.msra.mxu0 0.0
  %2029 = vmatprep.subr.mxu0 0.0
  %2030 = vmatpush1.msra.mxu0 0.0
  %2031 = vmatprep.subr.mxu0 0.0
  %2032 = vmatpush1.msra.mxu0 0.0
  %2033 = vmatprep.subr.mxu0 0.0
  %2034 = vmatpush1.msra.mxu0 0.0
  %2035 = vmatprep.subr.mxu0 0.0
  %2036 = vmatpush1.msra.mxu0 0.0
  %2037 = vmatprep.subr.mxu0 0.0
  %2038 = vmatpush1.msra.mxu0 0.0
  %2039 = vmatprep.subr.mxu0 0.0
  %2040 = vmatpush1.msra.mxu0 0.0
  %2041 = vmatprep.subr.mxu0 0.0
  %2042 = vmatpush1.msra.mxu0 0.0
  %2043 = vmatprep.subr.mxu0 0.0
  %2044 = vmatpush1.msra.mxu0 0.0
  %2045 = vmatprep.subr.mxu0 0.0
  %2046 = vmatpush1.msra.mxu0 0.0
  %2047 = vmatprep.subr.mxu0 0.0
  %2048 = vmatpush1.msra.mxu0 0.0
  %2049 = vmatprep.subr.mxu0 0.0
  %2050 = vmatpush1.msra.mxu0 0.0
  %2051 = vmatprep.subr.mxu0 0.0
  %2052 = vmatpush1.msra.mxu0 0.0
  %2053 = vmatprep.subr.mxu0 0.0
  %2054 = vmatpush1.msra.mxu0 0.0
  %2055 = vmatprep.subr.mxu0 0.0
  %2056 = vmatpush1.msra.mxu0 0.0
  %2057 = vmatprep.subr.mxu0 0.0
  %2058 = vmatpush1.msra.mxu0 0.0
  %2059 = vmatprep.subr.mxu0 0.0
  %2060 = vmatpush1.msra.mxu0 0.0
  %2061 = vmatprep.subr.mxu0 0.0
  %2062 = vmatpush1.msra.mxu0 0.0
  %2063 = vmatprep.subr.mxu0 0.0
  %2064 = vmatpush1.msra.mxu0 0.0
  %2065 = vmatprep.subr.mxu0 0.0
  %2066 = vmatpush1.msra.mxu0 0.0
  %2067 = vmatprep.subr.mxu0 0.0
  %2068 = vmatpush1.msra.mxu0 0.0
  %2069 = vmatprep.subr.mxu0 0.0
  %2070 = vmatpush1.msra.mxu0 0.0
  %2071 = vmatprep.subr.mxu0 0.0
  %2072 = vmatpush1.msra.mxu0 0.0
  %2073 = vmatprep.mubr.f32.mxu0 0.0
  %2074 = vmatmul.mubr.f32.gmra.mrb[0].mxu0 %v2007
  %v2075 = vpop.f32.mrb[0].mxu0
  %v2076 = vadd.f32 0.0, %v2075
  %v2077 = vpop.f32.mrb[0].mxu0
  %2078 = vdwg.mxu0
  %v2079 = vadd.f32 %v326, %v2076
  %v2080 = vxor.u32 %v2079, 2147483648
  %v2081 = vmul.f32 %v2080, 1.442695
  %v2082 = vpow.pop %v2081
  %v2083 = vadd.f32 %v2082, 1.0
  %v2084 = vrcp.pop %v2083
  %v2085 = vmul.f32 1.0, %v2084
  %v2086 = vtanh.pop %v2079
  %v2088 = vrot.slane %v1879, 2
  %v2090 = vmul.f32 %v2085, %v2088
  %2092 = vrot.lane.b32.xlu0 %v2086, 64
  %v2093 = vpop.permute.xlu0 %2092
  %v2095 = vmul.f32 %v2085, %v2093
  %2097 = vrot.lane.b32.xlu0 %v2095, 32
  %v2098 = vpop.permute.xlu0 %2097
  %v2100 = vadd.f32 %v2090, %v2098
  %v2101 = vtanh.pop %v2100
  %2103 = vrot.lane.b32.xlu0 %v2101, 64
  %v2104 = vpop.permute.xlu0 %2103
  %v2106 = vmul.f32 %v2085, %v2104
  %2108 = vrot.lane.b32.xlu0 %v2003, 32
  %v2109 = vpop.permute.xlu0 %2108
  %2111 = vst.msk [vmem:[#allocation2 + $0x1] sm:$0x40] %vm1221, %v2109
  %2113 = vrot.lane.b32.xlu0 %v2106, 64
  %v2114 = vpop.permute.xlu0 %2113
  %2116 = vst.msk [vmem:[#allocation2] sm:$0x1] %vm1227, %v2114
  %2117 = vst.msk [vmem:[#allocation2 + $0x8] sm:$0x80] %vm1229, %v2109
  %2118 = vst.msk [vmem:[#allocation2 + $0x7] sm:$0x2] %vm1231, %v2114
  %v2119 = vld [vmem:[#allocation2] sm:$0xff]
  %v2120 = vld [vmem:[#allocation2 + $0x8] sm:$0xff]
  %v2121 = vld [vmem:[%s9] sm:$0xff]
  %v2122 = vld [vmem:[%s9 + $0x8] sm:$0xff]
  %v2123 = vld [vmem:[%s9 + $0x10] sm:$0xff]
  %v2124 = vld [vmem:[%s9 + $0x18] sm:$0xff]
  %v2125 = vld [vmem:[%s9 + $0x20] sm:$0xff]
  %v2126 = vld [vmem:[%s9 + $0x28] sm:$0xff]
  %v2127 = vld [vmem:[%s9 + $0x30] sm:$0xff]
  %v2128 = vld [vmem:[%s9 + $0x38] sm:$0xff]
  %vm2129 = vcmask 523264
  %v2131 = vsel %vm2129, %v2119, 0
  %v2134 = vsel %vm2129, %v2120, 0
  %2136 = vmatprep.subr.mxu0 0.0
  %2137 = vmatpush1.msra.mxu0 %v2121
  %2138 = vmatprep.subr.mxu0 0.0
  %2139 = vmatpush1.msra.mxu0 %v2122
  %2140 = vmatprep.subr.mxu0 0.0
  %2141 = vmatpush1.msra.mxu0 %v2123
  %2142 = vmatprep.subr.mxu0 0.0
  %2143 = vmatpush1.msra.mxu0 %v2124
  %2144 = vmatprep.subr.mxu0 0.0
  %2145 = vmatpush1.msra.mxu0 %v2125
  %2146 = vmatprep.subr.mxu0 0.0
  %2147 = vmatpush1.msra.mxu0 %v2126
  %2148 = vmatprep.subr.mxu0 0.0
  %2149 = vmatpush1.msra.mxu0 %v2127
  %2150 = vmatprep.subr.mxu0 0.0
  %2151 = vmatpush1.msra.mxu0 %v2128
  %2152 = vmatprep.subr.mxu0 0.0
  %2153 = vmatpush1.msra.mxu0 0.0
  %2154 = vmatprep.subr.mxu0 0.0
  %2155 = vmatpush1.msra.mxu0 0.0
  %2156 = vmatprep.subr.mxu0 0.0
  %2157 = vmatpush1.msra.mxu0 0.0
  %2158 = vmatprep.subr.mxu0 0.0
  %2159 = vmatpush1.msra.mxu0 0.0
  %2160 = vmatprep.subr.mxu0 0.0
  %2161 = vmatpush1.msra.mxu0 0.0
  %2162 = vmatprep.subr.mxu0 0.0
  %2163 = vmatpush1.msra.mxu0 0.0
  %2164 = vmatprep.subr.mxu0 0.0
  %2165 = vmatpush1.msra.mxu0 0.0
  %2166 = vmatprep.subr.mxu0 0.0
  %2167 = vmatpush1.msra.mxu0 0.0
  %2168 = vmatprep.subr.mxu0 0.0
  %2169 = vmatpush1.msra.mxu0 0.0
  %2170 = vmatprep.subr.mxu0 0.0
  %2171 = vmatpush1.msra.mxu0 0.0
  %2172 = vmatprep.subr.mxu0 0.0
  %2173 = vmatpush1.msra.mxu0 0.0
  %2174 = vmatprep.subr.mxu0 0.0
  %2175 = vmatpush1.msra.mxu0 0.0
  %2176 = vmatprep.subr.mxu0 0.0
  %2177 = vmatpush1.msra.mxu0 0.0
  %2178 = vmatprep.subr.mxu0 0.0
  %2179 = vmatpush1.msra.mxu0 0.0
  %2180 = vmatprep.subr.mxu0 0.0
  %2181 = vmatpush1.msra.mxu0 0.0
  %2182 = vmatprep.subr.mxu0 0.0
  %2183 = vmatpush1.msra.mxu0 0.0
  %2184 = vmatprep.subr.mxu0 0.0
  %2185 = vmatpush1.msra.mxu0 0.0
  %2186 = vmatprep.subr.mxu0 0.0
  %2187 = vmatpush1.msra.mxu0 0.0
  %2188 = vmatprep.subr.mxu0 0.0
  %2189 = vmatpush1.msra.mxu0 0.0
  %2190 = vmatprep.subr.mxu0 0.0
  %2191 = vmatpush1.msra.mxu0 0.0
  %2192 = vmatprep.subr.mxu0 0.0
  %2193 = vmatpush1.msra.mxu0 0.0
  %2194 = vmatprep.subr.mxu0 0.0
  %2195 = vmatpush1.msra.mxu0 0.0
  %2196 = vmatprep.subr.mxu0 0.0
  %2197 = vmatpush1.msra.mxu0 0.0
  %2198 = vmatprep.subr.mxu0 0.0
  %2199 = vmatpush1.msra.mxu0 0.0
  %2200 = vmatprep.mubr.f32.mxu0 0.0
  %2201 = vmatmul.mubr.f32.gmra.mrb[0].mxu0 %v2131
  %v2202 = vpop.f32.mrb[0].mxu0
  %v2203 = vadd.f32 0.0, %v2202
  %v2204 = vpop.f32.mrb[0].mxu0
  %2205 = vmatprep.mubr.f32.mxu0 0.0
  %2206 = vmatmul.mubr.f32.gmra.mrb[0].mxu0 %v2134
  %v2207 = vpop.f32.mrb[0].mxu0
  %v2208 = vadd.f32 0.0, %v2207
  %v2209 = vpop.f32.mrb[0].mxu0
  %2210 = vdwg.mxu0
  %v2211 = vtanh.pop %v2203
  %v2212 = vtanh.pop %v2208
  %v2213 = vld [vmem:[%s10] sm:$0xf]
  %v2215 = vsel %vm168, %v2213, 0
  %v2218 = vsel %vm168, %v2211, 0
  %v2221 = vsel %vm168, %v2212, 0
  %2223 = vmatprep.subr.mxu0 0.0
  %2224 = vmatpush1.xpose.msra.mxu0 %v2218
  %2225 = vmatprep.subr.mxu0 0.0
  %2226 = vmatpush1.xpose.msra.mxu0 %v2221
  %2227 = vmatprep.subr.mxu0 0.0
  %2228 = vmatpush1.xpose.msra.mxu0 0.0
  %2229 = vmatprep.subr.mxu0 0.0
  %2230 = vmatpush1.xpose.msra.mxu0 0.0
  %2231 = vmatprep.subr.mxu0 0.0
  %2232 = vmatpush1.xpose.msra.mxu0 0.0
  %2233 = vmatprep.subr.mxu0 0.0
  %2234 = vmatpush1.xpose.msra.mxu0 0.0
  %2235 = vmatprep.subr.mxu0 0.0
  %2236 = vmatpush1.xpose.msra.mxu0 0.0
  %2237 = vmatprep.subr.mxu0 0.0
  %2238 = vmatpush1.xpose.msra.mxu0 0.0
  %2239 = vmatprep.subr.mxu0 0.0
  %2240 = vmatpush1.xpose.msra.mxu0 0.0
  %2241 = vmatprep.subr.mxu0 0.0
  %2242 = vmatpush1.xpose.msra.mxu0 0.0
  %2243 = vmatprep.subr.mxu0 0.0
  %2244 = vmatpush1.xpose.msra.mxu0 0.0
  %2245 = vmatprep.subr.mxu0 0.0
  %2246 = vmatpush1.xpose.msra.mxu0 0.0
  %2247 = vmatprep.subr.mxu0 0.0
  %2248 = vmatpush1.xpose.msra.mxu0 0.0
  %2249 = vmatprep.subr.mxu0 0.0
  %2250 = vmatpush1.xpose.msra.mxu0 0.0
  %2251 = vmatprep.subr.mxu0 0.0
  %2252 = vmatpush1.xpose.msra.mxu0 0.0
  %2253 = vmatprep.subr.mxu0 0.0
  %2254 = vmatpush1.xpose.msra.mxu0 0.0
  %2255 = vmatprep.subr.mxu0 0.0
  %2256 = vmatpush1.xpose.msra.mxu0 0.0
  %2257 = vmatprep.subr.mxu0 0.0
  %2258 = vmatpush1.xpose.msra.mxu0 0.0
  %2259 = vmatprep.subr.mxu0 0.0
  %2260 = vmatpush1.xpose.msra.mxu0 0.0
  %2261 = vmatprep.subr.mxu0 0.0
  %2262 = vmatpush1.xpose.msra.mxu0 0.0
  %2263 = vmatprep.subr.mxu0 0.0
  %2264 = vmatpush1.xpose.msra.mxu0 0.0
  %2265 = vmatprep.subr.mxu0 0.0
  %2266 = vmatpush1.xpose.msra.mxu0 0.0
  %2267 = vmatprep.subr.mxu0 0.0
  %2268 = vmatpush1.xpose.msra.mxu0 0.0
  %2269 = vmatprep.subr.mxu0 0.0
  %2270 = vmatpush1.xpose.msra.mxu0 0.0
  %2271 = vmatprep.subr.mxu0 0.0
  %2272 = vmatpush1.xpose.msra.mxu0 0.0
  %2273 = vmatprep.subr.mxu0 0.0
  %2274 = vmatpush1.xpose.msra.mxu0 0.0
  %2275 = vmatprep.subr.mxu0 0.0
  %2276 = vmatpush1.xpose.msra.mxu0 0.0
  %2277 = vmatprep.subr.mxu0 0.0
  %2278 = vmatpush1.xpose.msra.mxu0 0.0
  %2279 = vmatprep.subr.mxu0 0.0
  %2280 = vmatpush1.xpose.msra.mxu0 0.0
  %2281 = vmatprep.subr.mxu0 0.0
  %2282 = vmatpush1.xpose.msra.mxu0 0.0
  %2283 = vmatprep.subr.mxu0 0.0
  %2284 = vmatpush1.xpose.msra.mxu0 0.0
  %2285 = vmatprep.subr.mxu0 0.0
  %2286 = vmatpush1.xpose.msra.mxu0 0.0
  %2287 = vmatprep.mubr.f32.mxu0 0.0
  %2288 = vmatmul.mubr.f32.gmra.mrb[0].mxu0 %v2215
  %v2289 = vpop.f32.mrb[0].mxu0
  %v2290 = vadd.f32 0.0, %v2289
  %v2291 = vpop.f32.mrb[0].mxu0
  %2292 = vdwg.mxu0
  %v2293 = vld [vmem:[%s1] sm:$0x1]
  %v2294 = vlaneseq
  %v2295 = vshrl.u32 %v2294, 7
  %v2296 = vsub.s32 0, %v2295
  %v2297 = vrot.slane %v2293, %v2296
  %v2298 = vadd.f32 %v2290, %v2297
  %vm2299 = vcmask 60416
  %v2300 = vsel %vm2299, %v2298, -inf
  %2301 = vmax.xlane.f32.xlu0 %v2300
  %v2302 = vpop.xlane.xlu0 %2301
  %v2303 = vsub.f32 %v2298, %v2302
  %v2304 = vmul.f32 %v2303, 1.442695
  %v2305 = vpow.pop %v2304
  %v2306 = vsel %vm2299, %v2305, 0.0
  %2307 = vadd.xlane.f32.xlu0 %v2306
  %v2308 = vpop.xlane.xlu0 %2307
  %v2309 = vrcp.pop %v2308
  %v2310 = vmul.f32 %v2305, %v2309
  %vm2311 = vcmask 64512
  %v2313 = vsel %vm2311, %v2310, 0
  %2315 = vmatprep.subr.mxu0 0.0
  %2316 = vmatpush1.msra.mxu0 %v2119
  %2317 = vmatprep.subr.mxu0 0.0
  %2318 = vmatpush1.msra.mxu0 0.0
  %2319 = vmatprep.subr.mxu0 0.0
  %2320 = vmatpush1.msra.mxu0 0.0
  %2321 = vmatprep.subr.mxu0 0.0
  %2322 = vmatpush1.msra.mxu0 0.0
  %2323 = vmatprep.subr.mxu0 0.0
  %2324 = vmatpush1.msra.mxu0 0.0
  %2325 = vmatprep.subr.mxu0 0.0
  %2326 = vmatpush1.msra.mxu0 0.0
  %2327 = vmatprep.subr.mxu0 0.0
  %2328 = vmatpush1.msra.mxu0 0.0
  %2329 = vmatprep.subr.mxu0 0.0
  %2330 = vmatpush1.msra.mxu0 0.0
  %2331 = vmatprep.subr.mxu0 0.0
  %2332 = vmatpush1.msra.mxu0 0.0
  %2333 = vmatprep.subr.mxu0 0.0
  %2334 = vmatpush1.msra.mxu0 0.0
  %2335 = vmatprep.subr.mxu0 0.0
  %2336 = vmatpush1.msra.mxu0 0.0
  %2337 = vmatprep.subr.mxu0 0.0
  %2338 = vmatpush1.msra.mxu0 0.0
  %2339 = vmatprep.subr.mxu0 0.0
  %2340 = vmatpush1.msra.mxu0 0.0
  %2341 = vmatprep.subr.mxu0 0.0
  %2342 = vmatpush1.msra.mxu0 0.0
  %2343 = vmatprep.subr.mxu0 0.0
  %2344 = vmatpush1.msra.mxu0 0.0
  %2345 = vmatprep.subr.mxu0 0.0
  %2346 = vmatpush1.msra.mxu0 0.0
  %2347 = vmatprep.subr.mxu0 0.0
  %2348 = vmatpush1.msra.mxu0 0.0
  %2349 = vmatprep.subr.mxu0 0.0
  %2350 = vmatpush1.msra.mxu0 0.0
  %2351 = vmatprep.subr.mxu0 0.0
  %2352 = vmatpush1.msra.mxu0 0.0
  %2353 = vmatprep.subr.mxu0 0.0
  %2354 = vmatpush1.msra.mxu0 0.0
  %2355 = vmatprep.subr.mxu0 0.0
  %2356 = vmatpush1.msra.mxu0 0.0
  %2357 = vmatprep.subr.mxu0 0.0
  %2358 = vmatpush1.msra.mxu0 0.0
  %2359 = vmatprep.subr.mxu0 0.0
  %2360 = vmatpush1.msra.mxu0 0.0
  %2361 = vmatprep.subr.mxu0 0.0
  %2362 = vmatpush1.msra.mxu0 0.0
  %2363 = vmatprep.subr.mxu0 0.0
  %2364 = vmatpush1.msra.mxu0 0.0
  %2365 = vmatprep.subr.mxu0 0.0
  %2366 = vmatpush1.msra.mxu0 0.0
  %2367 = vmatprep.subr.mxu0 0.0
  %2368 = vmatpush1.msra.mxu0 0.0
  %2369 = vmatprep.subr.mxu0 0.0
  %2370 = vmatpush1.msra.mxu0 0.0
  %2371 = vmatprep.subr.mxu0 0.0
  %2372 = vmatpush1.msra.mxu0 0.0
  %2373 = vmatprep.subr.mxu0 0.0
  %2374 = vmatpush1.msra.mxu0 0.0
  %2375 = vmatprep.subr.mxu0 0.0
  %2376 = vmatpush1.msra.mxu0 0.0
  %2377 = vmatprep.subr.mxu0 0.0
  %2378 = vmatpush1.msra.mxu0 0.0
  %2379 = vmatprep.mubr.f32.mxu0 0.0
  %2380 = vmatmul.mubr.f32.gmra.mrb[0].mxu0 %v2313
  %v2381 = vpop.f32.mrb[0].mxu0
  %v2382 = vadd.f32 0.0, %v2381
  %v2383 = vpop.f32.mrb[0].mxu0
  %2384 = vdwg.mxu0
  %v2386 = vrot.slane %v2382, 1
  %2387 = vrot.lane.b32.xlu0 %v2386, 64
  %v2388 = vpop.permute.xlu0 %2387
  %v2390 = vrot.slane %v2382, 2
  %v2392 = vrot.slane %v2382, 3
  %2393 = vrot.lane.b32.xlu0 %v2392, 64
  %v2394 = vpop.permute.xlu0 %2393
  %v2396 = vsel %vm2129, %v2382, %v2388
  %v2397 = vsel %vm2129, %v2390, %v2394
  %v2398 = vld [vmem:[%s1 + $0x1] sm:$0x1]
  %v2399 = vlaneseq
  %v2400 = vshrl.u32 %v2399, 7
  %v2401 = vsub.s32 0, %v2400
  %v2402 = vrot.slane %v2398, %v2401
  %2404 = vrot.lane.b32.xlu0 %v2402, 8
  %v2405 = vpop.permute.xlu0 %2404
  %v2407 = vadd.f32 %v2290, %v2405
  %vm2408 = vcmask 126016
  %v2409 = vsel %vm2408, %v2407, -inf
  %2410 = vmax.xlane.f32.xlu0 %v2409
  %v2411 = vpop.xlane.xlu0 %2410
  %v2412 = vsub.f32 %v2407, %v2411
  %v2413 = vmul.f32 %v2412, 1.442695
  %v2414 = vpow.pop %v2413
  %2416 = vrot.lane.b32.xlu0 %v2414, 120
  %v2417 = vpop.permute.xlu0 %2416
  %v2419 = vsel %vm2299, %v2417, 0.0
  %2420 = vadd.xlane.f32.xlu0 %v2419
  %v2421 = vpop.xlane.xlu0 %2420
  %v2422 = vrcp.pop %v2421
  %v2423 = vmul.f32 %v2414, %v2422
  %2425 = vrot.lane.b32.xlu0 %v2423, 120
  %v2426 = vpop.permute.xlu0 %2425
  %v2427 = vsel %vm2311, %v2426, 0
  %2429 = vmatprep.subr.mxu0 0.0
  %2430 = vmatpush1.msra.mxu0 %v2120
  %2431 = vmatprep.subr.mxu0 0.0
  %2432 = vmatpush1.msra.mxu0 0.0
  %2433 = vmatprep.subr.mxu0 0.0
  %2434 = vmatpush1.msra.mxu0 0.0
  %2435 = vmatprep.subr.mxu0 0.0
  %2436 = vmatpush1.msra.mxu0 0.0
  %2437 = vmatprep.subr.mxu0 0.0
  %2438 = vmatpush1.msra.mxu0 0.0
  %2439 = vmatprep.subr.mxu0 0.0
  %2440 = vmatpush1.msra.mxu0 0.0
  %2441 = vmatprep.subr.mxu0 0.0
  %2442 = vmatpush1.msra.mxu0 0.0
  %2443 = vmatprep.subr.mxu0 0.0
  %2444 = vmatpush1.msra.mxu0 0.0
  %2445 = vmatprep.subr.mxu0 0.0
  %2446 = vmatpush1.msra.mxu0 0.0
  %2447 = vmatprep.subr.mxu0 0.0
  %2448 = vmatpush1.msra.mxu0 0.0
  %2449 = vmatprep.subr.mxu0 0.0
  %2450 = vmatpush1.msra.mxu0 0.0
  %2451 = vmatprep.subr.mxu0 0.0
  %2452 = vmatpush1.msra.mxu0 0.0
  %2453 = vmatprep.subr.mxu0 0.0
  %2454 = vmatpush1.msra.mxu0 0.0
  %2455 = vmatprep.subr.mxu0 0.0
  %2456 = vmatpush1.msra.mxu0 0.0
  %2457 = vmatprep.subr.mxu0 0.0
  %2458 = vmatpush1.msra.mxu0 0.0
  %2459 = vmatprep.subr.mxu0 0.0
  %2460 = vmatpush1.msra.mxu0 0.0
  %2461 = vmatprep.subr.mxu0 0.0
  %2462 = vmatpush1.msra.mxu0 0.0
  %2463 = vmatprep.subr.mxu0 0.0
  %2464 = vmatpush1.msra.mxu0 0.0
  %2465 = vmatprep.subr.mxu0 0.0
  %2466 = vmatpush1.msra.mxu0 0.0
  %2467 = vmatprep.subr.mxu0 0.0
  %2468 = vmatpush1.msra.mxu0 0.0
  %2469 = vmatprep.subr.mxu0 0.0
  %2470 = vmatpush1.msra.mxu0 0.0
  %2471 = vmatprep.subr.mxu0 0.0
  %2472 = vmatpush1.msra.mxu0 0.0
  %2473 = vmatprep.subr.mxu0 0.0
  %2474 = vmatpush1.msra.mxu0 0.0
  %2475 = vmatprep.subr.mxu0 0.0
  %2476 = vmatpush1.msra.mxu0 0.0
  %2477 = vmatprep.subr.mxu0 0.0
  %2478 = vmatpush1.msra.mxu0 0.0
  %2479 = vmatprep.subr.mxu0 0.0
  %2480 = vmatpush1.msra.mxu0 0.0
  %2481 = vmatprep.subr.mxu0 0.0
  %2482 = vmatpush1.msra.mxu0 0.0
  %2483 = vmatprep.subr.mxu0 0.0
  %2484 = vmatpush1.msra.mxu0 0.0
  %2485 = vmatprep.subr.mxu0 0.0
  %2486 = vmatpush1.msra.mxu0 0.0
  %2487 = vmatprep.subr.mxu0 0.0
  %2488 = vmatpush1.msra.mxu0 0.0
  %2489 = vmatprep.subr.mxu0 0.0
  %2490 = vmatpush1.msra.mxu0 0.0
  %2491 = vmatprep.subr.mxu0 0.0
  %2492 = vmatpush1.msra.mxu0 0.0
  %2493 = vmatprep.mubr.f32.mxu0 0.0
  %2494 = vmatmul.mubr.f32.gmra.mrb[0].mxu0 %v2427
  %v2495 = vpop.f32.mrb[0].mxu0
  %v2496 = vadd.f32 0.0, %v2495
  %v2497 = vpop.f32.mrb[0].mxu0
  %2498 = vdwg.mxu0
  %v2500 = vrot.slane %v2496, 1
  %2501 = vrot.lane.b32.xlu0 %v2500, 64
  %v2502 = vpop.permute.xlu0 %2501
  %v2504 = vrot.slane %v2496, 2
  %v2506 = vrot.slane %v2496, 3
  %2507 = vrot.lane.b32.xlu0 %v2506, 64
  %v2508 = vpop.permute.xlu0 %2507
  %v2510 = vsel %vm2129, %v2496, %v2502
  %v2511 = vsel %vm2129, %v2504, %v2508
  %v2512 = vrot.slane %v2423, 4
  %2513 = vrot.lane.b32.xlu0 %v2512, 120
  %v2514 = vpop.permute.xlu0 %2513
  %vm2516 = vcmask 1043456
  %v2517 = vsel %vm2516, %v2310, %v2514
  %v2520 = vrot.slane %v2510, 7
  %v2521 = vrot.slane %v2511, 7
  %vm2524 = vcmask 1040384
  %v2525 = vsel %vm2524, %v2396, %v2520
  %v2526 = vsel %vm2524, %v2397, %v2521
  %v2527 = vld [vmem:[%s11] sm:$0xff]
  %v2528 = vld [vmem:[%s11 + $0x8] sm:$0xff]
  %v2529 = vld [vmem:[%s11 + $0x10] sm:$0xff]
  %v2530 = vld [vmem:[%s11 + $0x18] sm:$0xff]
  %v2531 = vld [vmem:[%s11 + $0x20] sm:$0xff]
  %v2532 = vld [vmem:[%s11 + $0x28] sm:$0xff]
  %v2533 = vld [vmem:[%s11 + $0x30] sm:$0xff]
  %v2534 = vld [vmem:[%s11 + $0x38] sm:$0xff]
  %v2535 = vld [vmem:[%s11 + $0x40] sm:$0xff]
  %v2536 = vld [vmem:[%s11 + $0x48] sm:$0xff]
  %v2537 = vld [vmem:[%s11 + $0x50] sm:$0xff]
  %v2538 = vld [vmem:[%s11 + $0x58] sm:$0xff]
  %v2539 = vld [vmem:[%s11 + $0x60] sm:$0xff]
  %v2540 = vld [vmem:[%s11 + $0x68] sm:$0xff]
  %v2541 = vld [vmem:[%s11 + $0x70] sm:$0xff]
  %v2542 = vld [vmem:[%s11 + $0x78] sm:$0xff]
  %v2543 = vld [vmem:[%s11 + $0x80] sm:$0xff]
  %v2544 = vld [vmem:[%s11 + $0x88] sm:$0xff]
  %v2545 = vld [vmem:[%s11 + $0x90] sm:$0xff]
  %v2546 = vld [vmem:[%s11 + $0x98] sm:$0xff]
  %v2547 = vld [vmem:[%s11 + $0xa0] sm:$0xff]
  %v2548 = vld [vmem:[%s11 + $0xa8] sm:$0xff]
  %v2549 = vld [vmem:[%s11 + $0xb0] sm:$0xff]
  %v2550 = vld [vmem:[%s11 + $0xb8] sm:$0xff]
  %v2551 = vld [vmem:[%s11 + $0xc0] sm:$0xff]
  %v2552 = vld [vmem:[%s11 + $0xc8] sm:$0xff]
  %v2553 = vld [vmem:[%s11 + $0xd0] sm:$0xff]
  %v2554 = vld [vmem:[%s11 + $0xd8] sm:$0xff]
  %v2555 = vld [vmem:[%s11 + $0xe0] sm:$0xff]
  %v2556 = vld [vmem:[%s11 + $0xe8] sm:$0xff]
  %v2557 = vld [vmem:[%s11 + $0xf0] sm:$0xff]
  %v2558 = vld [vmem:[%s11 + $0xf8] sm:$0xff]
  %v2559 = vld [vmem:[%s12] sm:$0x1]
  %v2561 = vlaneseq
  %v2562 = vshrl.u32 %v2561, 7
  %v2563 = vsub.s32 0, %v2562
  %v2564 = vrot.slane %v2559, %v2563
  %2566 = vmatprep.subr.mxu0 0.0
  %2567 = vmatpush1.msra.mxu0 %v2527
  %2568 = vmatprep.subr.mxu0 0.0
  %2569 = vmatpush1.msra.mxu0 %v2528
  %2570 = vmatprep.subr.mxu0 0.0
  %2571 = vmatpush1.msra.mxu0 %v2529
  %2572 = vmatprep.subr.mxu0 0.0
  %2573 = vmatpush1.msra.mxu0 %v2530
  %2574 = vmatprep.subr.mxu0 0.0
  %2575 = vmatpush1.msra.mxu0 %v2531
  %2576 = vmatprep.subr.mxu0 0.0
  %2577 = vmatpush1.msra.mxu0 %v2532
  %2578 = vmatprep.subr.mxu0 0.0
  %2579 = vmatpush1.msra.mxu0 %v2533
  %2580 = vmatprep.subr.mxu0 0.0
  %2581 = vmatpush1.msra.mxu0 %v2534
  %2582 = vmatprep.subr.mxu0 0.0
  %2583 = vmatpush1.msra.mxu0 %v2535
  %2584 = vmatprep.subr.mxu0 0.0
  %2585 = vmatpush1.msra.mxu0 %v2536
  %2586 = vmatprep.subr.mxu0 0.0
  %2587 = vmatpush1.msra.mxu0 %v2537
  %2588 = vmatprep.subr.mxu0 0.0
  %2589 = vmatpush1.msra.mxu0 %v2538
  %2590 = vmatprep.subr.mxu0 0.0
  %2591 = vmatpush1.msra.mxu0 %v2539
  %2592 = vmatprep.subr.mxu0 0.0
  %2593 = vmatpush1.msra.mxu0 %v2540
  %2594 = vmatprep.subr.mxu0 0.0
  %2595 = vmatpush1.msra.mxu0 %v2541
  %2596 = vmatprep.subr.mxu0 0.0
  %2597 = vmatpush1.msra.mxu0 %v2542
  %2598 = vmatprep.subr.mxu0 0.0
  %2599 = vmatpush1.msra.mxu0 %v2543
  %2600 = vmatprep.subr.mxu0 0.0
  %2601 = vmatpush1.msra.mxu0 %v2544
  %2602 = vmatprep.subr.mxu0 0.0
  %2603 = vmatpush1.msra.mxu0 %v2545
  %2604 = vmatprep.subr.mxu0 0.0
  %2605 = vmatpush1.msra.mxu0 %v2546
  %2606 = vmatprep.subr.mxu0 0.0
  %2607 = vmatpush1.msra.mxu0 %v2547
  %2608 = vmatprep.subr.mxu0 0.0
  %2609 = vmatpush1.msra.mxu0 %v2548
  %2610 = vmatprep.subr.mxu0 0.0
  %2611 = vmatpush1.msra.mxu0 %v2549
  %2612 = vmatprep.subr.mxu0 0.0
  %2613 = vmatpush1.msra.mxu0 %v2550
  %2614 = vmatprep.subr.mxu0 0.0
  %2615 = vmatpush1.msra.mxu0 %v2551
  %2616 = vmatprep.subr.mxu0 0.0
  %2617 = vmatpush1.msra.mxu0 %v2552
  %2618 = vmatprep.subr.mxu0 0.0
  %2619 = vmatpush1.msra.mxu0 %v2553
  %2620 = vmatprep.subr.mxu0 0.0
  %2621 = vmatpush1.msra.mxu0 %v2554
  %2622 = vmatprep.subr.mxu0 0.0
  %2623 = vmatpush1.msra.mxu0 %v2555
  %2624 = vmatprep.subr.mxu0 0.0
  %2625 = vmatpush1.msra.mxu0 %v2556
  %2626 = vmatprep.subr.mxu0 0.0
  %2627 = vmatpush1.msra.mxu0 %v2557
  %2628 = vmatprep.subr.mxu0 0.0
  %2629 = vmatpush1.msra.mxu0 %v2558
  %2630 = vmatprep.mubr.f32.mxu0 %v2526
  %2631 = vmatmul.mubr.f32.gmra.mrb[0].mxu0 %v2525
  %v2632 = vpop.f32.mrb[0].mxu0
  %v2633 = vadd.f32 %v2564, %v2632
  %v2634 = vpop.f32.mrb[0].mxu0
  %2635 = vdwg.mxu0
  %v2636 = vtanh.pop %v2633
  %v2637 = vld [vmem:[%s13] sm:$0xff]
  %v2638 = vld [vmem:[%s13 + $0x8] sm:$0xff]
  %v2639 = vld [vmem:[%s13 + $0x10] sm:$0xff]
  %v2640 = vld [vmem:[%s13 + $0x18] sm:$0xff]
  %v2641 = vld [vmem:[%s14] sm:$0x1]
  %v2643 = vlaneseq
  %v2644 = vshrl.u32 %v2643, 7
  %v2645 = vsub.s32 0, %v2644
  %v2646 = vrot.slane %v2641, %v2645
  %v2649 = vsel %vm342, %v2636, 0
  %2651 = vmatprep.subr.mxu0 0.0
  %2652 = vmatpush1.msra.mxu0 %v2637
  %2653 = vmatprep.subr.mxu0 0.0
  %2654 = vmatpush1.msra.mxu0 %v2638
  %2655 = vmatprep.subr.mxu0 0.0
  %2656 = vmatpush1.msra.mxu0 %v2639
  %2657 = vmatprep.subr.mxu0 0.0
  %2658 = vmatpush1.msra.mxu0 %v2640
  %2659 = vmatprep.subr.mxu0 0.0
  %2660 = vmatpush1.msra.mxu0 0.0
  %2661 = vmatprep.subr.mxu0 0.0
  %2662 = vmatpush1.msra.mxu0 0.0
  %2663 = vmatprep.subr.mxu0 0.0
  %2664 = vmatpush1.msra.mxu0 0.0
  %2665 = vmatprep.subr.mxu0 0.0
  %2666 = vmatpush1.msra.mxu0 0.0
  %2667 = vmatprep.subr.mxu0 0.0
  %2668 = vmatpush1.msra.mxu0 0.0
  %2669 = vmatprep.subr.mxu0 0.0
  %2670 = vmatpush1.msra.mxu0 0.0
  %2671 = vmatprep.subr.mxu0 0.0
  %2672 = vmatpush1.msra.mxu0 0.0
  %2673 = vmatprep.subr.mxu0 0.0
  %2674 = vmatpush1.msra.mxu0 0.0
  %2675 = vmatprep.subr.mxu0 0.0
  %2676 = vmatpush1.msra.mxu0 0.0
  %2677 = vmatprep.subr.mxu0 0.0
  %2678 = vmatpush1.msra.mxu0 0.0
  %2679 = vmatprep.subr.mxu0 0.0
  %2680 = vmatpush1.msra.mxu0 0.0
  %2681 = vmatprep.subr.mxu0 0.0
  %2682 = vmatpush1.msra.mxu0 0.0
  %2683 = vmatprep.subr.mxu0 0.0
  %2684 = vmatpush1.msra.mxu0 0.0
  %2685 = vmatprep.subr.mxu0 0.0
  %2686 = vmatpush1.msra.mxu0 0.0
  %2687 = vmatprep.subr.mxu0 0.0
  %2688 = vmatpush1.msra.mxu0 0.0
  %2689 = vmatprep.subr.mxu0 0.0
  %2690 = vmatpush1.msra.mxu0 0.0
  %2691 = vmatprep.subr.mxu0 0.0
  %2692 = vmatpush1.msra.mxu0 0.0
  %2693 = vmatprep.subr.mxu0 0.0
  %2694 = vmatpush1.msra.mxu0 0.0
  %2695 = vmatprep.subr.mxu0 0.0
  %2696 = vmatpush1.msra.mxu0 0.0
  %2697 = vmatprep.subr.mxu0 0.0
  %2698 = vmatpush1.msra.mxu0 0.0
  %2699 = vmatprep.subr.mxu0 0.0
  %2700 = vmatpush1.msra.mxu0 0.0
  %2701 = vmatprep.subr.mxu0 0.0
  %2702 = vmatpush1.msra.mxu0 0.0
  %2703 = vmatprep.subr.mxu0 0.0
  %2704 = vmatpush1.msra.mxu0 0.0
  %2705 = vmatprep.subr.mxu0 0.0
  %2706 = vmatpush1.msra.mxu0 0.0
  %2707 = vmatprep.subr.mxu0 0.0
  %2708 = vmatpush1.msra.mxu0 0.0
  %2709 = vmatprep.subr.mxu0 0.0
  %2710 = vmatpush1.msra.mxu0 0.0
  %2711 = vmatprep.subr.mxu0 0.0
  %2712 = vmatpush1.msra.mxu0 0.0
  %2713 = vmatprep.subr.mxu0 0.0
  %2714 = vmatpush1.msra.mxu0 0.0
  %2715 = vmatprep.mubr.f32.mxu0 0.0
  %2716 = vmatmul.mubr.f32.gmra.mrb[0].mxu0 %v2649
  %v2717 = vpop.f32.mrb[0].mxu0
  %v2718 = vadd.f32 %v2646, %v2717
  %v2719 = vpop.f32.mrb[0].mxu0
  %2720 = vdwg.mxu0
  %v2721 = vsel %vm2311, %v2517, 0.0
  %vm2722 = vcmask 23552
  %v2723 = vsel %vm2722, %v2718, 0.0
  %v2724 = vsel %vm80, %v2723, 0.0
  %2725 = vst [vmem:[%s15] sm:$0xff] %v2721
  %2726 = vst [vmem:[%s15 + $0x8] sm:$0xff] %v2724
  // Predicated region
  $region62: #{high_att_forward.1} parent=0 // pred_check
    _
  $region63: #{high_att_forward.1} parent=0 // pred_check_branch
    %2728 = sbr.rel (0) target = $region65
  $region64: #{high_att_forward.1} parent=0 // pred_region
    _
  $region65: #{high_att_forward.1} parent=0 // pred_fallthru
    _
  // Predicated region
  $region66: #{high_att_forward.1} parent=0 // pred_check
    _
  $region67: #{high_att_forward.1} parent=0 // pred_check_branch
    %2730 = sbr.rel (0) target = $region69
  $region68: #{high_att_forward.1} parent=0 // pred_region
    _
  $region69: #{high_att_forward.1} parent=0 // pred_fallthru
    _

</llo_original>
